<compile_context>
chip_gen: v7x
topology: tpu7x:2x2x1
jax: 0.10.0
libtpu: 0.0.40
codegen_flags: <defaults>
</compile_context>

<pallas_src>
import jax
import jax.numpy as jnp
from jax import lax
from jax.experimental import pallas as pl
from jax.experimental.pallas import tpu as pltpu


# ----------------------------------------------------------------------------- kernels

def _conv_ln_lrelu_kernel(p_ref, w_ref, b_ref, g_ref, bt_ref, o_ref):
    # p_ref : (K, P)  bf16 im2col patches for one sample (K ordered (c, kh, kw))
    # w_ref : (C, K)  bf16 flattened conv weight
    # b_ref : (C, 1)  f32 conv bias
    # g_ref : (C, P)  f32 LayerNorm gamma in native (C, H*W) layout
    # bt_ref: (C, P)  f32 LayerNorm beta
    # o_ref : (C, P)  f32 output == NCHW-flattened activation
    y = jnp.dot(w_ref[...], p_ref[...],
                preferred_element_type=jnp.float32) + b_ref[...]
    # Single-pass LayerNorm over the whole (C, H, W) block, biased variance, eps=1e-5.
    inv_n = 1.0 / float(y.size)
    mu = jnp.sum(y) * inv_n
    ey2 = jnp.sum(y * y) * inv_n
    var = ey2 - mu * mu
    yn = (y - mu) * lax.rsqrt(var + 1e-5)
    z = yn * g_ref[...] + bt_ref[...]
    o_ref[...] = jnp.where(z >= 0, z, 0.2 * z)          # LeakyReLU(0.2)


def _conv4_ln_lrelu_conv5_sigmoid_kernel(p_ref, w4_ref, b4_ref, g_ref, bt_ref,
                                         w5_ref, b5_ref, o_ref):
    # Fused: conv4 -> LayerNorm4 -> LeakyReLU -> conv5 (4x4, s1, p0) -> sigmoid.
    # p_ref : (K4, 16) bf16, w4_ref: (C4, K4) bf16, b4_ref: (C4, 1) f32
    # g_ref/bt_ref/w5_ref: (C4, 16) f32, b5_ref: (1, 1) f32, o_ref: (1, 1) f32
    y = jnp.dot(w4_ref[...], p_ref[...],
                preferred_element_type=jnp.float32) + b4_ref[...]
    inv_n = 1.0 / float(y.size)
    mu = jnp.sum(y) * inv_n
    ey2 = jnp.sum(y * y) * inv_n
    var = ey2 - mu * mu
    yn = (y - mu) * lax.rsqrt(var + 1e-5)
    z = yn * g_ref[...] + bt_ref[...]
    z = jnp.where(z >= 0, z, 0.2 * z)
    # conv5 on the (C4, 4, 4) activation == full dot with w5 reshaped to (C4, 16).
    logit = jnp.sum(z * w5_ref[...])
    o_ref[...] = jax.nn.sigmoid(logit + b5_ref[...])


# ----------------------------------------------------------------------------- wrappers

def conv_ln_lrelu_layer(patches, w_mat, bias, gamma, beta):
    # patches: (N, K, P) bf16, w_mat: (C, K) bf16, bias: (C,), gamma/beta: (C, P)
    N, K, P = patches.shape
    C = w_mat.shape[0]
    return pl.pallas_call(
        _conv_ln_lrelu_kernel,
        out_shape=jax.ShapeDtypeStruct((N, C, P), jnp.float32),
        grid=(N,),
        in_specs=[
            pl.BlockSpec((None, K, P), lambda n: (n, 0, 0)),
            pl.BlockSpec((C, K), lambda n: (0, 0)),
            pl.BlockSpec((C, 1), lambda n: (0, 0)),
            pl.BlockSpec((C, P), lambda n: (0, 0)),
            pl.BlockSpec((C, P), lambda n: (0, 0)),
        ],
        out_specs=pl.BlockSpec((None, C, P), lambda n: (n, 0, 0)),
        compiler_params=pltpu.CompilerParams(dimension_semantics=("parallel",)),
    )(patches, w_mat, bias.reshape(C, 1), gamma, beta)


def conv4_to_prob_layer(patches, w4, b4, gamma, beta, w5, b5):
    # patches: (N, K4, 16) bf16, w4: (C4, K4) bf16, w5: (C4, 16) f32
    N, K, P = patches.shape
    C = w4.shape[0]
    return pl.pallas_call(
        _conv4_ln_lrelu_conv5_sigmoid_kernel,
        out_shape=jax.ShapeDtypeStruct((N, 1, 1), jnp.float32),
        grid=(N,),
        in_specs=[
            pl.BlockSpec((None, K, P), lambda n: (n, 0, 0)),
            pl.BlockSpec((C, K), lambda n: (0, 0)),
            pl.BlockSpec((C, 1), lambda n: (0, 0)),
            pl.BlockSpec((C, P), lambda n: (0, 0)),
            pl.BlockSpec((C, P), lambda n: (0, 0)),
            pl.BlockSpec((C, P), lambda n: (0, 0)),
            pl.BlockSpec((1, 1), lambda n: (0, 0)),
        ],
        out_specs=pl.BlockSpec((None, 1, 1), lambda n: (n, 0, 0)),
        compiler_params=pltpu.CompilerParams(dimension_semantics=("parallel",)),
    )(patches, w4, b4.reshape(C, 1), gamma, beta, w5, b5.reshape(1, 1))


# ----------------------------------------------------------------------------- glue

def im2col_cmajor(x, k=4, stride=2, pad=1):
    """x: (N, C, H, W) -> patches (N, C*k*k, Ho*Wo), K ordered (c, kh, kw). No transposes."""
    N, C, H, W = x.shape
    xp = jnp.pad(x, ((0, 0), (0, 0), (pad, pad), (pad, pad)))
    Ho = (H + 2 * pad - k) // stride + 1
    Wo = (W + 2 * pad - k) // stride + 1
    cols = []
    for kh in range(k):
        for kw in range(k):
            cols.append(xp[:, :, kh:kh + stride * Ho:stride, kw:kw + stride * Wo:stride])
    patches = jnp.stack(cols, axis=2)                   # (N, C, k*k, Ho, Wo)
    return patches.reshape(N, C * k * k, Ho * Wo), Ho, Wo


def init_params(key, d=16, num_classes=2):
    layer_dims = [(4, d), (d, 2 * d), (2 * d, 4 * d), (4 * d, 8 * d)]  # (C_in, C_out)
    spatial_out = [32, 16, 8, 4]
    keys = jax.random.split(key, 8)
    params = {"emb": 0.02 * jax.random.normal(keys[0], (num_classes, 64 * 64), jnp.float32)}
    for i, ((cin, cout), s) in enumerate(zip(layer_dims, spatial_out), start=1):
        params[f"w{i}"] = 0.02 * jax.random.normal(keys[i], (cout, cin, 4, 4), jnp.float32)
        params[f"b{i}"] = jnp.zeros((cout,), jnp.float32)
        params[f"g{i}"] = jnp.ones((cout, s, s), jnp.float32)       # LayerNorm weight (C,H,W)
        params[f"be{i}"] = jnp.zeros((cout, s, s), jnp.float32)     # LayerNorm bias (C,H,W)
    params["w5"] = 0.02 * jax.random.normal(keys[5], (1, 8 * d, 4, 4), jnp.float32)
    params["b5"] = jnp.zeros((1,), jnp.float32)
    return params


@jax.jit
def discriminator_forward(params, img, labels):
    N = img.shape[0]
    # label embedding -> (N, 1, 64, 64), concat on channel axis (NCHW)
    emb = params["emb"][labels].reshape(N, 1, 64, 64)
    x = jnp.concatenate([img, emb], axis=1)             # (N, 4, 64, 64)

    # Layers 1-3: conv + LayerNorm + LeakyReLU, NCHW-native (C, P) output.
    for i in range(1, 4):
        patches, Ho, Wo = im2col_cmajor(x.astype(jnp.bfloat16))
        cout = params[f"w{i}"].shape[0]
        w_mat = params[f"w{i}"].reshape(cout, -1).astype(jnp.bfloat16)   # (C, K)
        gamma = params[f"g{i}"].reshape(cout, Ho * Wo)                   # (C, H*W)
        beta = params[f"be{i}"].reshape(cout, Ho * Wo)
        out = conv_ln_lrelu_layer(patches, w_mat, params[f"b{i}"], gamma, beta)
        x = out.reshape(N, cout, Ho, Wo)                # already NCHW, no transpose
        # Dropout(0.2) after layer 3 is identity in eval mode (see TODO above).

    # Layer 4 fused with conv5 + sigmoid.
    patches, Ho, Wo = im2col_cmajor(x.astype(jnp.bfloat16))              # (N, 4d*16, 16)
    c4 = params["w4"].shape[0]
    w4 = params["w4"].reshape(c4, -1).astype(jnp.bfloat16)               # (8d, 4d*16)
    g4 = params["g4"].reshape(c4, Ho * Wo)
    be4 = params["be4"].reshape(c4, Ho * Wo)
    w5 = params["w5"].reshape(c4, 16)                                    # (8d, 4*4)
    out = conv4_to_prob_layer(patches, w4, params["b4"], g4, be4, w5, params["b5"])
    return out.reshape(N, 1, 1, 1)


if __name__ == "__main__":
    d = 16          # scaled-down width (PyTorch default d=128); spatial 64x64 fixed by the model
    N = 2
    key = jax.random.PRNGKey(0)
    pkey, ikey = jax.random.split(key)
    params = init_params(pkey, d=d, num_classes=2)
    img = jax.random.normal(ikey, (N, 3, 64, 64), jnp.float32)
    labels = jnp.array([0, 1], dtype=jnp.int32)

    out = jax.block_until_ready(discriminator_forward(params, img, labels))
    assert out.shape == (N, 1, 1, 1)
    assert bool(jnp.all((out >= 0.0) & (out <= 1.0)))
    print("KERNEL_OK")
</pallas_src>

<mosaic_0001>
module attributes {stable_mosaic.version = 11 : i64} {
  func.func @_conv_ln_lrelu_kernel(%arg0: i32, %arg1: memref<1x64x1024xbf16, #tpu.memory_space<vmem>>, %arg2: memref<16x64xbf16, #tpu.memory_space<vmem>>, %arg3: memref<16x1xf32, #tpu.memory_space<vmem>>, %arg4: memref<16x1024xf32, #tpu.memory_space<vmem>>, %arg5: memref<16x1024xf32, #tpu.memory_space<vmem>>, %arg6: memref<1x16x1024xf32, #tpu.memory_space<vmem>>) attributes {dimension_semantics = [#tpu.dimension_semantics<parallel>], iteration_bounds = array<i64: 2>, scalar_prefetch = 0 : i64, scratch_operands = 0 : i64, tpu.core_type = #tpu.core_type<tc>, window_params = [{transform_indices = @transform_0, window_bounds = array<i64: 1, 64, 1024>}, {pipeline_mode = #tpu.pipeline_mode<synchronous>, transform_indices = @transform_1, window_bounds = array<i64: 16, 64>}, {pipeline_mode = #tpu.pipeline_mode<synchronous>, transform_indices = @transform_2, window_bounds = array<i64: 16, 1>}, {pipeline_mode = #tpu.pipeline_mode<synchronous>, transform_indices = @transform_3, window_bounds = array<i64: 16, 1024>}, {pipeline_mode = #tpu.pipeline_mode<synchronous>, transform_indices = @transform_4, window_bounds = array<i64: 16, 1024>}, {transform_indices = @transform_5, window_bounds = array<i64: 1, 16, 1024>}]} {
    %c0 = arith.constant 0 : index
    %c0_0 = arith.constant 0 : index
    %0 = vector.load %arg2[%c0, %c0_0] : memref<16x64xbf16, #tpu.memory_space<vmem>>, vector<16x64xbf16>
    %c0_1 = arith.constant 0 : index
    %c0_2 = arith.constant 0 : index
    %c0_3 = arith.constant 0 : index
    %1 = vector.load %arg1[%c0_1, %c0_2, %c0_3] : memref<1x64x1024xbf16, #tpu.memory_space<vmem>>, vector<1x64x1024xbf16>
    %2 = vector.shape_cast %1 : vector<1x64x1024xbf16> to vector<64x1024xbf16>
    %cst = arith.constant dense<0.000000e+00> : vector<16x1024xf32>
    %3 = tpu.matmul %0, %2, %cst {dimension_numbers = #tpu.dot_dimension_numbers<[1], [0], [0], [1], [0, 0, 1, 1], [], []>} : vector<16x64xbf16>, vector<64x1024xbf16>, vector<16x1024xf32> -> vector<16x1024xf32>
    %c0_4 = arith.constant 0 : index
    %c0_5 = arith.constant 0 : index
    %4 = vector.load %arg3[%c0_4, %c0_5] : memref<16x1xf32, #tpu.memory_space<vmem>>, vector<16x1xf32>
    %5 = vector.broadcast %4 : vector<16x1xf32> to vector<16x1024xf32>
    %6 = arith.addf %3, %5 : vector<16x1024xf32>
    %7 = vector.shape_cast %6 : vector<16x1024xf32> to vector<1x16x1024xf32>
    %cst_6 = arith.constant dense<0.000000e+00> : vector<1xf32>
    %8 = vector.multi_reduction <add>, %7, %cst_6 [1, 2] : vector<1x16x1024xf32> to vector<1xf32>
    %9 = vector.shape_cast %8 : vector<1xf32> to vector<1x1x1xf32>
    %10 = vector.extract %9[0, 0, 0] : f32 from vector<1x1x1xf32>
    %cst_7 = arith.constant 6.10351563E-5 : f32
    %11 = arith.mulf %10, %cst_7 : f32
    %12 = arith.mulf %6, %6 : vector<16x1024xf32>
    %13 = vector.shape_cast %12 : vector<16x1024xf32> to vector<1x16x1024xf32>
    %cst_8 = arith.constant dense<0.000000e+00> : vector<1xf32>
    %14 = vector.multi_reduction <add>, %13, %cst_8 [1, 2] : vector<1x16x1024xf32> to vector<1xf32>
    %15 = vector.shape_cast %14 : vector<1xf32> to vector<1x1x1xf32>
    %16 = vector.extract %15[0, 0, 0] : f32 from vector<1x1x1xf32>
    %cst_9 = arith.constant 6.10351563E-5 : f32
    %17 = arith.mulf %16, %cst_9 : f32
    %18 = arith.mulf %11, %11 : f32
    %19 = arith.subf %17, %18 : f32
    %20 = vector.broadcast %11 : f32 to vector<16x1024xf32>
    %21 = arith.subf %6, %20 : vector<16x1024xf32>
    %cst_10 = arith.constant 9.99999974E-6 : f32
    %22 = arith.addf %19, %cst_10 : f32
    %23 = math.rsqrt %22 : f32
    %24 = vector.broadcast %23 : f32 to vector<16x1024xf32>
    %25 = arith.mulf %21, %24 : vector<16x1024xf32>
    %c0_11 = arith.constant 0 : index
    %c0_12 = arith.constant 0 : index
    %26 = vector.load %arg4[%c0_11, %c0_12] : memref<16x1024xf32, #tpu.memory_space<vmem>>, vector<16x1024xf32>
    %27 = arith.mulf %25, %26 : vector<16x1024xf32>
    %c0_13 = arith.constant 0 : index
    %c0_14 = arith.constant 0 : index
    %28 = vector.load %arg5[%c0_13, %c0_14] : memref<16x1024xf32, #tpu.memory_space<vmem>>, vector<16x1024xf32>
    %29 = arith.addf %27, %28 : vector<16x1024xf32>
    %cst_15 = arith.constant 0.000000e+00 : f32
    %30 = vector.broadcast %cst_15 : f32 to vector<16x1024xf32>
    %31 = arith.cmpf oge, %29, %30 : vector<16x1024xf32>
    %cst_16 = arith.constant 2.000000e-01 : f32
    %32 = vector.broadcast %cst_16 : f32 to vector<16x1024xf32>
    %33 = arith.mulf %32, %29 : vector<16x1024xf32>
    %34 = arith.select %31, %29, %33 : vector<16x1024xi1>, vector<16x1024xf32>
    %c0_17 = arith.constant 0 : index
    %c0_18 = arith.constant 0 : index
    %c0_19 = arith.constant 0 : index
    %35 = vector.load %arg6[%c0_17, %c0_18, %c0_19] : memref<1x16x1024xf32, #tpu.memory_space<vmem>>, vector<1x16x1024xf32>
    %36 = vector.shape_cast %35 : vector<1x16x1024xf32> to vector<16x1024xf32>
    %37 = vector.shape_cast %34 : vector<16x1024xf32> to vector<1x16x1024xf32>
    tpu.vector_store %arg6[%c0_17, %c0_18, %c0_19], %37 {strides = array<i32>} : memref<1x16x1024xf32, #tpu.memory_space<vmem>>, vector<1x16x1024xf32>,
    return
  }
  func.func @transform_0(%arg0: i32) -> (i32, i32, i32) {
    %c0_i32 = arith.constant 0 : i32
    %c0_i32_0 = arith.constant 0 : i32
    %c0_i32_1 = arith.constant 0 : i32
    return %arg0, %c0_i32, %c0_i32_0 : i32, i32, i32
  }
  func.func @transform_1(%arg0: i32) -> (i32, i32) {
    %c0_i32 = arith.constant 0 : i32
    %c0_i32_0 = arith.constant 0 : i32
    %c0_i32_1 = arith.constant 0 : i32
    return %c0_i32, %c0_i32_0 : i32, i32
  }
  func.func @transform_2(%arg0: i32) -> (i32, i32) {
    %c0_i32 = arith.constant 0 : i32
    %c0_i32_0 = arith.constant 0 : i32
    %c0_i32_1 = arith.constant 0 : i32
    return %c0_i32, %c0_i32_0 : i32, i32
  }
  func.func @transform_3(%arg0: i32) -> (i32, i32) {
    %c0_i32 = arith.constant 0 : i32
    %c0_i32_0 = arith.constant 0 : i32
    %c0_i32_1 = arith.constant 0 : i32
    return %c0_i32, %c0_i32_0 : i32, i32
  }
  func.func @transform_4(%arg0: i32) -> (i32, i32) {
    %c0_i32 = arith.constant 0 : i32
    %c0_i32_0 = arith.constant 0 : i32
    %c0_i32_1 = arith.constant 0 : i32
    return %c0_i32, %c0_i32_0 : i32, i32
  }
  func.func @transform_5(%arg0: i32) -> (i32, i32, i32) {
    %c0_i32 = arith.constant 0 : i32
    %c0_i32_0 = arith.constant 0 : i32
    %c0_i32_1 = arith.constant 0 : i32
    return %arg0, %c0_i32, %c0_i32_0 : i32, i32, i32
  }
}

module attributes {stable_mosaic.version = 11 : i64} {
  func.func @_conv_ln_lrelu_kernel(%arg0: i32, %arg1: memref<1x256x256xbf16, #tpu.memory_space<vmem>>, %arg2: memref<32x256xbf16, #tpu.memory_space<vmem>>, %arg3: memref<32x1xf32, #tpu.memory_space<vmem>>, %arg4: memref<32x256xf32, #tpu.memory_space<vmem>>, %arg5: memref<32x256xf32, #tpu.memory_space<vmem>>, %arg6: memref<1x32x256xf32, #tpu.memory_space<vmem>>) attributes {dimension_semantics = [#tpu.dimension_semantics<parallel>], iteration_bounds = array<i64: 2>, scalar_prefetch = 0 : i64, scratch_operands = 0 : i64, tpu.core_type = #tpu.core_type<tc>, window_params = [{transform_indices = @transform_0, window_bounds = array<i64: 1, 256, 256>}, {pipeline_mode = #tpu.pipeline_mode<synchronous>, transform_indices = @transform_1, window_bounds = array<i64: 32, 256>}, {pipeline_mode = #tpu.pipeline_mode<synchronous>, transform_indices = @transform_2, window_bounds = array<i64: 32, 1>}, {pipeline_mode = #tpu.pipeline_mode<synchronous>, transform_indices = @transform_3, window_bounds = array<i64: 32, 256>}, {pipeline_mode = #tpu.pipeline_mode<synchronous>, transform_indices = @transform_4, window_bounds = array<i64: 32, 256>}, {transform_indices = @transform_5, window_bounds = array<i64: 1, 32, 256>}]} {
    %c0 = arith.constant 0 : index
    %c0_0 = arith.constant 0 : index
    %0 = vector.load %arg2[%c0, %c0_0] : memref<32x256xbf16, #tpu.memory_space<vmem>>, vector<32x256xbf16>
    %c0_1 = arith.constant 0 : index
    %c0_2 = arith.constant 0 : index
    %c0_3 = arith.constant 0 : index
    %1 = vector.load %arg1[%c0_1, %c0_2, %c0_3] : memref<1x256x256xbf16, #tpu.memory_space<vmem>>, vector<1x256x256xbf16>
    %2 = vector.shape_cast %1 : vector<1x256x256xbf16> to vector<256x256xbf16>
    %cst = arith.constant dense<0.000000e+00> : vector<32x256xf32>
    %3 = tpu.matmul %0, %2, %cst {dimension_numbers = #tpu.dot_dimension_numbers<[1], [0], [0], [1], [0, 0, 1, 1], [], []>} : vector<32x256xbf16>, vector<256x256xbf16>, vector<32x256xf32> -> vector<32x256xf32>
    %c0_4 = arith.constant 0 : index
    %c0_5 = arith.constant 0 : index
    %4 = vector.load %arg3[%c0_4, %c0_5] : memref<32x1xf32, #tpu.memory_space<vmem>>, vector<32x1xf32>
    %5 = vector.broadcast %4 : vector<32x1xf32> to vector<32x256xf32>
    %6 = arith.addf %3, %5 : vector<32x256xf32>
    %7 = vector.shape_cast %6 : vector<32x256xf32> to vector<1x32x256xf32>
    %cst_6 = arith.constant dense<0.000000e+00> : vector<1xf32>
    %8 = vector.multi_reduction <add>, %7, %cst_6 [1, 2] : vector<1x32x256xf32> to vector<1xf32>
    %9 = vector.shape_cast %8 : vector<1xf32> to vector<1x1x1xf32>
    %10 = vector.extract %9[0, 0, 0] : f32 from vector<1x1x1xf32>
    %cst_7 = arith.constant 1.22070313E-4 : f32
    %11 = arith.mulf %10, %cst_7 : f32
    %12 = arith.mulf %6, %6 : vector<32x256xf32>
    %13 = vector.shape_cast %12 : vector<32x256xf32> to vector<1x32x256xf32>
    %cst_8 = arith.constant dense<0.000000e+00> : vector<1xf32>
    %14 = vector.multi_reduction <add>, %13, %cst_8 [1, 2] : vector<1x32x256xf32> to vector<1xf32>
    %15 = vector.shape_cast %14 : vector<1xf32> to vector<1x1x1xf32>
    %16 = vector.extract %15[0, 0, 0] : f32 from vector<1x1x1xf32>
    %cst_9 = arith.constant 1.22070313E-4 : f32
    %17 = arith.mulf %16, %cst_9 : f32
    %18 = arith.mulf %11, %11 : f32
    %19 = arith.subf %17, %18 : f32
    %20 = vector.broadcast %11 : f32 to vector<32x256xf32>
    %21 = arith.subf %6, %20 : vector<32x256xf32>
    %cst_10 = arith.constant 9.99999974E-6 : f32
    %22 = arith.addf %19, %cst_10 : f32
    %23 = math.rsqrt %22 : f32
    %24 = vector.broadcast %23 : f32 to vector<32x256xf32>
    %25 = arith.mulf %21, %24 : vector<32x256xf32>
    %c0_11 = arith.constant 0 : index
    %c0_12 = arith.constant 0 : index
    %26 = vector.load %arg4[%c0_11, %c0_12] : memref<32x256xf32, #tpu.memory_space<vmem>>, vector<32x256xf32>
    %27 = arith.mulf %25, %26 : vector<32x256xf32>
    %c0_13 = arith.constant 0 : index
    %c0_14 = arith.constant 0 : index
    %28 = vector.load %arg5[%c0_13, %c0_14] : memref<32x256xf32, #tpu.memory_space<vmem>>, vector<32x256xf32>
    %29 = arith.addf %27, %28 : vector<32x256xf32>
    %cst_15 = arith.constant 0.000000e+00 : f32
    %30 = vector.broadcast %cst_15 : f32 to vector<32x256xf32>
    %31 = arith.cmpf oge, %29, %30 : vector<32x256xf32>
    %cst_16 = arith.constant 2.000000e-01 : f32
    %32 = vector.broadcast %cst_16 : f32 to vector<32x256xf32>
    %33 = arith.mulf %32, %29 : vector<32x256xf32>
    %34 = arith.select %31, %29, %33 : vector<32x256xi1>, vector<32x256xf32>
    %c0_17 = arith.constant 0 : index
    %c0_18 = arith.constant 0 : index
    %c0_19 = arith.constant 0 : index
    %35 = vector.load %arg6[%c0_17, %c0_18, %c0_19] : memref<1x32x256xf32, #tpu.memory_space<vmem>>, vector<1x32x256xf32>
    %36 = vector.shape_cast %35 : vector<1x32x256xf32> to vector<32x256xf32>
    %37 = vector.shape_cast %34 : vector<32x256xf32> to vector<1x32x256xf32>
    tpu.vector_store %arg6[%c0_17, %c0_18, %c0_19], %37 {strides = array<i32>} : memref<1x32x256xf32, #tpu.memory_space<vmem>>, vector<1x32x256xf32>,
    return
  }
  func.func @transform_0(%arg0: i32) -> (i32, i32, i32) {
    %c0_i32 = arith.constant 0 : i32
    %c0_i32_0 = arith.constant 0 : i32
    %c0_i32_1 = arith.constant 0 : i32
    return %arg0, %c0_i32, %c0_i32_0 : i32, i32, i32
  }
  func.func @transform_1(%arg0: i32) -> (i32, i32) {
    %c0_i32 = arith.constant 0 : i32
    %c0_i32_0 = arith.constant 0 : i32
    %c0_i32_1 = arith.constant 0 : i32
    return %c0_i32, %c0_i32_0 : i32, i32
  }
  func.func @transform_2(%arg0: i32) -> (i32, i32) {
    %c0_i32 = arith.constant 0 : i32
    %c0_i32_0 = arith.constant 0 : i32
    %c0_i32_1 = arith.constant 0 : i32
    return %c0_i32, %c0_i32_0 : i32, i32
  }
  func.func @transform_3(%arg0: i32) -> (i32, i32) {
    %c0_i32 = arith.constant 0 : i32
    %c0_i32_0 = arith.constant 0 : i32
    %c0_i32_1 = arith.constant 0 : i32
    return %c0_i32, %c0_i32_0 : i32, i32
  }
  func.func @transform_4(%arg0: i32) -> (i32, i32) {
    %c0_i32 = arith.constant 0 : i32
    %c0_i32_0 = arith.constant 0 : i32
    %c0_i32_1 = arith.constant 0 : i32
    return %c0_i32, %c0_i32_0 : i32, i32
  }
  func.func @transform_5(%arg0: i32) -> (i32, i32, i32) {
    %c0_i32 = arith.constant 0 : i32
    %c0_i32_0 = arith.constant 0 : i32
    %c0_i32_1 = arith.constant 0 : i32
    return %arg0, %c0_i32, %c0_i32_0 : i32, i32, i32
  }
}

module attributes {stable_mosaic.version = 11 : i64} {
  func.func @_conv_ln_lrelu_kernel(%arg0: i32, %arg1: memref<1x512x64xbf16, #tpu.memory_space<vmem>>, %arg2: memref<64x512xbf16, #tpu.memory_space<vmem>>, %arg3: memref<64x1xf32, #tpu.memory_space<vmem>>, %arg4: memref<64x64xf32, #tpu.memory_space<vmem>>, %arg5: memref<64x64xf32, #tpu.memory_space<vmem>>, %arg6: memref<1x64x64xf32, #tpu.memory_space<vmem>>) attributes {dimension_semantics = [#tpu.dimension_semantics<parallel>], iteration_bounds = array<i64: 2>, scalar_prefetch = 0 : i64, scratch_operands = 0 : i64, tpu.core_type = #tpu.core_type<tc>, window_params = [{transform_indices = @transform_0, window_bounds = array<i64: 1, 512, 64>}, {pipeline_mode = #tpu.pipeline_mode<synchronous>, transform_indices = @transform_1, window_bounds = array<i64: 64, 512>}, {pipeline_mode = #tpu.pipeline_mode<synchronous>, transform_indices = @transform_2, window_bounds = array<i64: 64, 1>}, {pipeline_mode = #tpu.pipeline_mode<synchronous>, transform_indices = @transform_3, window_bounds = array<i64: 64, 64>}, {pipeline_mode = #tpu.pipeline_mode<synchronous>, transform_indices = @transform_4, window_bounds = array<i64: 64, 64>}, {transform_indices = @transform_5, window_bounds = array<i64: 1, 64, 64>}]} {
    %c0 = arith.constant 0 : index
    %c0_0 = arith.constant 0 : index
    %0 = vector.load %arg2[%c0, %c0_0] : memref<64x512xbf16, #tpu.memory_space<vmem>>, vector<64x512xbf16>
    %c0_1 = arith.constant 0 : index
    %c0_2 = arith.constant 0 : index
    %c0_3 = arith.constant 0 : index
    %1 = vector.load %arg1[%c0_1, %c0_2, %c0_3] : memref<1x512x64xbf16, #tpu.memory_space<vmem>>, vector<1x512x64xbf16>
    %2 = vector.shape_cast %1 : vector<1x512x64xbf16> to vector<512x64xbf16>
    %cst = arith.constant dense<0.000000e+00> : vector<64x64xf32>
    %3 = tpu.matmul %0, %2, %cst {dimension_numbers = #tpu.dot_dimension_numbers<[1], [0], [0], [1], [0, 0, 1, 1], [], []>} : vector<64x512xbf16>, vector<512x64xbf16>, vector<64x64xf32> -> vector<64x64xf32>
    %c0_4 = arith.constant 0 : index
    %c0_5 = arith.constant 0 : index
    %4 = vector.load %arg3[%c0_4, %c0_5] : memref<64x1xf32, #tpu.memory_space<vmem>>, vector<64x1xf32>
    %5 = vector.broadcast %4 : vector<64x1xf32> to vector<64x64xf32>
    %6 = arith.addf %3, %5 : vector<64x64xf32>
    %7 = vector.shape_cast %6 : vector<64x64xf32> to vector<1x64x64xf32>
    %cst_6 = arith.constant dense<0.000000e+00> : vector<1xf32>
    %8 = vector.multi_reduction <add>, %7, %cst_6 [1, 2] : vector<1x64x64xf32> to vector<1xf32>
    %9 = vector.shape_cast %8 : vector<1xf32> to vector<1x1x1xf32>
    %10 = vector.extract %9[0, 0, 0] : f32 from vector<1x1x1xf32>
    %cst_7 = arith.constant 2.44140625E-4 : f32
    %11 = arith.mulf %10, %cst_7 : f32
    %12 = arith.mulf %6, %6 : vector<64x64xf32>
    %13 = vector.shape_cast %12 : vector<64x64xf32> to vector<1x64x64xf32>
    %cst_8 = arith.constant dense<0.000000e+00> : vector<1xf32>
    %14 = vector.multi_reduction <add>, %13, %cst_8 [1, 2] : vector<1x64x64xf32> to vector<1xf32>
    %15 = vector.shape_cast %14 : vector<1xf32> to vector<1x1x1xf32>
    %16 = vector.extract %15[0, 0, 0] : f32 from vector<1x1x1xf32>
    %cst_9 = arith.constant 2.44140625E-4 : f32
    %17 = arith.mulf %16, %cst_9 : f32
    %18 = arith.mulf %11, %11 : f32
    %19 = arith.subf %17, %18 : f32
    %20 = vector.broadcast %11 : f32 to vector<64x64xf32>
    %21 = arith.subf %6, %20 : vector<64x64xf32>
    %cst_10 = arith.constant 9.99999974E-6 : f32
    %22 = arith.addf %19, %cst_10 : f32
    %23 = math.rsqrt %22 : f32
    %24 = vector.broadcast %23 : f32 to vector<64x64xf32>
    %25 = arith.mulf %21, %24 : vector<64x64xf32>
    %c0_11 = arith.constant 0 : index
    %c0_12 = arith.constant 0 : index
    %26 = vector.load %arg4[%c0_11, %c0_12] : memref<64x64xf32, #tpu.memory_space<vmem>>, vector<64x64xf32>
    %27 = arith.mulf %25, %26 : vector<64x64xf32>
    %c0_13 = arith.constant 0 : index
    %c0_14 = arith.constant 0 : index
    %28 = vector.load %arg5[%c0_13, %c0_14] : memref<64x64xf32, #tpu.memory_space<vmem>>, vector<64x64xf32>
    %29 = arith.addf %27, %28 : vector<64x64xf32>
    %cst_15 = arith.constant 0.000000e+00 : f32
    %30 = vector.broadcast %cst_15 : f32 to vector<64x64xf32>
    %31 = arith.cmpf oge, %29, %30 : vector<64x64xf32>
    %cst_16 = arith.constant 2.000000e-01 : f32
    %32 = vector.broadcast %cst_16 : f32 to vector<64x64xf32>
    %33 = arith.mulf %32, %29 : vector<64x64xf32>
    %34 = arith.select %31, %29, %33 : vector<64x64xi1>, vector<64x64xf32>
    %c0_17 = arith.constant 0 : index
    %c0_18 = arith.constant 0 : index
    %c0_19 = arith.constant 0 : index
    %35 = vector.load %arg6[%c0_17, %c0_18, %c0_19] : memref<1x64x64xf32, #tpu.memory_space<vmem>>, vector<1x64x64xf32>
    %36 = vector.shape_cast %35 : vector<1x64x64xf32> to vector<64x64xf32>
    %37 = vector.shape_cast %34 : vector<64x64xf32> to vector<1x64x64xf32>
    tpu.vector_store %arg6[%c0_17, %c0_18, %c0_19], %37 {strides = array<i32>} : memref<1x64x64xf32, #tpu.memory_space<vmem>>, vector<1x64x64xf32>,
    return
  }
  func.func @transform_0(%arg0: i32) -> (i32, i32, i32) {
    %c0_i32 = arith.constant 0 : i32
    %c0_i32_0 = arith.constant 0 : i32
    %c0_i32_1 = arith.constant 0 : i32
    return %arg0, %c0_i32, %c0_i32_0 : i32, i32, i32
  }
  func.func @transform_1(%arg0: i32) -> (i32, i32) {
    %c0_i32 = arith.constant 0 : i32
    %c0_i32_0 = arith.constant 0 : i32
    %c0_i32_1 = arith.constant 0 : i32
    return %c0_i32, %c0_i32_0 : i32, i32
  }
  func.func @transform_2(%arg0: i32) -> (i32, i32) {
    %c0_i32 = arith.constant 0 : i32
    %c0_i32_0 = arith.constant 0 : i32
    %c0_i32_1 = arith.constant 0 : i32
    return %c0_i32, %c0_i32_0 : i32, i32
  }
  func.func @transform_3(%arg0: i32) -> (i32, i32) {
    %c0_i32 = arith.constant 0 : i32
    %c0_i32_0 = arith.constant 0 : i32
    %c0_i32_1 = arith.constant 0 : i32
    return %c0_i32, %c0_i32_0 : i32, i32
  }
  func.func @transform_4(%arg0: i32) -> (i32, i32) {
    %c0_i32 = arith.constant 0 : i32
    %c0_i32_0 = arith.constant 0 : i32
    %c0_i32_1 = arith.constant 0 : i32
    return %c0_i32, %c0_i32_0 : i32, i32
  }
  func.func @transform_5(%arg0: i32) -> (i32, i32, i32) {
    %c0_i32 = arith.constant 0 : i32
    %c0_i32_0 = arith.constant 0 : i32
    %c0_i32_1 = arith.constant 0 : i32
    return %arg0, %c0_i32, %c0_i32_0 : i32, i32, i32
  }
}

module attributes {stable_mosaic.version = 11 : i64} {
  func.func @_conv4_ln_lrelu_conv5_sigmoid_kernel(%arg0: i32, %arg1: memref<1x1024x16xbf16, #tpu.memory_space<vmem>>, %arg2: memref<128x1024xbf16, #tpu.memory_space<vmem>>, %arg3: memref<128x1xf32, #tpu.memory_space<vmem>>, %arg4: memref<128x16xf32, #tpu.memory_space<vmem>>, %arg5: memref<128x16xf32, #tpu.memory_space<vmem>>, %arg6: memref<128x16xf32, #tpu.memory_space<vmem>>, %arg7: memref<1x1xf32, #tpu.memory_space<vmem>>, %arg8: memref<1x1x1xf32, #tpu.memory_space<vmem>>) attributes {dimension_semantics = [#tpu.dimension_semantics<parallel>], iteration_bounds = array<i64: 2>, scalar_prefetch = 0 : i64, scratch_operands = 0 : i64, tpu.core_type = #tpu.core_type<tc>, window_params = [{transform_indices = @transform_0, window_bounds = array<i64: 1, 1024, 16>}, {pipeline_mode = #tpu.pipeline_mode<synchronous>, transform_indices = @transform_1, window_bounds = array<i64: 128, 1024>}, {pipeline_mode = #tpu.pipeline_mode<synchronous>, transform_indices = @transform_2, window_bounds = array<i64: 128, 1>}, {pipeline_mode = #tpu.pipeline_mode<synchronous>, transform_indices = @transform_3, window_bounds = array<i64: 128, 16>}, {pipeline_mode = #tpu.pipeline_mode<synchronous>, transform_indices = @transform_4, window_bounds = array<i64: 128, 16>}, {pipeline_mode = #tpu.pipeline_mode<synchronous>, transform_indices = @transform_5, window_bounds = array<i64: 128, 16>}, {pipeline_mode = #tpu.pipeline_mode<synchronous>, transform_indices = @transform_6, window_bounds = array<i64: 1, 1>}, {transform_indices = @transform_7, window_bounds = array<i64: 1, 1, 1>}]} {
    %c0 = arith.constant 0 : index
    %c0_0 = arith.constant 0 : index
    %0 = vector.load %arg2[%c0, %c0_0] : memref<128x1024xbf16, #tpu.memory_space<vmem>>, vector<128x1024xbf16>
    %c0_1 = arith.constant 0 : index
    %c0_2 = arith.constant 0 : index
    %c0_3 = arith.constant 0 : index
    %1 = vector.load %arg1[%c0_1, %c0_2, %c0_3] : memref<1x1024x16xbf16, #tpu.memory_space<vmem>>, vector<1x1024x16xbf16>
    %2 = vector.shape_cast %1 : vector<1x1024x16xbf16> to vector<1024x16xbf16>
    %cst = arith.constant dense<0.000000e+00> : vector<128x16xf32>
    %3 = tpu.matmul %0, %2, %cst {dimension_numbers = #tpu.dot_dimension_numbers<[1], [0], [0], [1], [0, 0, 1, 1], [], []>} : vector<128x1024xbf16>, vector<1024x16xbf16>, vector<128x16xf32> -> vector<128x16xf32>
    %c0_4 = arith.constant 0 : index
    %c0_5 = arith.constant 0 : index
    %4 = vector.load %arg3[%c0_4, %c0_5] : memref<128x1xf32, #tpu.memory_space<vmem>>, vector<128x1xf32>
    %5 = vector.broadcast %4 : vector<128x1xf32> to vector<128x16xf32>
    %6 = arith.addf %3, %5 : vector<128x16xf32>
    %7 = vector.shape_cast %6 : vector<128x16xf32> to vector<1x128x16xf32>
    %cst_6 = arith.constant dense<0.000000e+00> : vector<1xf32>
    %8 = vector.multi_reduction <add>, %7, %cst_6 [1, 2] : vector<1x128x16xf32> to vector<1xf32>
    %9 = vector.shape_cast %8 : vector<1xf32> to vector<1x1x1xf32>
    %10 = vector.extract %9[0, 0, 0] : f32 from vector<1x1x1xf32>
    %cst_7 = arith.constant 4.8828125E-4 : f32
    %11 = arith.mulf %10, %cst_7 : f32
    %12 = arith.mulf %6, %6 : vector<128x16xf32>
    %13 = vector.shape_cast %12 : vector<128x16xf32> to vector<1x128x16xf32>
    %cst_8 = arith.constant dense<0.000000e+00> : vector<1xf32>
    %14 = vector.multi_reduction <add>, %13, %cst_8 [1, 2] : vector<1x128x16xf32> to vector<1xf32>
    %15 = vector.shape_cast %14 : vector<1xf32> to vector<1x1x1xf32>
    %16 = vector.extract %15[0, 0, 0] : f32 from vector<1x1x1xf32>
    %cst_9 = arith.constant 4.8828125E-4 : f32
    %17 = arith.mulf %16, %cst_9 : f32
    %18 = arith.mulf %11, %11 : f32
    %19 = arith.subf %17, %18 : f32
    %20 = vector.broadcast %11 : f32 to vector<128x16xf32>
    %21 = arith.subf %6, %20 : vector<128x16xf32>
    %cst_10 = arith.constant 9.99999974E-6 : f32
    %22 = arith.addf %19, %cst_10 : f32
    %23 = math.rsqrt %22 : f32
    %24 = vector.broadcast %23 : f32 to vector<128x16xf32>
    %25 = arith.mulf %21, %24 : vector<128x16xf32>
    %c0_11 = arith.constant 0 : index
    %c0_12 = arith.constant 0 : index
    %26 = vector.load %arg4[%c0_11, %c0_12] : memref<128x16xf32, #tpu.memory_space<vmem>>, vector<128x16xf32>
    %27 = arith.mulf %25, %26 : vector<128x16xf32>
    %c0_13 = arith.constant 0 : index
    %c0_14 = arith.constant 0 : index
    %28 = vector.load %arg5[%c0_13, %c0_14] : memref<128x16xf32, #tpu.memory_space<vmem>>, vector<128x16xf32>
    %29 = arith.addf %27, %28 : vector<128x16xf32>
    %cst_15 = arith.constant 0.000000e+00 : f32
    %30 = vector.broadcast %cst_15 : f32 to vector<128x16xf32>
    %31 = arith.cmpf oge, %29, %30 : vector<128x16xf32>
    %cst_16 = arith.constant 2.000000e-01 : f32
    %32 = vector.broadcast %cst_16 : f32 to vector<128x16xf32>
    %33 = arith.mulf %32, %29 : vector<128x16xf32>
    %34 = arith.select %31, %29, %33 : vector<128x16xi1>, vector<128x16xf32>
    %c0_17 = arith.constant 0 : index
    %c0_18 = arith.constant 0 : index
    %35 = vector.load %arg6[%c0_17, %c0_18] : memref<128x16xf32, #tpu.memory_space<vmem>>, vector<128x16xf32>
    %36 = arith.mulf %34, %35 : vector<128x16xf32>
    %37 = vector.shape_cast %36 : vector<128x16xf32> to vector<1x128x16xf32>
    %cst_19 = arith.constant dense<0.000000e+00> : vector<1xf32>
    %38 = vector.multi_reduction <add>, %37, %cst_19 [1, 2] : vector<1x128x16xf32> to vector<1xf32>
    %39 = vector.shape_cast %38 : vector<1xf32> to vector<1x1x1xf32>
    %40 = vector.extract %39[0, 0, 0] : f32 from vector<1x1x1xf32>
    %c0_20 = arith.constant 0 : index
    %c0_21 = arith.constant 0 : index
    %41 = vector.load %arg7[%c0_20, %c0_21] : memref<1x1xf32, #tpu.memory_space<vmem>>, vector<1x1xf32>
    %42 = vector.broadcast %40 : f32 to vector<1x1xf32>
    %43 = arith.addf %42, %41 : vector<1x1xf32>
    %44 = arith.negf %43 : vector<1x1xf32>
    %45 = math.exp %44 : vector<1x1xf32>
    %cst_22 = arith.constant 1.000000e+00 : f32
    %46 = vector.broadcast %cst_22 : f32 to vector<1x1xf32>
    %47 = arith.addf %46, %45 : vector<1x1xf32>
    %48 = arith.divf %46, %47 : vector<1x1xf32>
    %c0_23 = arith.constant 0 : index
    %c0_24 = arith.constant 0 : index
    %c0_25 = arith.constant 0 : index
    %49 = vector.load %arg8[%c0_23, %c0_24, %c0_25] : memref<1x1x1xf32, #tpu.memory_space<vmem>>, vector<1x1x1xf32>
    %50 = vector.shape_cast %49 : vector<1x1x1xf32> to vector<1x1xf32>
    %51 = vector.shape_cast %48 : vector<1x1xf32> to vector<1x1x1xf32>
    tpu.vector_store %arg8[%c0_23, %c0_24, %c0_25], %51 {strides = array<i32>} : memref<1x1x1xf32, #tpu.memory_space<vmem>>, vector<1x1x1xf32>,
    return
  }
  func.func @transform_0(%arg0: i32) -> (i32, i32, i32) {
    %c0_i32 = arith.constant 0 : i32
    %c0_i32_0 = arith.constant 0 : i32
    %c0_i32_1 = arith.constant 0 : i32
    return %arg0, %c0_i32, %c0_i32_0 : i32, i32, i32
  }
  func.func @transform_1(%arg0: i32) -> (i32, i32) {
    %c0_i32 = arith.constant 0 : i32
    %c0_i32_0 = arith.constant 0 : i32
    %c0_i32_1 = arith.constant 0 : i32
    return %c0_i32, %c0_i32_0 : i32, i32
  }
  func.func @transform_2(%arg0: i32) -> (i32, i32) {
    %c0_i32 = arith.constant 0 : i32
    %c0_i32_0 = arith.constant 0 : i32
    %c0_i32_1 = arith.constant 0 : i32
    return %c0_i32, %c0_i32_0 : i32, i32
  }
  func.func @transform_3(%arg0: i32) -> (i32, i32) {
    %c0_i32 = arith.constant 0 : i32
    %c0_i32_0 = arith.constant 0 : i32
    %c0_i32_1 = arith.constant 0 : i32
    return %c0_i32, %c0_i32_0 : i32, i32
  }
  func.func @transform_4(%arg0: i32) -> (i32, i32) {
    %c0_i32 = arith.constant 0 : i32
    %c0_i32_0 = arith.constant 0 : i32
    %c0_i32_1 = arith.constant 0 : i32
    return %c0_i32, %c0_i32_0 : i32, i32
  }
  func.func @transform_5(%arg0: i32) -> (i32, i32) {
    %c0_i32 = arith.constant 0 : i32
    %c0_i32_0 = arith.constant 0 : i32
    %c0_i32_1 = arith.constant 0 : i32
    return %c0_i32, %c0_i32_0 : i32, i32
  }
  func.func @transform_6(%arg0: i32) -> (i32, i32) {
    %c0_i32 = arith.constant 0 : i32
    %c0_i32_0 = arith.constant 0 : i32
    %c0_i32_1 = arith.constant 0 : i32
    return %c0_i32, %c0_i32_0 : i32, i32
  }
  func.func @transform_7(%arg0: i32) -> (i32, i32, i32) {
    %c0_i32 = arith.constant 0 : i32
    %c0_i32_0 = arith.constant 0 : i32
    %c0_i32_1 = arith.constant 0 : i32
    return %arg0, %c0_i32, %c0_i32_0 : i32, i32, i32
  }
}

</mosaic_0001>

<llo_original>
// kernel: discriminator_forward.4
$region0: #{discriminator_forward.4}
  #allocation0 [shape = 'u32[]', space=smem, size = 0x4, offset = 0x4, fixed_abs, tag = 'smem constant byte address 0x4 - core index']
  #allocation1 [shape = 'u32[144,128]{1,0:T(1,128)}', space=vmem, size = 0x12000, scoped, tag = 'internal scratch']
  %s0 = inlined_call_operand.vmem [shape: bf16[2,64,1024], index: 0, kind: input, shape index: {}]
  %s1 = inlined_call_operand.vmem [shape: bf16[16,64], index: 1, kind: input, shape index: {}]
  %s2 = inlined_call_operand.vmem [shape: f32[16,1], index: 2, kind: input, shape index: {}]
  %s3 = inlined_call_operand.vmem [shape: f32[16,1024], index: 3, kind: input, shape index: {}]
  %s4 = inlined_call_operand.vmem [shape: f32[16,1024], index: 4, kind: input, shape index: {}]
  %s5 = inlined_call_operand.vmem [shape: f32[2,16,1024], index: 5, kind: output, shape index: {}]
  %s6 = sld [smem:[#allocation0]]
  $region53: #{discriminator_forward.4} parent=0
    _
  %s8 = ssub.s32 1, %s6
  %s9 = scalar_select 0, %s8, %s6
  loop: start=0, step=1, limit=4
  $region2: #{discriminator_forward.4} parent=0 // loop_pre_header
    _
  $region3: #{discriminator_forward.4} parent=0 // loop_header
    %s11 = sphi 0, %s15
    %p12 = scmp.ge.s32.totalorder %s11, 4
    %s21 = sphi 0, %s23
    %s24 = sphi 0, %s21
    %s25 = sphi 0, %s24
    %s41 = sphi 0, %s25
    %s45 = sphi 0, %s45
    %s47 = sphi 0, %s45
    %s48 = sphi 0, %s47
    %s62 = sphi 0, %s48
    %s66 = sphi 0, %s66
    %s68 = sphi 0, %s66
    %s69 = sphi 0, %s68
    %s83 = sphi 0, %s69
    %s87 = sphi 0, %s87
    %s89 = sphi 0, %s87
    %s90 = sphi 0, %s89
    %s104 = sphi 0, %s90
    %s108 = sphi 0, %s108
    %s110 = sphi 0, %s108
    %s111 = sphi 0, %s110
    %s125 = sphi 0, %s111
    %s131 = sphi 0, %s133
    %s134 = sphi 0, %s131
    %s135 = sphi 0, %s134
    %s151 = sphi 0, %s135
  $region4: #{discriminator_forward.4} parent=0 // loop_header_branch
    %14 = sbr.rel (%p12) target = $region8
  $region5: #{discriminator_forward.4} parent=0 // loop_body
    %s16 = ssub.s32 %s11, 1
    %s17 = ssub.s32 %s11, 2
    %s18 = sadd.s32 %s11, 1
    %s19 = ssub.s32 %s11, %s18
    %p20 = scmp.eq.s32.totalorder %s19, 0
    %s22 = sadd.s32 %s21, 1
    %s23 = scalar_select %p20, %s21, %s22
    %p26 = pneg %p20
    %p27 = scmp.eq.s32.totalorder %s11, 1
    %p28 = por %p26, %p27
    %p29 = scmp.ne.s32.totalorder %s21, %s24
    %p30 = scmp.eq.s32.totalorder %s11, 0
    %p31 = por %p29, %p30
    %p32 = scmp.ne.s32.totalorder %s21, %s24
    %p33 = scmp.eq.s32.totalorder %s16, 1
    %p34 = por %p32, %p33
    %p35 = scmp.ne.s32.totalorder %s24, %s25
    %p36 = scmp.eq.s32.totalorder %s16, 0
    %p37 = por %p35, %p36
    %p38 = scmp.ne.s32.totalorder %s24, %s25
    %p39 = scmp.eq.s32.totalorder %s17, 1
    %p40 = por %p38, %p39
    %p42 = scmp.ne.s32.totalorder %s25, %s41
    %p43 = scmp.eq.s32.totalorder %s17, 0
    %p44 = por %p42, %p43
    %s46 = sadd.s32 %s45, 1
    %p49 = scmp.eq.s32.totalorder %s11, 1
    %p50 = scmp.ne.s32.totalorder %s45, %s47
    %p51 = scmp.eq.s32.totalorder %s11, 0
    %p52 = por %p50, %p51
    %p53 = scmp.ne.s32.totalorder %s45, %s47
    %p54 = scmp.eq.s32.totalorder %s16, 1
    %p55 = por %p53, %p54
    %p56 = scmp.ne.s32.totalorder %s47, %s48
    %p57 = scmp.eq.s32.totalorder %s16, 0
    %p58 = por %p56, %p57
    %p59 = scmp.ne.s32.totalorder %s47, %s48
    %p60 = scmp.eq.s32.totalorder %s17, 1
    %p61 = por %p59, %p60
    %p63 = scmp.ne.s32.totalorder %s48, %s62
    %p64 = scmp.eq.s32.totalorder %s17, 0
    %p65 = por %p63, %p64
    %s67 = sadd.s32 %s66, 1
    %p70 = scmp.eq.s32.totalorder %s11, 1
    %p71 = scmp.ne.s32.totalorder %s66, %s68
    %p72 = scmp.eq.s32.totalorder %s11, 0
    %p73 = por %p71, %p72
    %p74 = scmp.ne.s32.totalorder %s66, %s68
    %p75 = scmp.eq.s32.totalorder %s16, 1
    %p76 = por %p74, %p75
    %p77 = scmp.ne.s32.totalorder %s68, %s69
    %p78 = scmp.eq.s32.totalorder %s16, 0
    %p79 = por %p77, %p78
    %p80 = scmp.ne.s32.totalorder %s68, %s69
    %p81 = scmp.eq.s32.totalorder %s17, 1
    %p82 = por %p80, %p81
    %p84 = scmp.ne.s32.totalorder %s69, %s83
    %p85 = scmp.eq.s32.totalorder %s17, 0
    %p86 = por %p84, %p85
    %s88 = sadd.s32 %s87, 1
    %p91 = scmp.eq.s32.totalorder %s11, 1
    %p92 = scmp.ne.s32.totalorder %s87, %s89
    %p93 = scmp.eq.s32.totalorder %s11, 0
    %p94 = por %p92, %p93
    %p95 = scmp.ne.s32.totalorder %s87, %s89
    %p96 = scmp.eq.s32.totalorder %s16, 1
    %p97 = por %p95, %p96
    %p98 = scmp.ne.s32.totalorder %s89, %s90
    %p99 = scmp.eq.s32.totalorder %s16, 0
    %p100 = por %p98, %p99
    %p101 = scmp.ne.s32.totalorder %s89, %s90
    %p102 = scmp.eq.s32.totalorder %s17, 1
    %p103 = por %p101, %p102
    %p105 = scmp.ne.s32.totalorder %s90, %s104
    %p106 = scmp.eq.s32.totalorder %s17, 0
    %p107 = por %p105, %p106
    %s109 = sadd.s32 %s108, 1
    %p112 = scmp.eq.s32.totalorder %s11, 1
    %p113 = scmp.ne.s32.totalorder %s108, %s110
    %p114 = scmp.eq.s32.totalorder %s11, 0
    %p115 = por %p113, %p114
    %p116 = scmp.ne.s32.totalorder %s108, %s110
    %p117 = scmp.eq.s32.totalorder %s16, 1
    %p118 = por %p116, %p117
    %p119 = scmp.ne.s32.totalorder %s110, %s111
    %p120 = scmp.eq.s32.totalorder %s16, 0
    %p121 = por %p119, %p120
    %p122 = scmp.ne.s32.totalorder %s110, %s111
    %p123 = scmp.eq.s32.totalorder %s17, 1
    %p124 = por %p122, %p123
    %p126 = scmp.ne.s32.totalorder %s111, %s125
    %p127 = scmp.eq.s32.totalorder %s17, 0
    %p128 = por %p126, %p127
    %s129 = ssub.s32 %s11, %s18
    %p130 = scmp.eq.s32.totalorder %s129, 0
    %s132 = sadd.s32 %s131, 1
    %s133 = scalar_select %p130, %s131, %s132
    %p136 = pneg %p130
    %p137 = scmp.eq.s32.totalorder %s11, 1
    %p138 = por %p136, %p137
    %p139 = scmp.ne.s32.totalorder %s131, %s134
    %p140 = scmp.eq.s32.totalorder %s11, 0
    %p141 = por %p139, %p140
    %p142 = scmp.ne.s32.totalorder %s131, %s134
    %p143 = scmp.eq.s32.totalorder %s16, 1
    %p144 = por %p142, %p143
    %p145 = scmp.ne.s32.totalorder %s134, %s135
    %p146 = scmp.eq.s32.totalorder %s16, 0
    %p147 = por %p145, %p146
    %p148 = scmp.ne.s32.totalorder %s134, %s135
    %p149 = scmp.eq.s32.totalorder %s17, 1
    %p150 = por %p148, %p149
    %p152 = scmp.ne.s32.totalorder %s135, %s151
    %p153 = scmp.eq.s32.totalorder %s17, 0
    %p154 = por %p152, %p153
    %p155 = scmp.le.s32.totalorder 1, %s11
    %p156 = scmp.lt.s32.totalorder %s11, 3
    %p157 = pnand %p155, %p156
    %p158 = pneg %p157
    // Predicated region
    $region9: #{discriminator_forward.4} parent=5 // pred_check
      _
    $region10: #{discriminator_forward.4} parent=5 // pred_check_branch
      %160 = sbr.rel (%p157) target = $region12
    $region11: #{discriminator_forward.4} parent=5 // pred_region
      %s161 = ssub.s32 %s11, 1
      // Predicated region
      $region13: #{discriminator_forward.4} parent=11 // pred_check
        %p162 = pneg %p58
      $region14: #{discriminator_forward.4} parent=11 // pred_check_branch
        %164 = sbr.rel (%p162) target = $region16
      $region15: #{discriminator_forward.4} parent=11 // pred_region
        _
      $region16: #{discriminator_forward.4} parent=11 // pred_fallthru
        _
      // Predicated region
      $region17: #{discriminator_forward.4} parent=11 // pred_check
        %p165 = pneg %p79
      $region18: #{discriminator_forward.4} parent=11 // pred_check_branch
        %167 = sbr.rel (%p165) target = $region20
      $region19: #{discriminator_forward.4} parent=11 // pred_region
        _
      $region20: #{discriminator_forward.4} parent=11 // pred_fallthru
        _
      // Predicated region
      $region21: #{discriminator_forward.4} parent=11 // pred_check
        %p168 = pneg %p100
      $region22: #{discriminator_forward.4} parent=11 // pred_check_branch
        %170 = sbr.rel (%p168) target = $region24
      $region23: #{discriminator_forward.4} parent=11 // pred_region
        _
      $region24: #{discriminator_forward.4} parent=11 // pred_fallthru
        _
      // Predicated region
      $region25: #{discriminator_forward.4} parent=11 // pred_check
        %p171 = pneg %p121
      $region26: #{discriminator_forward.4} parent=11 // pred_check_branch
        %173 = sbr.rel (%p171) target = $region28
      $region27: #{discriminator_forward.4} parent=11 // pred_region
        _
      $region28: #{discriminator_forward.4} parent=11 // pred_fallthru
        _
    $region12: #{discriminator_forward.4} parent=5 // pred_fallthru
      _
    %p174 = scmp.lt.s32.totalorder %s11, 2
    // Predicated region
    $region29: #{discriminator_forward.4} parent=5 // pred_check
      %p175 = pneg %p174
    $region30: #{discriminator_forward.4} parent=5 // pred_check_branch
      %177 = sbr.rel (%p175) target = $region32
    $region31: #{discriminator_forward.4} parent=5 // pred_region
      // Predicated region
      $region33: #{discriminator_forward.4} parent=31 // pred_check
        %p178 = pneg %p31
      $region34: #{discriminator_forward.4} parent=31 // pred_check_branch
        %180 = sbr.rel (%p178) target = $region36
      $region35: #{discriminator_forward.4} parent=31 // pred_region
        %p181 = scmp.lt.s32.totalorder %s11, 1
        %s182 = scalar_select %p181, %s11, 1
        %s183 = smul.addr %s182, 64
        %s184 = smul.addr %s183, 4
        %s185 = scalar_lea.vmem %s0, %s184
      $region36: #{discriminator_forward.4} parent=31 // pred_fallthru
        _
    $region32: #{discriminator_forward.4} parent=5 // pred_fallthru
      _
    %p186 = scmp.le.s32.totalorder 1, %s11
    %p187 = scmp.lt.s32.totalorder %s11, 3
    %p188 = pnand %p186, %p187
    %p189 = pneg %p188
    // Predicated region
    $region37: #{discriminator_forward.4} parent=5 // pred_check
      _
    $region38: #{discriminator_forward.4} parent=5 // pred_check_branch
      %191 = sbr.rel (%p188) target = $region40
    $region39: #{discriminator_forward.4} parent=5 // pred_region
      %s192 = ssub.s32 %s11, 1
      %p193 = scmp.lt.s32.totalorder %s16, 1
      %s194 = scalar_select %p193, %s16, 1
      %s195 = smul.addr %s194, 64
      %s196 = smul.addr %s195, 4
      %s197 = scalar_lea.vmem %s0, %s196
      %p198 = pneg %p37
      %p199 = pneg %p34
      %p200 = pneg %p58
      %p201 = pneg %p55
      %p202 = pneg %p79
      %p203 = pneg %p76
      %p204 = pneg %p100
      %p205 = pneg %p97
      %p206 = pneg %p121
      %p207 = pneg %p118
      %p208 = pneg %p147
      %p209 = pneg %p144
      %p210 = scmp.lt.s32.totalorder %s16, 1
      %s211 = scalar_select %p210, %s16, 1
      %s212 = smul.addr %s211, 16
      %s213 = smul.addr %s212, 8
      %s214 = scalar_lea.vmem %s5, %s213
      %p215 = scmp.lt.s32.totalorder %s16, 1
      %s216 = scalar_select %p215, %s16, 1
      %s217 = smul.addr %s216, 64
      %s218 = smul.addr %s217, 4
      %s219 = scalar_lea.vmem %s0, %s218
      %p220 = scmp.lt.s32.totalorder %s16, 1
      %s221 = scalar_select %p220, %s16, 1
      %s222 = smul.addr %s221, 16
      %s223 = smul.addr %s222, 8
      %s224 = scalar_lea.vmem %s5, %s223
      %v226 = vld [vmem:[%s1] sm:$0xf]
      %v227 = vld [vmem:[%s1 + $0x4] sm:$0xf]
      %v228 = vld [vmem:[%s219] sm:$0xff]
      %v229 = vld [vmem:[%s219 + $0x8] sm:$0xff]
      %v230 = vld [vmem:[%s219 + $0x10] sm:$0xff]
      %v231 = vld [vmem:[%s219 + $0x18] sm:$0xff]
      %v232 = vld [vmem:[%s219 + $0x20] sm:$0xff]
      %v233 = vld [vmem:[%s219 + $0x28] sm:$0xff]
      %v234 = vld [vmem:[%s219 + $0x30] sm:$0xff]
      %v235 = vld [vmem:[%s219 + $0x38] sm:$0xff]
      %v236 = vld [vmem:[%s219 + $0x40] sm:$0xff]
      %v237 = vld [vmem:[%s219 + $0x48] sm:$0xff]
      %v238 = vld [vmem:[%s219 + $0x50] sm:$0xff]
      %v239 = vld [vmem:[%s219 + $0x58] sm:$0xff]
      %v240 = vld [vmem:[%s219 + $0x60] sm:$0xff]
      %v241 = vld [vmem:[%s219 + $0x68] sm:$0xff]
      %v242 = vld [vmem:[%s219 + $0x70] sm:$0xff]
      %v243 = vld [vmem:[%s219 + $0x78] sm:$0xff]
      %v244 = vld [vmem:[%s219 + $0x80] sm:$0xff]
      %v245 = vld [vmem:[%s219 + $0x88] sm:$0xff]
      %v246 = vld [vmem:[%s219 + $0x90] sm:$0xff]
      %v247 = vld [vmem:[%s219 + $0x98] sm:$0xff]
      %v248 = vld [vmem:[%s219 + $0xa0] sm:$0xff]
      %v249 = vld [vmem:[%s219 + $0xa8] sm:$0xff]
      %v250 = vld [vmem:[%s219 + $0xb0] sm:$0xff]
      %v251 = vld [vmem:[%s219 + $0xb8] sm:$0xff]
      %v252 = vld [vmem:[%s219 + $0xc0] sm:$0xff]
      %v253 = vld [vmem:[%s219 + $0xc8] sm:$0xff]
      %v254 = vld [vmem:[%s219 + $0xd0] sm:$0xff]
      %v255 = vld [vmem:[%s219 + $0xd8] sm:$0xff]
      %v256 = vld [vmem:[%s219 + $0xe0] sm:$0xff]
      %v257 = vld [vmem:[%s219 + $0xe8] sm:$0xff]
      %v258 = vld [vmem:[%s219 + $0xf0] sm:$0xff]
      %v259 = vld [vmem:[%s219 + $0xf8] sm:$0xff]
      %v260 = vld [vmem:[%s2] sm:$0xff]
      %v261 = vld [vmem:[%s2 + $0x8] sm:$0xff]
      %263 = vset.pattern.permute.xlu0 0
      %264 = vperm.xlu0 %263, %v260
      %v265 = vpop.permute.xlu0 %264
      %268 = vset.pattern.permute.xlu0 0
      %269 = vperm.xlu0 %268, %v261
      %v270 = vpop.permute.xlu0 %269
      %v274 = vunpack.c.l.b16 %v226
      %v275 = vunpack.c.l.b16 %v227
      %v276 = vpack.c.b16 %v275, %v274
      %v309 = vunpack.c.l.b16 %v228
      %v310 = vunpack.c.h.b16 %v228
      %v311 = vunpack.c.l.b16 %v229
      %v312 = vunpack.c.h.b16 %v229
      %v313 = vunpack.c.l.b16 %v230
      %v314 = vunpack.c.h.b16 %v230
      %v315 = vunpack.c.l.b16 %v231
      %v316 = vunpack.c.h.b16 %v231
      %v317 = vunpack.c.l.b16 %v232
      %v318 = vunpack.c.h.b16 %v232
      %v319 = vunpack.c.l.b16 %v233
      %v320 = vunpack.c.h.b16 %v233
      %v321 = vunpack.c.l.b16 %v234
      %v322 = vunpack.c.h.b16 %v234
      %v323 = vunpack.c.l.b16 %v235
      %v324 = vunpack.c.h.b16 %v235
      %v325 = vunpack.c.l.b16 %v236
      %v326 = vunpack.c.h.b16 %v236
      %v327 = vunpack.c.l.b16 %v237
      %v328 = vunpack.c.h.b16 %v237
      %v329 = vunpack.c.l.b16 %v238
      %v330 = vunpack.c.h.b16 %v238
      %v331 = vunpack.c.l.b16 %v239
      %v332 = vunpack.c.h.b16 %v239
      %v333 = vunpack.c.l.b16 %v240
      %v334 = vunpack.c.h.b16 %v240
      %v335 = vunpack.c.l.b16 %v241
      %v336 = vunpack.c.h.b16 %v241
      %v337 = vunpack.c.l.b16 %v242
      %v338 = vunpack.c.h.b16 %v242
      %v339 = vunpack.c.l.b16 %v243
      %v340 = vunpack.c.h.b16 %v243
      %v341 = vunpack.c.l.b16 %v244
      %v342 = vunpack.c.h.b16 %v244
      %v343 = vunpack.c.l.b16 %v245
      %v344 = vunpack.c.h.b16 %v245
      %v345 = vunpack.c.l.b16 %v246
      %v346 = vunpack.c.h.b16 %v246
      %v347 = vunpack.c.l.b16 %v247
      %v348 = vunpack.c.h.b16 %v247
      %v349 = vunpack.c.l.b16 %v248
      %v350 = vunpack.c.h.b16 %v248
      %v351 = vunpack.c.l.b16 %v249
      %v352 = vunpack.c.h.b16 %v249
      %v353 = vunpack.c.l.b16 %v250
      %v354 = vunpack.c.h.b16 %v250
      %v355 = vunpack.c.l.b16 %v251
      %v356 = vunpack.c.h.b16 %v251
      %v357 = vunpack.c.l.b16 %v252
      %v358 = vunpack.c.h.b16 %v252
      %v359 = vunpack.c.l.b16 %v253
      %v360 = vunpack.c.h.b16 %v253
      %v361 = vunpack.c.l.b16 %v254
      %v362 = vunpack.c.h.b16 %v254
      %v363 = vunpack.c.l.b16 %v255
      %v364 = vunpack.c.h.b16 %v255
      %v365 = vunpack.c.l.b16 %v256
      %v366 = vunpack.c.h.b16 %v256
      %v367 = vunpack.c.l.b16 %v257
      %v368 = vunpack.c.h.b16 %v257
      %v369 = vunpack.c.l.b16 %v258
      %v370 = vunpack.c.h.b16 %v258
      %v371 = vunpack.c.l.b16 %v259
      %v372 = vunpack.c.h.b16 %v259
      %v373 = vpack.c.b16 %v317, %v309
      %v374 = vpack.c.b16 %v318, %v310
      %v375 = vpack.c.b16 %v319, %v311
      %v376 = vpack.c.b16 %v320, %v312
      %v377 = vpack.c.b16 %v321, %v313
      %v378 = vpack.c.b16 %v322, %v314
      %v379 = vpack.c.b16 %v323, %v315
      %v380 = vpack.c.b16 %v324, %v316
      %v381 = vpack.c.b16 %v333, %v325
      %v382 = vpack.c.b16 %v334, %v326
      %v383 = vpack.c.b16 %v335, %v327
      %v384 = vpack.c.b16 %v336, %v328
      %v385 = vpack.c.b16 %v337, %v329
      %v386 = vpack.c.b16 %v338, %v330
      %v387 = vpack.c.b16 %v339, %v331
      %v388 = vpack.c.b16 %v340, %v332
      %v389 = vpack.c.b16 %v349, %v341
      %v390 = vpack.c.b16 %v350, %v342
      %v391 = vpack.c.b16 %v351, %v343
      %v392 = vpack.c.b16 %v352, %v344
      %v393 = vpack.c.b16 %v353, %v345
      %v394 = vpack.c.b16 %v354, %v346
      %v395 = vpack.c.b16 %v355, %v347
      %v396 = vpack.c.b16 %v356, %v348
      %v397 = vpack.c.b16 %v365, %v357
      %v398 = vpack.c.b16 %v366, %v358
      %v399 = vpack.c.b16 %v367, %v359
      %v400 = vpack.c.b16 %v368, %v360
      %v401 = vpack.c.b16 %v369, %v361
      %v402 = vpack.c.b16 %v370, %v362
      %v403 = vpack.c.b16 %v371, %v363
      %v404 = vpack.c.b16 %v372, %v364
      %vm437 = vcmask 523264
      %v439 = vsel %vm437, %v276, 0
      %441 = vmatprep.subr.bf16.mxu0 %v374
      %442 = vmatpush1.bf16.msra.mxu0 %v373
      %443 = vmatprep.subr.bf16.mxu0 %v382
      %444 = vmatpush1.bf16.msra.mxu0 %v381
      %445 = vmatprep.subr.bf16.mxu0 %v390
      %446 = vmatpush1.bf16.msra.mxu0 %v389
      %447 = vmatprep.subr.bf16.mxu0 %v398
      %448 = vmatpush1.bf16.msra.mxu0 %v397
      %449 = vmatprep.subr.bf16.mxu0 0
      %450 = vmatpush1.bf16.msra.mxu0 0
      %451 = vmatprep.subr.bf16.mxu0 0
      %452 = vmatpush1.bf16.msra.mxu0 0
      %453 = vmatprep.subr.bf16.mxu0 0
      %454 = vmatpush1.bf16.msra.mxu0 0
      %455 = vmatprep.subr.bf16.mxu0 0
      %456 = vmatpush1.bf16.msra.mxu0 0
      %457 = vmatprep.subr.bf16.mxu0 0
      %458 = vmatpush1.bf16.msra.mxu0 0
      %459 = vmatprep.subr.bf16.mxu0 0
      %460 = vmatpush1.bf16.msra.mxu0 0
      %461 = vmatprep.subr.bf16.mxu0 0
      %462 = vmatpush1.bf16.msra.mxu0 0
      %463 = vmatprep.subr.bf16.mxu0 0
      %464 = vmatpush1.bf16.msra.mxu0 0
      %465 = vmatprep.subr.bf16.mxu0 0
      %466 = vmatpush1.bf16.msra.mxu0 0
      %467 = vmatprep.subr.bf16.mxu0 0
      %468 = vmatpush1.bf16.msra.mxu0 0
      %469 = vmatprep.subr.bf16.mxu0 0
      %470 = vmatpush1.bf16.msra.mxu0 0
      %471 = vmatprep.subr.bf16.mxu0 0
      %472 = vmatpush1.bf16.msra.mxu0 0
      %473 = vmatprep.mubr.bf16.mxu0 0
      %474 = vmatmul.mubr.bf16.gmra.mrb[0].mxu0 %v439
      %v475 = vpop.f32.mrb[0].mxu0
      %v476 = vadd.f32 %v265, %v475
      %v477 = vpop.f32.mrb[0].mxu0
      %v478 = vadd.f32 %v265, %v477
      %v479 = vpop.f32.mrb[0].mxu0
      %v480 = vadd.f32 %v270, %v479
      %v481 = vpop.f32.mrb[0].mxu0
      %v482 = vadd.f32 %v270, %v481
      %483 = vdwg.mxu0
      %484 = vmatprep.subr.bf16.mxu0 %v376
      %485 = vmatpush1.bf16.msra.mxu0 %v375
      %486 = vmatprep.subr.bf16.mxu0 %v384
      %487 = vmatpush1.bf16.msra.mxu0 %v383
      %488 = vmatprep.subr.bf16.mxu0 %v392
      %489 = vmatpush1.bf16.msra.mxu0 %v391
      %490 = vmatprep.subr.bf16.mxu0 %v400
      %491 = vmatpush1.bf16.msra.mxu0 %v399
      %492 = vmatprep.subr.bf16.mxu0 0
      %493 = vmatpush1.bf16.msra.mxu0 0
      %494 = vmatprep.subr.bf16.mxu0 0
      %495 = vmatpush1.bf16.msra.mxu0 0
      %496 = vmatprep.subr.bf16.mxu0 0
      %497 = vmatpush1.bf16.msra.mxu0 0
      %498 = vmatprep.subr.bf16.mxu0 0
      %499 = vmatpush1.bf16.msra.mxu0 0
      %500 = vmatprep.subr.bf16.mxu0 0
      %501 = vmatpush1.bf16.msra.mxu0 0
      %502 = vmatprep.subr.bf16.mxu0 0
      %503 = vmatpush1.bf16.msra.mxu0 0
      %504 = vmatprep.subr.bf16.mxu0 0
      %505 = vmatpush1.bf16.msra.mxu0 0
      %506 = vmatprep.subr.bf16.mxu0 0
      %507 = vmatpush1.bf16.msra.mxu0 0
      %508 = vmatprep.subr.bf16.mxu0 0
      %509 = vmatpush1.bf16.msra.mxu0 0
      %510 = vmatprep.subr.bf16.mxu0 0
      %511 = vmatpush1.bf16.msra.mxu0 0
      %512 = vmatprep.subr.bf16.mxu0 0
      %513 = vmatpush1.bf16.msra.mxu0 0
      %514 = vmatprep.subr.bf16.mxu0 0
      %515 = vmatpush1.bf16.msra.mxu0 0
      %516 = vmatprep.mubr.bf16.mxu0 0
      %517 = vmatmul.mubr.bf16.gmra.mrb[0].mxu0 %v439
      %v518 = vpop.f32.mrb[0].mxu0
      %v519 = vadd.f32 %v265, %v518
      %v520 = vpop.f32.mrb[0].mxu0
      %v521 = vadd.f32 %v265, %v520
      %v522 = vpop.f32.mrb[0].mxu0
      %v523 = vadd.f32 %v270, %v522
      %v524 = vpop.f32.mrb[0].mxu0
      %v525 = vadd.f32 %v270, %v524
      %526 = vdwg.mxu0
      %527 = vmatprep.subr.bf16.mxu0 %v378
      %528 = vmatpush1.bf16.msra.mxu0 %v377
      %529 = vmatprep.subr.bf16.mxu0 %v386
      %530 = vmatpush1.bf16.msra.mxu0 %v385
      %531 = vmatprep.subr.bf16.mxu0 %v394
      %532 = vmatpush1.bf16.msra.mxu0 %v393
      %533 = vmatprep.subr.bf16.mxu0 %v402
      %534 = vmatpush1.bf16.msra.mxu0 %v401
      %535 = vmatprep.subr.bf16.mxu0 0
      %536 = vmatpush1.bf16.msra.mxu0 0
      %537 = vmatprep.subr.bf16.mxu0 0
      %538 = vmatpush1.bf16.msra.mxu0 0
      %539 = vmatprep.subr.bf16.mxu0 0
      %540 = vmatpush1.bf16.msra.mxu0 0
      %541 = vmatprep.subr.bf16.mxu0 0
      %542 = vmatpush1.bf16.msra.mxu0 0
      %543 = vmatprep.subr.bf16.mxu0 0
      %544 = vmatpush1.bf16.msra.mxu0 0
      %545 = vmatprep.subr.bf16.mxu0 0
      %546 = vmatpush1.bf16.msra.mxu0 0
      %547 = vmatprep.subr.bf16.mxu0 0
      %548 = vmatpush1.bf16.msra.mxu0 0
      %549 = vmatprep.subr.bf16.mxu0 0
      %550 = vmatpush1.bf16.msra.mxu0 0
      %551 = vmatprep.subr.bf16.mxu0 0
      %552 = vmatpush1.bf16.msra.mxu0 0
      %553 = vmatprep.subr.bf16.mxu0 0
      %554 = vmatpush1.bf16.msra.mxu0 0
      %555 = vmatprep.subr.bf16.mxu0 0
      %556 = vmatpush1.bf16.msra.mxu0 0
      %557 = vmatprep.subr.bf16.mxu0 0
      %558 = vmatpush1.bf16.msra.mxu0 0
      %559 = vmatprep.mubr.bf16.mxu0 0
      %560 = vmatmul.mubr.bf16.gmra.mrb[0].mxu0 %v439
      %v561 = vpop.f32.mrb[0].mxu0
      %v562 = vadd.f32 %v265, %v561
      %v563 = vpop.f32.mrb[0].mxu0
      %v564 = vadd.f32 %v265, %v563
      %v565 = vpop.f32.mrb[0].mxu0
      %v566 = vadd.f32 %v270, %v565
      %v567 = vpop.f32.mrb[0].mxu0
      %v568 = vadd.f32 %v270, %v567
      %569 = vdwg.mxu0
      %570 = vmatprep.subr.bf16.mxu0 %v380
      %571 = vmatpush1.bf16.msra.mxu0 %v379
      %572 = vmatprep.subr.bf16.mxu0 %v388
      %573 = vmatpush1.bf16.msra.mxu0 %v387
      %574 = vmatprep.subr.bf16.mxu0 %v396
      %575 = vmatpush1.bf16.msra.mxu0 %v395
      %576 = vmatprep.subr.bf16.mxu0 %v404
      %577 = vmatpush1.bf16.msra.mxu0 %v403
      %578 = vmatprep.subr.bf16.mxu0 0
      %579 = vmatpush1.bf16.msra.mxu0 0
      %580 = vmatprep.subr.bf16.mxu0 0
      %581 = vmatpush1.bf16.msra.mxu0 0
      %582 = vmatprep.subr.bf16.mxu0 0
      %583 = vmatpush1.bf16.msra.mxu0 0
      %584 = vmatprep.subr.bf16.mxu0 0
      %585 = vmatpush1.bf16.msra.mxu0 0
      %586 = vmatprep.subr.bf16.mxu0 0
      %587 = vmatpush1.bf16.msra.mxu0 0
      %588 = vmatprep.subr.bf16.mxu0 0
      %589 = vmatpush1.bf16.msra.mxu0 0
      %590 = vmatprep.subr.bf16.mxu0 0
      %591 = vmatpush1.bf16.msra.mxu0 0
      %592 = vmatprep.subr.bf16.mxu0 0
      %593 = vmatpush1.bf16.msra.mxu0 0
      %594 = vmatprep.subr.bf16.mxu0 0
      %595 = vmatpush1.bf16.msra.mxu0 0
      %596 = vmatprep.subr.bf16.mxu0 0
      %597 = vmatpush1.bf16.msra.mxu0 0
      %598 = vmatprep.subr.bf16.mxu0 0
      %599 = vmatpush1.bf16.msra.mxu0 0
      %600 = vmatprep.subr.bf16.mxu0 0
      %601 = vmatpush1.bf16.msra.mxu0 0
      %602 = vmatprep.mubr.bf16.mxu0 0
      %603 = vmatmul.mubr.bf16.gmra.mrb[0].mxu0 %v439
      %v604 = vpop.f32.mrb[0].mxu0
      %v605 = vadd.f32 %v265, %v604
      %v606 = vpop.f32.mrb[0].mxu0
      %v607 = vadd.f32 %v265, %v606
      %v608 = vpop.f32.mrb[0].mxu0
      %v609 = vadd.f32 %v270, %v608
      %v610 = vpop.f32.mrb[0].mxu0
      %v611 = vadd.f32 %v270, %v610
      %612 = vdwg.mxu0
      %v613 = vadd.f32 %v476, %v478
      %v614 = vadd.f32 %v613, %v519
      %v615 = vadd.f32 %v614, %v521
      %v616 = vadd.f32 %v615, %v562
      %v617 = vadd.f32 %v616, %v564
      %v618 = vadd.f32 %v617, %v605
      %v619 = vadd.f32 %v618, %v607
      %v620 = vadd.f32 %v619, %v480
      %v621 = vadd.f32 %v620, %v482
      %v622 = vadd.f32 %v621, %v523
      %v623 = vadd.f32 %v622, %v525
      %v624 = vadd.f32 %v623, %v566
      %v625 = vadd.f32 %v624, %v568
      %v626 = vadd.f32 %v625, %v609
      %v627 = vadd.f32 %v626, %v611
      %628 = vadd.xlane.f32.xlu0 %v627
      %v629 = vpop.xlane.xlu0 %628
      %v630 = vrot.slane %v629, 4
      %v631 = vadd.f32 %v629, %v630
      %v632 = vrot.slane %v631, 2
      %v633 = vadd.f32 %v631, %v632
      %v634 = vrot.slane %v633, 1
      %v635 = vadd.f32 %v633, %v634
      %s636 = vtos %v635
      %s637 = smul.f32 %s636, 6.1035156e-05
      %v638 = vmul.f32 %v476, %v476
      %v639 = vmul.f32 %v478, %v478
      %v640 = vmul.f32 %v519, %v519
      %v641 = vmul.f32 %v521, %v521
      %v642 = vmul.f32 %v562, %v562
      %v643 = vmul.f32 %v564, %v564
      %v644 = vmul.f32 %v605, %v605
      %v645 = vmul.f32 %v607, %v607
      %v646 = vmul.f32 %v480, %v480
      %v647 = vmul.f32 %v482, %v482
      %v648 = vmul.f32 %v523, %v523
      %v649 = vmul.f32 %v525, %v525
      %v650 = vmul.f32 %v566, %v566
      %v651 = vmul.f32 %v568, %v568
      %v652 = vmul.f32 %v609, %v609
      %v653 = vmul.f32 %v611, %v611
      %v654 = vadd.f32 %v638, %v639
      %v655 = vadd.f32 %v654, %v640
      %v656 = vadd.f32 %v655, %v641
      %v657 = vadd.f32 %v656, %v642
      %v658 = vadd.f32 %v657, %v643
      %v659 = vadd.f32 %v658, %v644
      %v660 = vadd.f32 %v659, %v645
      %v661 = vadd.f32 %v660, %v646
      %v662 = vadd.f32 %v661, %v647
      %v663 = vadd.f32 %v662, %v648
      %v664 = vadd.f32 %v663, %v649
      %v665 = vadd.f32 %v664, %v650
      %v666 = vadd.f32 %v665, %v651
      %v667 = vadd.f32 %v666, %v652
      %v668 = vadd.f32 %v667, %v653
      %669 = vadd.xlane.f32.xlu0 %v668
      %v670 = vpop.xlane.xlu0 %669
      %v671 = vrot.slane %v670, 4
      %v672 = vadd.f32 %v670, %v671
      %v673 = vrot.slane %v672, 2
      %v674 = vadd.f32 %v672, %v673
      %v675 = vrot.slane %v674, 1
      %v676 = vadd.f32 %v674, %v675
      %s677 = vtos %v676
      %s678 = smul.f32 %s677, 6.1035156e-05
      %s679 = smul.f32 %s637, %s637
      %s680 = ssub.f32 %s678, %s679
      %v681 = vstv %s637
      %v682 = vsub.f32 %v476, %v681
      %v683 = vsub.f32 %v478, %v681
      %v684 = vsub.f32 %v519, %v681
      %v685 = vsub.f32 %v521, %v681
      %v686 = vsub.f32 %v562, %v681
      %v687 = vsub.f32 %v564, %v681
      %v688 = vsub.f32 %v605, %v681
      %v689 = vsub.f32 %v607, %v681
      %v690 = vsub.f32 %v480, %v681
      %v691 = vsub.f32 %v482, %v681
      %v692 = vsub.f32 %v523, %v681
      %v693 = vsub.f32 %v525, %v681
      %v694 = vsub.f32 %v566, %v681
      %v695 = vsub.f32 %v568, %v681
      %v696 = vsub.f32 %v609, %v681
      %v697 = vsub.f32 %v611, %v681
      %s698 = sadd.f32 %s680, 1e-05
      %v699 = vstv %s698
      %v700 = vrsqrt.pop %v699
      %s701 = vtos %v700
      %v702 = vstv %s701
      %v703 = vmul.f32 %v682, %v702
      %v704 = vmul.f32 %v683, %v702
      %v705 = vmul.f32 %v684, %v702
      %v706 = vmul.f32 %v685, %v702
      %v707 = vmul.f32 %v686, %v702
      %v708 = vmul.f32 %v687, %v702
      %v709 = vmul.f32 %v688, %v702
      %v710 = vmul.f32 %v689, %v702
      %v711 = vmul.f32 %v690, %v702
      %v712 = vmul.f32 %v691, %v702
      %v713 = vmul.f32 %v692, %v702
      %v714 = vmul.f32 %v693, %v702
      %v715 = vmul.f32 %v694, %v702
      %v716 = vmul.f32 %v695, %v702
      %v717 = vmul.f32 %v696, %v702
      %v718 = vmul.f32 %v697, %v702
      %v719 = vld [vmem:[%s3] sm:$0xff]
      %v720 = vld [vmem:[%s3 + $0x8] sm:$0xff]
      %v721 = vld [vmem:[%s3 + $0x10] sm:$0xff]
      %v722 = vld [vmem:[%s3 + $0x18] sm:$0xff]
      %v723 = vld [vmem:[%s3 + $0x20] sm:$0xff]
      %v724 = vld [vmem:[%s3 + $0x28] sm:$0xff]
      %v725 = vld [vmem:[%s3 + $0x30] sm:$0xff]
      %v726 = vld [vmem:[%s3 + $0x38] sm:$0xff]
      %v727 = vld [vmem:[%s3 + $0x40] sm:$0xff]
      %v728 = vld [vmem:[%s3 + $0x48] sm:$0xff]
      %v729 = vld [vmem:[%s3 + $0x50] sm:$0xff]
      %v730 = vld [vmem:[%s3 + $0x58] sm:$0xff]
      %v731 = vld [vmem:[%s3 + $0x60] sm:$0xff]
      %v732 = vld [vmem:[%s3 + $0x68] sm:$0xff]
      %v733 = vld [vmem:[%s3 + $0x70] sm:$0xff]
      %v734 = vld [vmem:[%s3 + $0x78] sm:$0xff]
      %v735 = vmul.f32 %v703, %v719
      %v736 = vmul.f32 %v704, %v720
      %v737 = vmul.f32 %v705, %v721
      %v738 = vmul.f32 %v706, %v722
      %v739 = vmul.f32 %v707, %v723
      %v740 = vmul.f32 %v708, %v724
      %v741 = vmul.f32 %v709, %v725
      %v742 = vmul.f32 %v710, %v726
      %v743 = vmul.f32 %v711, %v727
      %v744 = vmul.f32 %v712, %v728
      %v745 = vmul.f32 %v713, %v729
      %v746 = vmul.f32 %v714, %v730
      %v747 = vmul.f32 %v715, %v731
      %v748 = vmul.f32 %v716, %v732
      %v749 = vmul.f32 %v717, %v733
      %v750 = vmul.f32 %v718, %v734
      %v751 = vld [vmem:[%s4] sm:$0xff]
      %v752 = vld [vmem:[%s4 + $0x8] sm:$0xff]
      %v753 = vld [vmem:[%s4 + $0x10] sm:$0xff]
      %v754 = vld [vmem:[%s4 + $0x18] sm:$0xff]
      %v755 = vld [vmem:[%s4 + $0x20] sm:$0xff]
      %v756 = vld [vmem:[%s4 + $0x28] sm:$0xff]
      %v757 = vld [vmem:[%s4 + $0x30] sm:$0xff]
      %v758 = vld [vmem:[%s4 + $0x38] sm:$0xff]
      %v759 = vld [vmem:[%s4 + $0x40] sm:$0xff]
      %v760 = vld [vmem:[%s4 + $0x48] sm:$0xff]
      %v761 = vld [vmem:[%s4 + $0x50] sm:$0xff]
      %v762 = vld [vmem:[%s4 + $0x58] sm:$0xff]
      %v763 = vld [vmem:[%s4 + $0x60] sm:$0xff]
      %v764 = vld [vmem:[%s4 + $0x68] sm:$0xff]
      %v765 = vld [vmem:[%s4 + $0x70] sm:$0xff]
      %v766 = vld [vmem:[%s4 + $0x78] sm:$0xff]
      %v767 = vadd.f32 %v735, %v751
      %v768 = vadd.f32 %v736, %v752
      %v769 = vadd.f32 %v737, %v753
      %v770 = vadd.f32 %v738, %v754
      %v771 = vadd.f32 %v739, %v755
      %v772 = vadd.f32 %v740, %v756
      %v773 = vadd.f32 %v741, %v757
      %v774 = vadd.f32 %v742, %v758
      %v775 = vadd.f32 %v743, %v759
      %v776 = vadd.f32 %v744, %v760
      %v777 = vadd.f32 %v745, %v761
      %v778 = vadd.f32 %v746, %v762
      %v779 = vadd.f32 %v747, %v763
      %v780 = vadd.f32 %v748, %v764
      %v781 = vadd.f32 %v749, %v765
      %v782 = vadd.f32 %v750, %v766
      %vm783 = vcmp.ge.f32.partialorder %v767, 0.0
      %vm784 = vcmp.ge.f32.partialorder %v768, 0.0
      %vm785 = vcmp.ge.f32.partialorder %v769, 0.0
      %vm786 = vcmp.ge.f32.partialorder %v770, 0.0
      %vm787 = vcmp.ge.f32.partialorder %v771, 0.0
      %vm788 = vcmp.ge.f32.partialorder %v772, 0.0
      %vm789 = vcmp.ge.f32.partialorder %v773, 0.0
      %vm790 = vcmp.ge.f32.partialorder %v774, 0.0
      %vm791 = vcmp.ge.f32.partialorder %v775, 0.0
      %vm792 = vcmp.ge.f32.partialorder %v776, 0.0
      %vm793 = vcmp.ge.f32.partialorder %v777, 0.0
      %vm794 = vcmp.ge.f32.partialorder %v778, 0.0
      %vm795 = vcmp.ge.f32.partialorder %v779, 0.0
      %vm796 = vcmp.ge.f32.partialorder %v780, 0.0
      %vm797 = vcmp.ge.f32.partialorder %v781, 0.0
      %vm798 = vcmp.ge.f32.partialorder %v782, 0.0
      %v799 = vmul.f32 %v767, 0.2
      %v800 = vmul.f32 %v768, 0.2
      %v801 = vmul.f32 %v769, 0.2
      %v802 = vmul.f32 %v770, 0.2
      %v803 = vmul.f32 %v771, 0.2
      %v804 = vmul.f32 %v772, 0.2
      %v805 = vmul.f32 %v773, 0.2
      %v806 = vmul.f32 %v774, 0.2
      %v807 = vmul.f32 %v775, 0.2
      %v808 = vmul.f32 %v776, 0.2
      %v809 = vmul.f32 %v777, 0.2
      %v810 = vmul.f32 %v778, 0.2
      %v811 = vmul.f32 %v779, 0.2
      %v812 = vmul.f32 %v780, 0.2
      %v813 = vmul.f32 %v781, 0.2
      %v814 = vmul.f32 %v782, 0.2
      %v815 = vsel %vm783, %v767, %v799
      %v816 = vsel %vm784, %v768, %v800
      %v817 = vsel %vm785, %v769, %v801
      %v818 = vsel %vm786, %v770, %v802
      %v819 = vsel %vm787, %v771, %v803
      %v820 = vsel %vm788, %v772, %v804
      %v821 = vsel %vm789, %v773, %v805
      %v822 = vsel %vm790, %v774, %v806
      %v823 = vsel %vm791, %v775, %v807
      %v824 = vsel %vm792, %v776, %v808
      %v825 = vsel %vm793, %v777, %v809
      %v826 = vsel %vm794, %v778, %v810
      %v827 = vsel %vm795, %v779, %v811
      %v828 = vsel %vm796, %v780, %v812
      %v829 = vsel %vm797, %v781, %v813
      %v830 = vsel %vm798, %v782, %v814
      %831 = vst [vmem:[%s224] sm:$0xff] %v815
      %832 = vst [vmem:[%s224 + $0x8] sm:$0xff] %v816
      %833 = vst [vmem:[%s224 + $0x10] sm:$0xff] %v817
      %834 = vst [vmem:[%s224 + $0x18] sm:$0xff] %v818
      %835 = vst [vmem:[%s224 + $0x20] sm:$0xff] %v819
      %836 = vst [vmem:[%s224 + $0x28] sm:$0xff] %v820
      %837 = vst [vmem:[%s224 + $0x30] sm:$0xff] %v821
      %838 = vst [vmem:[%s224 + $0x38] sm:$0xff] %v822
      %839 = vst [vmem:[%s224 + $0x40] sm:$0xff] %v823
      %840 = vst [vmem:[%s224 + $0x48] sm:$0xff] %v824
      %841 = vst [vmem:[%s224 + $0x50] sm:$0xff] %v825
      %842 = vst [vmem:[%s224 + $0x58] sm:$0xff] %v826
      %843 = vst [vmem:[%s224 + $0x60] sm:$0xff] %v827
      %844 = vst [vmem:[%s224 + $0x68] sm:$0xff] %v828
      %845 = vst [vmem:[%s224 + $0x70] sm:$0xff] %v829
      %846 = vst [vmem:[%s224 + $0x78] sm:$0xff] %v830
      %p847 = scmp.lt.s32.totalorder %s16, 1
      %s848 = scalar_select %p847, %s16, 1
      %s849 = smul.addr %s848, 16
      %s850 = smul.addr %s849, 8
      %s851 = scalar_lea.vmem %s5, %s850
      // Predicated region
      $region41: #{discriminator_forward.4} parent=39 // pred_check
        %p852 = pneg %p144
      $region42: #{discriminator_forward.4} parent=39 // pred_check_branch
        %854 = sbr.rel (%p852) target = $region44
      $region43: #{discriminator_forward.4} parent=39 // pred_region
        _
      $region44: #{discriminator_forward.4} parent=39 // pred_fallthru
        _
    $region40: #{discriminator_forward.4} parent=5 // pred_fallthru
      _
    %p855 = scmp.le.s32.totalorder 2, %s11
    // Predicated region
    $region45: #{discriminator_forward.4} parent=5 // pred_check
      %p856 = pneg %p855
    $region46: #{discriminator_forward.4} parent=5 // pred_check_branch
      %858 = sbr.rel (%p856) target = $region48
    $region47: #{discriminator_forward.4} parent=5 // pred_region
      %s859 = ssub.s32 %s11, 2
      // Predicated region
      $region49: #{discriminator_forward.4} parent=47 // pred_check
        %p860 = pneg %p150
      $region50: #{discriminator_forward.4} parent=47 // pred_check_branch
        %862 = sbr.rel (%p860) target = $region52
      $region51: #{discriminator_forward.4} parent=47 // pred_region
        %p863 = scmp.lt.s32.totalorder %s17, 1
        %s864 = scalar_select %p863, %s17, 1
        %s865 = smul.addr %s864, 16
        %s866 = smul.addr %s865, 8
        %s867 = scalar_lea.vmem %s5, %s866
      $region52: #{discriminator_forward.4} parent=47 // pred_fallthru
        _
    $region48: #{discriminator_forward.4} parent=5 // pred_fallthru
      _
  $region6: #{discriminator_forward.4} parent=0 // loop_footer
    %s15 = sadd.s32 1, %s11
  $region7: #{discriminator_forward.4} parent=0 // loop_footer_branch
    %10 = sbr.rel target = $region3
  $region8: #{discriminator_forward.4} parent=0 // loop_exit
    _

// kernel: discriminator_forward.5
$region0: #{discriminator_forward.5}
  #allocation0 [shape = 'u32[]', space=smem, size = 0x4, offset = 0x4, fixed_abs, tag = 'smem constant byte address 0x4 - core index']
  #allocation1 [shape = 'u32[144,128]{1,0:T(1,128)}', space=vmem, size = 0x12000, scoped, tag = 'internal scratch']
  %s0 = inlined_call_operand.vmem [shape: bf16[2,256,256], index: 0, kind: input, shape index: {}]
  %s1 = inlined_call_operand.vmem [shape: bf16[32,256], index: 1, kind: input, shape index: {}]
  %s2 = inlined_call_operand.vmem [shape: f32[32,1], index: 2, kind: input, shape index: {}]
  %s3 = inlined_call_operand.vmem [shape: f32[32,256], index: 3, kind: input, shape index: {}]
  %s4 = inlined_call_operand.vmem [shape: f32[32,256], index: 4, kind: input, shape index: {}]
  %s5 = inlined_call_operand.vmem [shape: f32[2,32,256], index: 5, kind: output, shape index: {}]
  %s6 = sld [smem:[#allocation0]]
  $region53: #{discriminator_forward.5} parent=0
    _
  %s8 = ssub.s32 1, %s6
  %s9 = scalar_select 0, %s8, %s6
  loop: start=0, step=1, limit=4
  $region2: #{discriminator_forward.5} parent=0 // loop_pre_header
    _
  $region3: #{discriminator_forward.5} parent=0 // loop_header
    %s11 = sphi 0, %s15
    %p12 = scmp.ge.s32.totalorder %s11, 4
    %s21 = sphi 0, %s23
    %s24 = sphi 0, %s21
    %s25 = sphi 0, %s24
    %s41 = sphi 0, %s25
    %s45 = sphi 0, %s45
    %s47 = sphi 0, %s45
    %s48 = sphi 0, %s47
    %s62 = sphi 0, %s48
    %s66 = sphi 0, %s66
    %s68 = sphi 0, %s66
    %s69 = sphi 0, %s68
    %s83 = sphi 0, %s69
    %s87 = sphi 0, %s87
    %s89 = sphi 0, %s87
    %s90 = sphi 0, %s89
    %s104 = sphi 0, %s90
    %s108 = sphi 0, %s108
    %s110 = sphi 0, %s108
    %s111 = sphi 0, %s110
    %s125 = sphi 0, %s111
    %s131 = sphi 0, %s133
    %s134 = sphi 0, %s131
    %s135 = sphi 0, %s134
    %s151 = sphi 0, %s135
  $region4: #{discriminator_forward.5} parent=0 // loop_header_branch
    %14 = sbr.rel (%p12) target = $region8
  $region5: #{discriminator_forward.5} parent=0 // loop_body
    %s16 = ssub.s32 %s11, 1
    %s17 = ssub.s32 %s11, 2
    %s18 = sadd.s32 %s11, 1
    %s19 = ssub.s32 %s11, %s18
    %p20 = scmp.eq.s32.totalorder %s19, 0
    %s22 = sadd.s32 %s21, 1
    %s23 = scalar_select %p20, %s21, %s22
    %p26 = pneg %p20
    %p27 = scmp.eq.s32.totalorder %s11, 1
    %p28 = por %p26, %p27
    %p29 = scmp.ne.s32.totalorder %s21, %s24
    %p30 = scmp.eq.s32.totalorder %s11, 0
    %p31 = por %p29, %p30
    %p32 = scmp.ne.s32.totalorder %s21, %s24
    %p33 = scmp.eq.s32.totalorder %s16, 1
    %p34 = por %p32, %p33
    %p35 = scmp.ne.s32.totalorder %s24, %s25
    %p36 = scmp.eq.s32.totalorder %s16, 0
    %p37 = por %p35, %p36
    %p38 = scmp.ne.s32.totalorder %s24, %s25
    %p39 = scmp.eq.s32.totalorder %s17, 1
    %p40 = por %p38, %p39
    %p42 = scmp.ne.s32.totalorder %s25, %s41
    %p43 = scmp.eq.s32.totalorder %s17, 0
    %p44 = por %p42, %p43
    %s46 = sadd.s32 %s45, 1
    %p49 = scmp.eq.s32.totalorder %s11, 1
    %p50 = scmp.ne.s32.totalorder %s45, %s47
    %p51 = scmp.eq.s32.totalorder %s11, 0
    %p52 = por %p50, %p51
    %p53 = scmp.ne.s32.totalorder %s45, %s47
    %p54 = scmp.eq.s32.totalorder %s16, 1
    %p55 = por %p53, %p54
    %p56 = scmp.ne.s32.totalorder %s47, %s48
    %p57 = scmp.eq.s32.totalorder %s16, 0
    %p58 = por %p56, %p57
    %p59 = scmp.ne.s32.totalorder %s47, %s48
    %p60 = scmp.eq.s32.totalorder %s17, 1
    %p61 = por %p59, %p60
    %p63 = scmp.ne.s32.totalorder %s48, %s62
    %p64 = scmp.eq.s32.totalorder %s17, 0
    %p65 = por %p63, %p64
    %s67 = sadd.s32 %s66, 1
    %p70 = scmp.eq.s32.totalorder %s11, 1
    %p71 = scmp.ne.s32.totalorder %s66, %s68
    %p72 = scmp.eq.s32.totalorder %s11, 0
    %p73 = por %p71, %p72
    %p74 = scmp.ne.s32.totalorder %s66, %s68
    %p75 = scmp.eq.s32.totalorder %s16, 1
    %p76 = por %p74, %p75
    %p77 = scmp.ne.s32.totalorder %s68, %s69
    %p78 = scmp.eq.s32.totalorder %s16, 0
    %p79 = por %p77, %p78
    %p80 = scmp.ne.s32.totalorder %s68, %s69
    %p81 = scmp.eq.s32.totalorder %s17, 1
    %p82 = por %p80, %p81
    %p84 = scmp.ne.s32.totalorder %s69, %s83
    %p85 = scmp.eq.s32.totalorder %s17, 0
    %p86 = por %p84, %p85
    %s88 = sadd.s32 %s87, 1
    %p91 = scmp.eq.s32.totalorder %s11, 1
    %p92 = scmp.ne.s32.totalorder %s87, %s89
    %p93 = scmp.eq.s32.totalorder %s11, 0
    %p94 = por %p92, %p93
    %p95 = scmp.ne.s32.totalorder %s87, %s89
    %p96 = scmp.eq.s32.totalorder %s16, 1
    %p97 = por %p95, %p96
    %p98 = scmp.ne.s32.totalorder %s89, %s90
    %p99 = scmp.eq.s32.totalorder %s16, 0
    %p100 = por %p98, %p99
    %p101 = scmp.ne.s32.totalorder %s89, %s90
    %p102 = scmp.eq.s32.totalorder %s17, 1
    %p103 = por %p101, %p102
    %p105 = scmp.ne.s32.totalorder %s90, %s104
    %p106 = scmp.eq.s32.totalorder %s17, 0
    %p107 = por %p105, %p106
    %s109 = sadd.s32 %s108, 1
    %p112 = scmp.eq.s32.totalorder %s11, 1
    %p113 = scmp.ne.s32.totalorder %s108, %s110
    %p114 = scmp.eq.s32.totalorder %s11, 0
    %p115 = por %p113, %p114
    %p116 = scmp.ne.s32.totalorder %s108, %s110
    %p117 = scmp.eq.s32.totalorder %s16, 1
    %p118 = por %p116, %p117
    %p119 = scmp.ne.s32.totalorder %s110, %s111
    %p120 = scmp.eq.s32.totalorder %s16, 0
    %p121 = por %p119, %p120
    %p122 = scmp.ne.s32.totalorder %s110, %s111
    %p123 = scmp.eq.s32.totalorder %s17, 1
    %p124 = por %p122, %p123
    %p126 = scmp.ne.s32.totalorder %s111, %s125
    %p127 = scmp.eq.s32.totalorder %s17, 0
    %p128 = por %p126, %p127
    %s129 = ssub.s32 %s11, %s18
    %p130 = scmp.eq.s32.totalorder %s129, 0
    %s132 = sadd.s32 %s131, 1
    %s133 = scalar_select %p130, %s131, %s132
    %p136 = pneg %p130
    %p137 = scmp.eq.s32.totalorder %s11, 1
    %p138 = por %p136, %p137
    %p139 = scmp.ne.s32.totalorder %s131, %s134
    %p140 = scmp.eq.s32.totalorder %s11, 0
    %p141 = por %p139, %p140
    %p142 = scmp.ne.s32.totalorder %s131, %s134
    %p143 = scmp.eq.s32.totalorder %s16, 1
    %p144 = por %p142, %p143
    %p145 = scmp.ne.s32.totalorder %s134, %s135
    %p146 = scmp.eq.s32.totalorder %s16, 0
    %p147 = por %p145, %p146
    %p148 = scmp.ne.s32.totalorder %s134, %s135
    %p149 = scmp.eq.s32.totalorder %s17, 1
    %p150 = por %p148, %p149
    %p152 = scmp.ne.s32.totalorder %s135, %s151
    %p153 = scmp.eq.s32.totalorder %s17, 0
    %p154 = por %p152, %p153
    %p155 = scmp.le.s32.totalorder 1, %s11
    %p156 = scmp.lt.s32.totalorder %s11, 3
    %p157 = pnand %p155, %p156
    %p158 = pneg %p157
    // Predicated region
    $region9: #{discriminator_forward.5} parent=5 // pred_check
      _
    $region10: #{discriminator_forward.5} parent=5 // pred_check_branch
      %160 = sbr.rel (%p157) target = $region12
    $region11: #{discriminator_forward.5} parent=5 // pred_region
      %s161 = ssub.s32 %s11, 1
      // Predicated region
      $region13: #{discriminator_forward.5} parent=11 // pred_check
        %p162 = pneg %p58
      $region14: #{discriminator_forward.5} parent=11 // pred_check_branch
        %164 = sbr.rel (%p162) target = $region16
      $region15: #{discriminator_forward.5} parent=11 // pred_region
        _
      $region16: #{discriminator_forward.5} parent=11 // pred_fallthru
        _
      // Predicated region
      $region17: #{discriminator_forward.5} parent=11 // pred_check
        %p165 = pneg %p79
      $region18: #{discriminator_forward.5} parent=11 // pred_check_branch
        %167 = sbr.rel (%p165) target = $region20
      $region19: #{discriminator_forward.5} parent=11 // pred_region
        _
      $region20: #{discriminator_forward.5} parent=11 // pred_fallthru
        _
      // Predicated region
      $region21: #{discriminator_forward.5} parent=11 // pred_check
        %p168 = pneg %p100
      $region22: #{discriminator_forward.5} parent=11 // pred_check_branch
        %170 = sbr.rel (%p168) target = $region24
      $region23: #{discriminator_forward.5} parent=11 // pred_region
        _
      $region24: #{discriminator_forward.5} parent=11 // pred_fallthru
        _
      // Predicated region
      $region25: #{discriminator_forward.5} parent=11 // pred_check
        %p171 = pneg %p121
      $region26: #{discriminator_forward.5} parent=11 // pred_check_branch
        %173 = sbr.rel (%p171) target = $region28
      $region27: #{discriminator_forward.5} parent=11 // pred_region
        _
      $region28: #{discriminator_forward.5} parent=11 // pred_fallthru
        _
    $region12: #{discriminator_forward.5} parent=5 // pred_fallthru
      _
    %p174 = scmp.lt.s32.totalorder %s11, 2
    // Predicated region
    $region29: #{discriminator_forward.5} parent=5 // pred_check
      %p175 = pneg %p174
    $region30: #{discriminator_forward.5} parent=5 // pred_check_branch
      %177 = sbr.rel (%p175) target = $region32
    $region31: #{discriminator_forward.5} parent=5 // pred_region
      // Predicated region
      $region33: #{discriminator_forward.5} parent=31 // pred_check
        %p178 = pneg %p31
      $region34: #{discriminator_forward.5} parent=31 // pred_check_branch
        %180 = sbr.rel (%p178) target = $region36
      $region35: #{discriminator_forward.5} parent=31 // pred_region
        %p181 = scmp.lt.s32.totalorder %s11, 1
        %s182 = scalar_select %p181, %s11, 1
        %s183 = smul.addr %s182, 64
        %s184 = smul.addr %s183, 4
        %s185 = scalar_lea.vmem %s0, %s184
      $region36: #{discriminator_forward.5} parent=31 // pred_fallthru
        _
    $region32: #{discriminator_forward.5} parent=5 // pred_fallthru
      _
    %p186 = scmp.le.s32.totalorder 1, %s11
    %p187 = scmp.lt.s32.totalorder %s11, 3
    %p188 = pnand %p186, %p187
    %p189 = pneg %p188
    // Predicated region
    $region37: #{discriminator_forward.5} parent=5 // pred_check
      _
    $region38: #{discriminator_forward.5} parent=5 // pred_check_branch
      %191 = sbr.rel (%p188) target = $region40
    $region39: #{discriminator_forward.5} parent=5 // pred_region
      %s192 = ssub.s32 %s11, 1
      %p193 = scmp.lt.s32.totalorder %s16, 1
      %s194 = scalar_select %p193, %s16, 1
      %s195 = smul.addr %s194, 64
      %s196 = smul.addr %s195, 4
      %s197 = scalar_lea.vmem %s0, %s196
      %p198 = pneg %p37
      %p199 = pneg %p34
      %p200 = pneg %p58
      %p201 = pneg %p55
      %p202 = pneg %p79
      %p203 = pneg %p76
      %p204 = pneg %p100
      %p205 = pneg %p97
      %p206 = pneg %p121
      %p207 = pneg %p118
      %p208 = pneg %p147
      %p209 = pneg %p144
      %p210 = scmp.lt.s32.totalorder %s16, 1
      %s211 = scalar_select %p210, %s16, 1
      %s212 = smul.addr %s211, 8
      %s213 = smul.addr %s212, 8
      %s214 = scalar_lea.vmem %s5, %s213
      %p215 = scmp.lt.s32.totalorder %s16, 1
      %s216 = scalar_select %p215, %s16, 1
      %s217 = smul.addr %s216, 64
      %s218 = smul.addr %s217, 4
      %s219 = scalar_lea.vmem %s0, %s218
      %p220 = scmp.lt.s32.totalorder %s16, 1
      %s221 = scalar_select %p220, %s16, 1
      %s222 = smul.addr %s221, 8
      %s223 = smul.addr %s222, 8
      %s224 = scalar_lea.vmem %s5, %s223
      %v225 = vld [vmem:[%s1] sm:$0xff]
      %v226 = vld [vmem:[%s1 + $0x8] sm:$0xff]
      %v227 = vld [vmem:[%s1 + $0x10] sm:$0xff]
      %v228 = vld [vmem:[%s1 + $0x18] sm:$0xff]
      %v229 = vld [vmem:[%s219] sm:$0xff]
      %v230 = vld [vmem:[%s219 + $0x8] sm:$0xff]
      %v231 = vld [vmem:[%s219 + $0x10] sm:$0xff]
      %v232 = vld [vmem:[%s219 + $0x18] sm:$0xff]
      %v233 = vld [vmem:[%s219 + $0x20] sm:$0xff]
      %v234 = vld [vmem:[%s219 + $0x28] sm:$0xff]
      %v235 = vld [vmem:[%s219 + $0x30] sm:$0xff]
      %v236 = vld [vmem:[%s219 + $0x38] sm:$0xff]
      %v237 = vld [vmem:[%s219 + $0x40] sm:$0xff]
      %v238 = vld [vmem:[%s219 + $0x48] sm:$0xff]
      %v239 = vld [vmem:[%s219 + $0x50] sm:$0xff]
      %v240 = vld [vmem:[%s219 + $0x58] sm:$0xff]
      %v241 = vld [vmem:[%s219 + $0x60] sm:$0xff]
      %v242 = vld [vmem:[%s219 + $0x68] sm:$0xff]
      %v243 = vld [vmem:[%s219 + $0x70] sm:$0xff]
      %v244 = vld [vmem:[%s219 + $0x78] sm:$0xff]
      %v245 = vld [vmem:[%s219 + $0x80] sm:$0xff]
      %v246 = vld [vmem:[%s219 + $0x88] sm:$0xff]
      %v247 = vld [vmem:[%s219 + $0x90] sm:$0xff]
      %v248 = vld [vmem:[%s219 + $0x98] sm:$0xff]
      %v249 = vld [vmem:[%s219 + $0xa0] sm:$0xff]
      %v250 = vld [vmem:[%s219 + $0xa8] sm:$0xff]
      %v251 = vld [vmem:[%s219 + $0xb0] sm:$0xff]
      %v252 = vld [vmem:[%s219 + $0xb8] sm:$0xff]
      %v253 = vld [vmem:[%s219 + $0xc0] sm:$0xff]
      %v254 = vld [vmem:[%s219 + $0xc8] sm:$0xff]
      %v255 = vld [vmem:[%s219 + $0xd0] sm:$0xff]
      %v256 = vld [vmem:[%s219 + $0xd8] sm:$0xff]
      %v257 = vld [vmem:[%s219 + $0xe0] sm:$0xff]
      %v258 = vld [vmem:[%s219 + $0xe8] sm:$0xff]
      %v259 = vld [vmem:[%s219 + $0xf0] sm:$0xff]
      %v260 = vld [vmem:[%s219 + $0xf8] sm:$0xff]
      %v261 = vld [vmem:[%s2] sm:$0xff]
      %v262 = vld [vmem:[%s2 + $0x8] sm:$0xff]
      %v263 = vld [vmem:[%s2 + $0x10] sm:$0xff]
      %v264 = vld [vmem:[%s2 + $0x18] sm:$0xff]
      %266 = vset.pattern.permute.xlu0 0
      %267 = vperm.xlu0 %266, %v261
      %v268 = vpop.permute.xlu0 %267
      %271 = vset.pattern.permute.xlu0 0
      %272 = vperm.xlu0 %271, %v262
      %v273 = vpop.permute.xlu0 %272
      %276 = vset.pattern.permute.xlu0 0
      %277 = vperm.xlu0 %276, %v263
      %v278 = vpop.permute.xlu0 %277
      %281 = vset.pattern.permute.xlu0 0
      %282 = vperm.xlu0 %281, %v264
      %v283 = vpop.permute.xlu0 %282
      %v289 = vunpack.c.l.b16 %v225
      %v290 = vunpack.c.h.b16 %v225
      %v291 = vunpack.c.l.b16 %v226
      %v292 = vunpack.c.h.b16 %v226
      %v293 = vunpack.c.l.b16 %v227
      %v294 = vunpack.c.h.b16 %v227
      %v295 = vunpack.c.l.b16 %v228
      %v296 = vunpack.c.h.b16 %v228
      %v297 = vpack.c.b16 %v291, %v289
      %v298 = vpack.c.b16 %v292, %v290
      %v299 = vpack.c.b16 %v295, %v293
      %v300 = vpack.c.b16 %v296, %v294
      %v337 = vunpack.c.l.b16 %v229
      %v338 = vunpack.c.h.b16 %v229
      %v339 = vunpack.c.l.b16 %v230
      %v340 = vunpack.c.h.b16 %v230
      %v341 = vunpack.c.l.b16 %v231
      %v342 = vunpack.c.h.b16 %v231
      %v343 = vunpack.c.l.b16 %v232
      %v344 = vunpack.c.h.b16 %v232
      %v345 = vunpack.c.l.b16 %v233
      %v346 = vunpack.c.h.b16 %v233
      %v347 = vunpack.c.l.b16 %v234
      %v348 = vunpack.c.h.b16 %v234
      %v349 = vunpack.c.l.b16 %v235
      %v350 = vunpack.c.h.b16 %v235
      %v351 = vunpack.c.l.b16 %v236
      %v352 = vunpack.c.h.b16 %v236
      %v353 = vunpack.c.l.b16 %v237
      %v354 = vunpack.c.h.b16 %v237
      %v355 = vunpack.c.l.b16 %v238
      %v356 = vunpack.c.h.b16 %v238
      %v357 = vunpack.c.l.b16 %v239
      %v358 = vunpack.c.h.b16 %v239
      %v359 = vunpack.c.l.b16 %v240
      %v360 = vunpack.c.h.b16 %v240
      %v361 = vunpack.c.l.b16 %v241
      %v362 = vunpack.c.h.b16 %v241
      %v363 = vunpack.c.l.b16 %v242
      %v364 = vunpack.c.h.b16 %v242
      %v365 = vunpack.c.l.b16 %v243
      %v366 = vunpack.c.h.b16 %v243
      %v367 = vunpack.c.l.b16 %v244
      %v368 = vunpack.c.h.b16 %v244
      %v369 = vunpack.c.l.b16 %v245
      %v370 = vunpack.c.h.b16 %v245
      %v371 = vunpack.c.l.b16 %v246
      %v372 = vunpack.c.h.b16 %v246
      %v373 = vunpack.c.l.b16 %v247
      %v374 = vunpack.c.h.b16 %v247
      %v375 = vunpack.c.l.b16 %v248
      %v376 = vunpack.c.h.b16 %v248
      %v377 = vunpack.c.l.b16 %v249
      %v378 = vunpack.c.h.b16 %v249
      %v379 = vunpack.c.l.b16 %v250
      %v380 = vunpack.c.h.b16 %v250
      %v381 = vunpack.c.l.b16 %v251
      %v382 = vunpack.c.h.b16 %v251
      %v383 = vunpack.c.l.b16 %v252
      %v384 = vunpack.c.h.b16 %v252
      %v385 = vunpack.c.l.b16 %v253
      %v386 = vunpack.c.h.b16 %v253
      %v387 = vunpack.c.l.b16 %v254
      %v388 = vunpack.c.h.b16 %v254
      %v389 = vunpack.c.l.b16 %v255
      %v390 = vunpack.c.h.b16 %v255
      %v391 = vunpack.c.l.b16 %v256
      %v392 = vunpack.c.h.b16 %v256
      %v393 = vunpack.c.l.b16 %v257
      %v394 = vunpack.c.h.b16 %v257
      %v395 = vunpack.c.l.b16 %v258
      %v396 = vunpack.c.h.b16 %v258
      %v397 = vunpack.c.l.b16 %v259
      %v398 = vunpack.c.h.b16 %v259
      %v399 = vunpack.c.l.b16 %v260
      %v400 = vunpack.c.h.b16 %v260
      %v401 = vpack.c.b16 %v339, %v337
      %v402 = vpack.c.b16 %v340, %v338
      %v403 = vpack.c.b16 %v343, %v341
      %v404 = vpack.c.b16 %v344, %v342
      %v405 = vpack.c.b16 %v347, %v345
      %v406 = vpack.c.b16 %v348, %v346
      %v407 = vpack.c.b16 %v351, %v349
      %v408 = vpack.c.b16 %v352, %v350
      %v409 = vpack.c.b16 %v355, %v353
      %v410 = vpack.c.b16 %v356, %v354
      %v411 = vpack.c.b16 %v359, %v357
      %v412 = vpack.c.b16 %v360, %v358
      %v413 = vpack.c.b16 %v363, %v361
      %v414 = vpack.c.b16 %v364, %v362
      %v415 = vpack.c.b16 %v367, %v365
      %v416 = vpack.c.b16 %v368, %v366
      %v417 = vpack.c.b16 %v371, %v369
      %v418 = vpack.c.b16 %v372, %v370
      %v419 = vpack.c.b16 %v375, %v373
      %v420 = vpack.c.b16 %v376, %v374
      %v421 = vpack.c.b16 %v379, %v377
      %v422 = vpack.c.b16 %v380, %v378
      %v423 = vpack.c.b16 %v383, %v381
      %v424 = vpack.c.b16 %v384, %v382
      %v425 = vpack.c.b16 %v387, %v385
      %v426 = vpack.c.b16 %v388, %v386
      %v427 = vpack.c.b16 %v391, %v389
      %v428 = vpack.c.b16 %v392, %v390
      %v429 = vpack.c.b16 %v395, %v393
      %v430 = vpack.c.b16 %v396, %v394
      %v431 = vpack.c.b16 %v399, %v397
      %v432 = vpack.c.b16 %v400, %v398
      %465 = vmatprep.subr.bf16.mxu0 %v402
      %466 = vmatpush1.bf16.msra.mxu0 %v401
      %467 = vmatprep.subr.bf16.mxu0 %v404
      %468 = vmatpush1.bf16.msra.mxu0 %v403
      %469 = vmatprep.subr.bf16.mxu0 %v406
      %470 = vmatpush1.bf16.msra.mxu0 %v405
      %471 = vmatprep.subr.bf16.mxu0 %v408
      %472 = vmatpush1.bf16.msra.mxu0 %v407
      %473 = vmatprep.subr.bf16.mxu0 %v410
      %474 = vmatpush1.bf16.msra.mxu0 %v409
      %475 = vmatprep.subr.bf16.mxu0 %v412
      %476 = vmatpush1.bf16.msra.mxu0 %v411
      %477 = vmatprep.subr.bf16.mxu0 %v414
      %478 = vmatpush1.bf16.msra.mxu0 %v413
      %479 = vmatprep.subr.bf16.mxu0 %v416
      %480 = vmatpush1.bf16.msra.mxu0 %v415
      %481 = vmatprep.subr.bf16.mxu0 %v418
      %482 = vmatpush1.bf16.msra.mxu0 %v417
      %483 = vmatprep.subr.bf16.mxu0 %v420
      %484 = vmatpush1.bf16.msra.mxu0 %v419
      %485 = vmatprep.subr.bf16.mxu0 %v422
      %486 = vmatpush1.bf16.msra.mxu0 %v421
      %487 = vmatprep.subr.bf16.mxu0 %v424
      %488 = vmatpush1.bf16.msra.mxu0 %v423
      %489 = vmatprep.subr.bf16.mxu0 %v426
      %490 = vmatpush1.bf16.msra.mxu0 %v425
      %491 = vmatprep.subr.bf16.mxu0 %v428
      %492 = vmatpush1.bf16.msra.mxu0 %v427
      %493 = vmatprep.subr.bf16.mxu0 %v430
      %494 = vmatpush1.bf16.msra.mxu0 %v429
      %495 = vmatprep.subr.bf16.mxu0 %v432
      %496 = vmatpush1.bf16.msra.mxu0 %v431
      %497 = vmatprep.mubr.bf16.mxu0 %v298
      %498 = vmatmul.mubr.bf16.gmra.mrb[0].mxu0 %v297
      %v499 = vpop.f32.mrb[0].mxu0
      %v500 = vadd.f32 %v268, %v499
      %v501 = vpop.f32.mrb[0].mxu0
      %v502 = vadd.f32 %v268, %v501
      %v503 = vpop.f32.mrb[0].mxu0
      %v504 = vadd.f32 %v273, %v503
      %v505 = vpop.f32.mrb[0].mxu0
      %v506 = vadd.f32 %v273, %v505
      %507 = vmatprep.mubr.bf16.mxu0 %v300
      %508 = vmatmul.mubr.bf16.gmra.mrb[0].mxu0 %v299
      %v509 = vpop.f32.mrb[0].mxu0
      %v510 = vadd.f32 %v278, %v509
      %v511 = vpop.f32.mrb[0].mxu0
      %v512 = vadd.f32 %v278, %v511
      %v513 = vpop.f32.mrb[0].mxu0
      %v514 = vadd.f32 %v283, %v513
      %v515 = vpop.f32.mrb[0].mxu0
      %v516 = vadd.f32 %v283, %v515
      %517 = vdwg.mxu0
      %v518 = vadd.f32 %v500, %v502
      %v519 = vadd.f32 %v518, %v504
      %v520 = vadd.f32 %v519, %v506
      %v521 = vadd.f32 %v520, %v510
      %v522 = vadd.f32 %v521, %v512
      %v523 = vadd.f32 %v522, %v514
      %v524 = vadd.f32 %v523, %v516
      %525 = vadd.xlane.f32.xlu0 %v524
      %v526 = vpop.xlane.xlu0 %525
      %v527 = vrot.slane %v526, 4
      %v528 = vadd.f32 %v526, %v527
      %v529 = vrot.slane %v528, 2
      %v530 = vadd.f32 %v528, %v529
      %v531 = vrot.slane %v530, 1
      %v532 = vadd.f32 %v530, %v531
      %s533 = vtos %v532
      %s534 = smul.f32 %s533, 0.00012207031
      %v535 = vmul.f32 %v500, %v500
      %v536 = vmul.f32 %v502, %v502
      %v537 = vmul.f32 %v504, %v504
      %v538 = vmul.f32 %v506, %v506
      %v539 = vmul.f32 %v510, %v510
      %v540 = vmul.f32 %v512, %v512
      %v541 = vmul.f32 %v514, %v514
      %v542 = vmul.f32 %v516, %v516
      %v543 = vadd.f32 %v535, %v536
      %v544 = vadd.f32 %v543, %v537
      %v545 = vadd.f32 %v544, %v538
      %v546 = vadd.f32 %v545, %v539
      %v547 = vadd.f32 %v546, %v540
      %v548 = vadd.f32 %v547, %v541
      %v549 = vadd.f32 %v548, %v542
      %550 = vadd.xlane.f32.xlu0 %v549
      %v551 = vpop.xlane.xlu0 %550
      %v552 = vrot.slane %v551, 4
      %v553 = vadd.f32 %v551, %v552
      %v554 = vrot.slane %v553, 2
      %v555 = vadd.f32 %v553, %v554
      %v556 = vrot.slane %v555, 1
      %v557 = vadd.f32 %v555, %v556
      %s558 = vtos %v557
      %s559 = smul.f32 %s558, 0.00012207031
      %s560 = smul.f32 %s534, %s534
      %s561 = ssub.f32 %s559, %s560
      %v562 = vstv %s534
      %v563 = vsub.f32 %v500, %v562
      %v564 = vsub.f32 %v502, %v562
      %v565 = vsub.f32 %v504, %v562
      %v566 = vsub.f32 %v506, %v562
      %v567 = vsub.f32 %v510, %v562
      %v568 = vsub.f32 %v512, %v562
      %v569 = vsub.f32 %v514, %v562
      %v570 = vsub.f32 %v516, %v562
      %s571 = sadd.f32 %s561, 1e-05
      %v572 = vstv %s571
      %v573 = vrsqrt.pop %v572
      %s574 = vtos %v573
      %v575 = vstv %s574
      %v576 = vmul.f32 %v563, %v575
      %v577 = vmul.f32 %v564, %v575
      %v578 = vmul.f32 %v565, %v575
      %v579 = vmul.f32 %v566, %v575
      %v580 = vmul.f32 %v567, %v575
      %v581 = vmul.f32 %v568, %v575
      %v582 = vmul.f32 %v569, %v575
      %v583 = vmul.f32 %v570, %v575
      %v584 = vld [vmem:[%s3] sm:$0xff]
      %v585 = vld [vmem:[%s3 + $0x8] sm:$0xff]
      %v586 = vld [vmem:[%s3 + $0x10] sm:$0xff]
      %v587 = vld [vmem:[%s3 + $0x18] sm:$0xff]
      %v588 = vld [vmem:[%s3 + $0x20] sm:$0xff]
      %v589 = vld [vmem:[%s3 + $0x28] sm:$0xff]
      %v590 = vld [vmem:[%s3 + $0x30] sm:$0xff]
      %v591 = vld [vmem:[%s3 + $0x38] sm:$0xff]
      %v592 = vmul.f32 %v576, %v584
      %v593 = vmul.f32 %v577, %v585
      %v594 = vmul.f32 %v578, %v586
      %v595 = vmul.f32 %v579, %v587
      %v596 = vmul.f32 %v580, %v588
      %v597 = vmul.f32 %v581, %v589
      %v598 = vmul.f32 %v582, %v590
      %v599 = vmul.f32 %v583, %v591
      %v600 = vld [vmem:[%s4] sm:$0xff]
      %v601 = vld [vmem:[%s4 + $0x8] sm:$0xff]
      %v602 = vld [vmem:[%s4 + $0x10] sm:$0xff]
      %v603 = vld [vmem:[%s4 + $0x18] sm:$0xff]
      %v604 = vld [vmem:[%s4 + $0x20] sm:$0xff]
      %v605 = vld [vmem:[%s4 + $0x28] sm:$0xff]
      %v606 = vld [vmem:[%s4 + $0x30] sm:$0xff]
      %v607 = vld [vmem:[%s4 + $0x38] sm:$0xff]
      %v608 = vadd.f32 %v592, %v600
      %v609 = vadd.f32 %v593, %v601
      %v610 = vadd.f32 %v594, %v602
      %v611 = vadd.f32 %v595, %v603
      %v612 = vadd.f32 %v596, %v604
      %v613 = vadd.f32 %v597, %v605
      %v614 = vadd.f32 %v598, %v606
      %v615 = vadd.f32 %v599, %v607
      %vm616 = vcmp.ge.f32.partialorder %v608, 0.0
      %vm617 = vcmp.ge.f32.partialorder %v609, 0.0
      %vm618 = vcmp.ge.f32.partialorder %v610, 0.0
      %vm619 = vcmp.ge.f32.partialorder %v611, 0.0
      %vm620 = vcmp.ge.f32.partialorder %v612, 0.0
      %vm621 = vcmp.ge.f32.partialorder %v613, 0.0
      %vm622 = vcmp.ge.f32.partialorder %v614, 0.0
      %vm623 = vcmp.ge.f32.partialorder %v615, 0.0
      %v624 = vmul.f32 %v608, 0.2
      %v625 = vmul.f32 %v609, 0.2
      %v626 = vmul.f32 %v610, 0.2
      %v627 = vmul.f32 %v611, 0.2
      %v628 = vmul.f32 %v612, 0.2
      %v629 = vmul.f32 %v613, 0.2
      %v630 = vmul.f32 %v614, 0.2
      %v631 = vmul.f32 %v615, 0.2
      %v632 = vsel %vm616, %v608, %v624
      %v633 = vsel %vm617, %v609, %v625
      %v634 = vsel %vm618, %v610, %v626
      %v635 = vsel %vm619, %v611, %v627
      %v636 = vsel %vm620, %v612, %v628
      %v637 = vsel %vm621, %v613, %v629
      %v638 = vsel %vm622, %v614, %v630
      %v639 = vsel %vm623, %v615, %v631
      %640 = vst [vmem:[%s224] sm:$0xff] %v632
      %641 = vst [vmem:[%s224 + $0x8] sm:$0xff] %v633
      %642 = vst [vmem:[%s224 + $0x10] sm:$0xff] %v634
      %643 = vst [vmem:[%s224 + $0x18] sm:$0xff] %v635
      %644 = vst [vmem:[%s224 + $0x20] sm:$0xff] %v636
      %645 = vst [vmem:[%s224 + $0x28] sm:$0xff] %v637
      %646 = vst [vmem:[%s224 + $0x30] sm:$0xff] %v638
      %647 = vst [vmem:[%s224 + $0x38] sm:$0xff] %v639
      %p648 = scmp.lt.s32.totalorder %s16, 1
      %s649 = scalar_select %p648, %s16, 1
      %s650 = smul.addr %s649, 8
      %s651 = smul.addr %s650, 8
      %s652 = scalar_lea.vmem %s5, %s651
      // Predicated region
      $region41: #{discriminator_forward.5} parent=39 // pred_check
        %p653 = pneg %p144
      $region42: #{discriminator_forward.5} parent=39 // pred_check_branch
        %655 = sbr.rel (%p653) target = $region44
      $region43: #{discriminator_forward.5} parent=39 // pred_region
        _
      $region44: #{discriminator_forward.5} parent=39 // pred_fallthru
        _
    $region40: #{discriminator_forward.5} parent=5 // pred_fallthru
      _
    %p656 = scmp.le.s32.totalorder 2, %s11
    // Predicated region
    $region45: #{discriminator_forward.5} parent=5 // pred_check
      %p657 = pneg %p656
    $region46: #{discriminator_forward.5} parent=5 // pred_check_branch
      %659 = sbr.rel (%p657) target = $region48
    $region47: #{discriminator_forward.5} parent=5 // pred_region
      %s660 = ssub.s32 %s11, 2
      // Predicated region
      $region49: #{discriminator_forward.5} parent=47 // pred_check
        %p661 = pneg %p150
      $region50: #{discriminator_forward.5} parent=47 // pred_check_branch
        %663 = sbr.rel (%p661) target = $region52
      $region51: #{discriminator_forward.5} parent=47 // pred_region
        %p664 = scmp.lt.s32.totalorder %s17, 1
        %s665 = scalar_select %p664, %s17, 1
        %s666 = smul.addr %s665, 8
        %s667 = smul.addr %s666, 8
        %s668 = scalar_lea.vmem %s5, %s667
      $region52: #{discriminator_forward.5} parent=47 // pred_fallthru
        _
    $region48: #{discriminator_forward.5} parent=5 // pred_fallthru
      _
  $region6: #{discriminator_forward.5} parent=0 // loop_footer
    %s15 = sadd.s32 1, %s11
  $region7: #{discriminator_forward.5} parent=0 // loop_footer_branch
    %10 = sbr.rel target = $region3
  $region8: #{discriminator_forward.5} parent=0 // loop_exit
    _

// kernel: discriminator_forward.6
$region0: #{discriminator_forward.6}
  #allocation0 [shape = 'u32[]', space=smem, size = 0x4, offset = 0x4, fixed_abs, tag = 'smem constant byte address 0x4 - core index']
  #allocation1 [shape = 'u32[144,128]{1,0:T(1,128)}', space=vmem, size = 0x12000, scoped, tag = 'internal scratch']
  %s0 = inlined_call_operand.vmem [shape: bf16[2,512,64], index: 0, kind: input, shape index: {}]
  %s1 = inlined_call_operand.vmem [shape: bf16[64,512], index: 1, kind: input, shape index: {}]
  %s2 = inlined_call_operand.vmem [shape: f32[64,1], index: 2, kind: input, shape index: {}]
  %s3 = inlined_call_operand.vmem [shape: f32[64,64], index: 3, kind: input, shape index: {}]
  %s4 = inlined_call_operand.vmem [shape: f32[64,64], index: 4, kind: input, shape index: {}]
  %s5 = inlined_call_operand.vmem [shape: f32[2,64,64], index: 5, kind: output, shape index: {}]
  %s6 = sld [smem:[#allocation0]]
  $region53: #{discriminator_forward.6} parent=0
    _
  %s8 = ssub.s32 1, %s6
  %s9 = scalar_select 0, %s8, %s6
  loop: start=0, step=1, limit=4
  $region2: #{discriminator_forward.6} parent=0 // loop_pre_header
    _
  $region3: #{discriminator_forward.6} parent=0 // loop_header
    %s11 = sphi 0, %s15
    %p12 = scmp.ge.s32.totalorder %s11, 4
    %s21 = sphi 0, %s23
    %s24 = sphi 0, %s21
    %s25 = sphi 0, %s24
    %s41 = sphi 0, %s25
    %s45 = sphi 0, %s45
    %s47 = sphi 0, %s45
    %s48 = sphi 0, %s47
    %s62 = sphi 0, %s48
    %s66 = sphi 0, %s66
    %s68 = sphi 0, %s66
    %s69 = sphi 0, %s68
    %s83 = sphi 0, %s69
    %s87 = sphi 0, %s87
    %s89 = sphi 0, %s87
    %s90 = sphi 0, %s89
    %s104 = sphi 0, %s90
    %s108 = sphi 0, %s108
    %s110 = sphi 0, %s108
    %s111 = sphi 0, %s110
    %s125 = sphi 0, %s111
    %s131 = sphi 0, %s133
    %s134 = sphi 0, %s131
    %s135 = sphi 0, %s134
    %s151 = sphi 0, %s135
  $region4: #{discriminator_forward.6} parent=0 // loop_header_branch
    %14 = sbr.rel (%p12) target = $region8
  $region5: #{discriminator_forward.6} parent=0 // loop_body
    %s16 = ssub.s32 %s11, 1
    %s17 = ssub.s32 %s11, 2
    %s18 = sadd.s32 %s11, 1
    %s19 = ssub.s32 %s11, %s18
    %p20 = scmp.eq.s32.totalorder %s19, 0
    %s22 = sadd.s32 %s21, 1
    %s23 = scalar_select %p20, %s21, %s22
    %p26 = pneg %p20
    %p27 = scmp.eq.s32.totalorder %s11, 1
    %p28 = por %p26, %p27
    %p29 = scmp.ne.s32.totalorder %s21, %s24
    %p30 = scmp.eq.s32.totalorder %s11, 0
    %p31 = por %p29, %p30
    %p32 = scmp.ne.s32.totalorder %s21, %s24
    %p33 = scmp.eq.s32.totalorder %s16, 1
    %p34 = por %p32, %p33
    %p35 = scmp.ne.s32.totalorder %s24, %s25
    %p36 = scmp.eq.s32.totalorder %s16, 0
    %p37 = por %p35, %p36
    %p38 = scmp.ne.s32.totalorder %s24, %s25
    %p39 = scmp.eq.s32.totalorder %s17, 1
    %p40 = por %p38, %p39
    %p42 = scmp.ne.s32.totalorder %s25, %s41
    %p43 = scmp.eq.s32.totalorder %s17, 0
    %p44 = por %p42, %p43
    %s46 = sadd.s32 %s45, 1
    %p49 = scmp.eq.s32.totalorder %s11, 1
    %p50 = scmp.ne.s32.totalorder %s45, %s47
    %p51 = scmp.eq.s32.totalorder %s11, 0
    %p52 = por %p50, %p51
    %p53 = scmp.ne.s32.totalorder %s45, %s47
    %p54 = scmp.eq.s32.totalorder %s16, 1
    %p55 = por %p53, %p54
    %p56 = scmp.ne.s32.totalorder %s47, %s48
    %p57 = scmp.eq.s32.totalorder %s16, 0
    %p58 = por %p56, %p57
    %p59 = scmp.ne.s32.totalorder %s47, %s48
    %p60 = scmp.eq.s32.totalorder %s17, 1
    %p61 = por %p59, %p60
    %p63 = scmp.ne.s32.totalorder %s48, %s62
    %p64 = scmp.eq.s32.totalorder %s17, 0
    %p65 = por %p63, %p64
    %s67 = sadd.s32 %s66, 1
    %p70 = scmp.eq.s32.totalorder %s11, 1
    %p71 = scmp.ne.s32.totalorder %s66, %s68
    %p72 = scmp.eq.s32.totalorder %s11, 0
    %p73 = por %p71, %p72
    %p74 = scmp.ne.s32.totalorder %s66, %s68
    %p75 = scmp.eq.s32.totalorder %s16, 1
    %p76 = por %p74, %p75
    %p77 = scmp.ne.s32.totalorder %s68, %s69
    %p78 = scmp.eq.s32.totalorder %s16, 0
    %p79 = por %p77, %p78
    %p80 = scmp.ne.s32.totalorder %s68, %s69
    %p81 = scmp.eq.s32.totalorder %s17, 1
    %p82 = por %p80, %p81
    %p84 = scmp.ne.s32.totalorder %s69, %s83
    %p85 = scmp.eq.s32.totalorder %s17, 0
    %p86 = por %p84, %p85
    %s88 = sadd.s32 %s87, 1
    %p91 = scmp.eq.s32.totalorder %s11, 1
    %p92 = scmp.ne.s32.totalorder %s87, %s89
    %p93 = scmp.eq.s32.totalorder %s11, 0
    %p94 = por %p92, %p93
    %p95 = scmp.ne.s32.totalorder %s87, %s89
    %p96 = scmp.eq.s32.totalorder %s16, 1
    %p97 = por %p95, %p96
    %p98 = scmp.ne.s32.totalorder %s89, %s90
    %p99 = scmp.eq.s32.totalorder %s16, 0
    %p100 = por %p98, %p99
    %p101 = scmp.ne.s32.totalorder %s89, %s90
    %p102 = scmp.eq.s32.totalorder %s17, 1
    %p103 = por %p101, %p102
    %p105 = scmp.ne.s32.totalorder %s90, %s104
    %p106 = scmp.eq.s32.totalorder %s17, 0
    %p107 = por %p105, %p106
    %s109 = sadd.s32 %s108, 1
    %p112 = scmp.eq.s32.totalorder %s11, 1
    %p113 = scmp.ne.s32.totalorder %s108, %s110
    %p114 = scmp.eq.s32.totalorder %s11, 0
    %p115 = por %p113, %p114
    %p116 = scmp.ne.s32.totalorder %s108, %s110
    %p117 = scmp.eq.s32.totalorder %s16, 1
    %p118 = por %p116, %p117
    %p119 = scmp.ne.s32.totalorder %s110, %s111
    %p120 = scmp.eq.s32.totalorder %s16, 0
    %p121 = por %p119, %p120
    %p122 = scmp.ne.s32.totalorder %s110, %s111
    %p123 = scmp.eq.s32.totalorder %s17, 1
    %p124 = por %p122, %p123
    %p126 = scmp.ne.s32.totalorder %s111, %s125
    %p127 = scmp.eq.s32.totalorder %s17, 0
    %p128 = por %p126, %p127
    %s129 = ssub.s32 %s11, %s18
    %p130 = scmp.eq.s32.totalorder %s129, 0
    %s132 = sadd.s32 %s131, 1
    %s133 = scalar_select %p130, %s131, %s132
    %p136 = pneg %p130
    %p137 = scmp.eq.s32.totalorder %s11, 1
    %p138 = por %p136, %p137
    %p139 = scmp.ne.s32.totalorder %s131, %s134
    %p140 = scmp.eq.s32.totalorder %s11, 0
    %p141 = por %p139, %p140
    %p142 = scmp.ne.s32.totalorder %s131, %s134
    %p143 = scmp.eq.s32.totalorder %s16, 1
    %p144 = por %p142, %p143
    %p145 = scmp.ne.s32.totalorder %s134, %s135
    %p146 = scmp.eq.s32.totalorder %s16, 0
    %p147 = por %p145, %p146
    %p148 = scmp.ne.s32.totalorder %s134, %s135
    %p149 = scmp.eq.s32.totalorder %s17, 1
    %p150 = por %p148, %p149
    %p152 = scmp.ne.s32.totalorder %s135, %s151
    %p153 = scmp.eq.s32.totalorder %s17, 0
    %p154 = por %p152, %p153
    %p155 = scmp.le.s32.totalorder 1, %s11
    %p156 = scmp.lt.s32.totalorder %s11, 3
    %p157 = pnand %p155, %p156
    %p158 = pneg %p157
    // Predicated region
    $region9: #{discriminator_forward.6} parent=5 // pred_check
      _
    $region10: #{discriminator_forward.6} parent=5 // pred_check_branch
      %160 = sbr.rel (%p157) target = $region12
    $region11: #{discriminator_forward.6} parent=5 // pred_region
      %s161 = ssub.s32 %s11, 1
      // Predicated region
      $region13: #{discriminator_forward.6} parent=11 // pred_check
        %p162 = pneg %p58
      $region14: #{discriminator_forward.6} parent=11 // pred_check_branch
        %164 = sbr.rel (%p162) target = $region16
      $region15: #{discriminator_forward.6} parent=11 // pred_region
        _
      $region16: #{discriminator_forward.6} parent=11 // pred_fallthru
        _
      // Predicated region
      $region17: #{discriminator_forward.6} parent=11 // pred_check
        %p165 = pneg %p79
      $region18: #{discriminator_forward.6} parent=11 // pred_check_branch
        %167 = sbr.rel (%p165) target = $region20
      $region19: #{discriminator_forward.6} parent=11 // pred_region
        _
      $region20: #{discriminator_forward.6} parent=11 // pred_fallthru
        _
      // Predicated region
      $region21: #{discriminator_forward.6} parent=11 // pred_check
        %p168 = pneg %p100
      $region22: #{discriminator_forward.6} parent=11 // pred_check_branch
        %170 = sbr.rel (%p168) target = $region24
      $region23: #{discriminator_forward.6} parent=11 // pred_region
        _
      $region24: #{discriminator_forward.6} parent=11 // pred_fallthru
        _
      // Predicated region
      $region25: #{discriminator_forward.6} parent=11 // pred_check
        %p171 = pneg %p121
      $region26: #{discriminator_forward.6} parent=11 // pred_check_branch
        %173 = sbr.rel (%p171) target = $region28
      $region27: #{discriminator_forward.6} parent=11 // pred_region
        _
      $region28: #{discriminator_forward.6} parent=11 // pred_fallthru
        _
    $region12: #{discriminator_forward.6} parent=5 // pred_fallthru
      _
    %p174 = scmp.lt.s32.totalorder %s11, 2
    // Predicated region
    $region29: #{discriminator_forward.6} parent=5 // pred_check
      %p175 = pneg %p174
    $region30: #{discriminator_forward.6} parent=5 // pred_check_branch
      %177 = sbr.rel (%p175) target = $region32
    $region31: #{discriminator_forward.6} parent=5 // pred_region
      // Predicated region
      $region33: #{discriminator_forward.6} parent=31 // pred_check
        %p178 = pneg %p31
      $region34: #{discriminator_forward.6} parent=31 // pred_check_branch
        %180 = sbr.rel (%p178) target = $region36
      $region35: #{discriminator_forward.6} parent=31 // pred_region
        %p181 = scmp.lt.s32.totalorder %s11, 1
        %s182 = scalar_select %p181, %s11, 1
        %s183 = smul.addr %s182, 64
        %s184 = smul.addr %s183, 4
        %s185 = scalar_lea.vmem %s0, %s184
      $region36: #{discriminator_forward.6} parent=31 // pred_fallthru
        _
    $region32: #{discriminator_forward.6} parent=5 // pred_fallthru
      _
    %p186 = scmp.le.s32.totalorder 1, %s11
    %p187 = scmp.lt.s32.totalorder %s11, 3
    %p188 = pnand %p186, %p187
    %p189 = pneg %p188
    // Predicated region
    $region37: #{discriminator_forward.6} parent=5 // pred_check
      _
    $region38: #{discriminator_forward.6} parent=5 // pred_check_branch
      %191 = sbr.rel (%p188) target = $region40
    $region39: #{discriminator_forward.6} parent=5 // pred_region
      %s192 = ssub.s32 %s11, 1
      %p193 = scmp.lt.s32.totalorder %s16, 1
      %s194 = scalar_select %p193, %s16, 1
      %s195 = smul.addr %s194, 64
      %s196 = smul.addr %s195, 4
      %s197 = scalar_lea.vmem %s0, %s196
      %p198 = pneg %p37
      %p199 = pneg %p34
      %p200 = pneg %p58
      %p201 = pneg %p55
      %p202 = pneg %p79
      %p203 = pneg %p76
      %p204 = pneg %p100
      %p205 = pneg %p97
      %p206 = pneg %p121
      %p207 = pneg %p118
      %p208 = pneg %p147
      %p209 = pneg %p144
      %p210 = scmp.lt.s32.totalorder %s16, 1
      %s211 = scalar_select %p210, %s16, 1
      %s212 = smul.addr %s211, 8
      %s213 = smul.addr %s212, 8
      %s214 = scalar_lea.vmem %s5, %s213
      %p215 = scmp.lt.s32.totalorder %s16, 1
      %s216 = scalar_select %p215, %s16, 1
      %s217 = smul.addr %s216, 64
      %s218 = smul.addr %s217, 4
      %s219 = scalar_lea.vmem %s0, %s218
      %p220 = scmp.lt.s32.totalorder %s16, 1
      %s221 = scalar_select %p220, %s16, 1
      %s222 = smul.addr %s221, 8
      %s223 = smul.addr %s222, 8
      %s224 = scalar_lea.vmem %s5, %s223
      %v226 = vld [vmem:[%s1] sm:$0xff]
      %v227 = vld [vmem:[%s1 + $0x8] sm:$0xff]
      %v228 = vld [vmem:[%s1 + $0x10] sm:$0xff]
      %v229 = vld [vmem:[%s1 + $0x18] sm:$0xff]
      %v230 = vld [vmem:[%s1 + $0x20] sm:$0xff]
      %v231 = vld [vmem:[%s1 + $0x28] sm:$0xff]
      %v232 = vld [vmem:[%s1 + $0x30] sm:$0xff]
      %v233 = vld [vmem:[%s1 + $0x38] sm:$0xff]
      %v234 = vld [vmem:[%s1 + $0x40] sm:$0xff]
      %v235 = vld [vmem:[%s1 + $0x48] sm:$0xff]
      %v236 = vld [vmem:[%s1 + $0x50] sm:$0xff]
      %v237 = vld [vmem:[%s1 + $0x58] sm:$0xff]
      %v238 = vld [vmem:[%s1 + $0x60] sm:$0xff]
      %v239 = vld [vmem:[%s1 + $0x68] sm:$0xff]
      %v240 = vld [vmem:[%s1 + $0x70] sm:$0xff]
      %v241 = vld [vmem:[%s1 + $0x78] sm:$0xff]
      %v242 = vld [vmem:[%s219] sm:$0xf]
      %v243 = vld [vmem:[%s219 + $0x4] sm:$0xf]
      %v244 = vld [vmem:[%s219 + $0x8] sm:$0xf]
      %v245 = vld [vmem:[%s219 + $0xc] sm:$0xf]
      %v246 = vld [vmem:[%s219 + $0x10] sm:$0xf]
      %v247 = vld [vmem:[%s219 + $0x14] sm:$0xf]
      %v248 = vld [vmem:[%s219 + $0x18] sm:$0xf]
      %v249 = vld [vmem:[%s219 + $0x1c] sm:$0xf]
      %v250 = vld [vmem:[%s219 + $0x20] sm:$0xf]
      %v251 = vld [vmem:[%s219 + $0x24] sm:$0xf]
      %v252 = vld [vmem:[%s219 + $0x28] sm:$0xf]
      %v253 = vld [vmem:[%s219 + $0x2c] sm:$0xf]
      %v254 = vld [vmem:[%s219 + $0x30] sm:$0xf]
      %v255 = vld [vmem:[%s219 + $0x34] sm:$0xf]
      %v256 = vld [vmem:[%s219 + $0x38] sm:$0xf]
      %v257 = vld [vmem:[%s219 + $0x3c] sm:$0xf]
      %v258 = vld [vmem:[%s219 + $0x40] sm:$0xf]
      %v259 = vld [vmem:[%s219 + $0x44] sm:$0xf]
      %v260 = vld [vmem:[%s219 + $0x48] sm:$0xf]
      %v261 = vld [vmem:[%s219 + $0x4c] sm:$0xf]
      %v262 = vld [vmem:[%s219 + $0x50] sm:$0xf]
      %v263 = vld [vmem:[%s219 + $0x54] sm:$0xf]
      %v264 = vld [vmem:[%s219 + $0x58] sm:$0xf]
      %v265 = vld [vmem:[%s219 + $0x5c] sm:$0xf]
      %v266 = vld [vmem:[%s219 + $0x60] sm:$0xf]
      %v267 = vld [vmem:[%s219 + $0x64] sm:$0xf]
      %v268 = vld [vmem:[%s219 + $0x68] sm:$0xf]
      %v269 = vld [vmem:[%s219 + $0x6c] sm:$0xf]
      %v270 = vld [vmem:[%s219 + $0x70] sm:$0xf]
      %v271 = vld [vmem:[%s219 + $0x74] sm:$0xf]
      %v272 = vld [vmem:[%s219 + $0x78] sm:$0xf]
      %v273 = vld [vmem:[%s219 + $0x7c] sm:$0xf]
      %v274 = vld [vmem:[%s219 + $0x80] sm:$0xf]
      %v275 = vld [vmem:[%s219 + $0x84] sm:$0xf]
      %v276 = vld [vmem:[%s219 + $0x88] sm:$0xf]
      %v277 = vld [vmem:[%s219 + $0x8c] sm:$0xf]
      %v278 = vld [vmem:[%s219 + $0x90] sm:$0xf]
      %v279 = vld [vmem:[%s219 + $0x94] sm:$0xf]
      %v280 = vld [vmem:[%s219 + $0x98] sm:$0xf]
      %v281 = vld [vmem:[%s219 + $0x9c] sm:$0xf]
      %v282 = vld [vmem:[%s219 + $0xa0] sm:$0xf]
      %v283 = vld [vmem:[%s219 + $0xa4] sm:$0xf]
      %v284 = vld [vmem:[%s219 + $0xa8] sm:$0xf]
      %v285 = vld [vmem:[%s219 + $0xac] sm:$0xf]
      %v286 = vld [vmem:[%s219 + $0xb0] sm:$0xf]
      %v287 = vld [vmem:[%s219 + $0xb4] sm:$0xf]
      %v288 = vld [vmem:[%s219 + $0xb8] sm:$0xf]
      %v289 = vld [vmem:[%s219 + $0xbc] sm:$0xf]
      %v290 = vld [vmem:[%s219 + $0xc0] sm:$0xf]
      %v291 = vld [vmem:[%s219 + $0xc4] sm:$0xf]
      %v292 = vld [vmem:[%s219 + $0xc8] sm:$0xf]
      %v293 = vld [vmem:[%s219 + $0xcc] sm:$0xf]
      %v294 = vld [vmem:[%s219 + $0xd0] sm:$0xf]
      %v295 = vld [vmem:[%s219 + $0xd4] sm:$0xf]
      %v296 = vld [vmem:[%s219 + $0xd8] sm:$0xf]
      %v297 = vld [vmem:[%s219 + $0xdc] sm:$0xf]
      %v298 = vld [vmem:[%s219 + $0xe0] sm:$0xf]
      %v299 = vld [vmem:[%s219 + $0xe4] sm:$0xf]
      %v300 = vld [vmem:[%s219 + $0xe8] sm:$0xf]
      %v301 = vld [vmem:[%s219 + $0xec] sm:$0xf]
      %v302 = vld [vmem:[%s219 + $0xf0] sm:$0xf]
      %v303 = vld [vmem:[%s219 + $0xf4] sm:$0xf]
      %v304 = vld [vmem:[%s219 + $0xf8] sm:$0xf]
      %v305 = vld [vmem:[%s219 + $0xfc] sm:$0xf]
      %v306 = vld [vmem:[%s2] sm:$0xff]
      %v307 = vld [vmem:[%s2 + $0x8] sm:$0xff]
      %v308 = vld [vmem:[%s2 + $0x10] sm:$0xff]
      %v309 = vld [vmem:[%s2 + $0x18] sm:$0xff]
      %v310 = vld [vmem:[%s2 + $0x20] sm:$0xff]
      %v311 = vld [vmem:[%s2 + $0x28] sm:$0xff]
      %v312 = vld [vmem:[%s2 + $0x30] sm:$0xff]
      %v313 = vld [vmem:[%s2 + $0x38] sm:$0xff]
      %315 = vset.pattern.permute.xlu0 0
      %316 = vperm.xlu0 %315, %v306
      %v317 = vpop.permute.xlu0 %316
      %320 = vset.pattern.permute.xlu0 0
      %321 = vperm.xlu0 %320, %v307
      %v322 = vpop.permute.xlu0 %321
      %325 = vset.pattern.permute.xlu0 0
      %326 = vperm.xlu0 %325, %v308
      %v327 = vpop.permute.xlu0 %326
      %330 = vset.pattern.permute.xlu0 0
      %331 = vperm.xlu0 %330, %v309
      %v332 = vpop.permute.xlu0 %331
      %335 = vset.pattern.permute.xlu0 0
      %336 = vperm.xlu0 %335, %v310
      %v337 = vpop.permute.xlu0 %336
      %340 = vset.pattern.permute.xlu0 0
      %341 = vperm.xlu0 %340, %v311
      %v342 = vpop.permute.xlu0 %341
      %345 = vset.pattern.permute.xlu0 0
      %346 = vperm.xlu0 %345, %v312
      %v347 = vpop.permute.xlu0 %346
      %350 = vset.pattern.permute.xlu0 0
      %351 = vperm.xlu0 %350, %v313
      %v352 = vpop.permute.xlu0 %351
      %v370 = vunpack.c.l.b16 %v226
      %v371 = vunpack.c.h.b16 %v226
      %v372 = vunpack.c.l.b16 %v227
      %v373 = vunpack.c.h.b16 %v227
      %v374 = vunpack.c.l.b16 %v228
      %v375 = vunpack.c.h.b16 %v228
      %v376 = vunpack.c.l.b16 %v229
      %v377 = vunpack.c.h.b16 %v229
      %v378 = vunpack.c.l.b16 %v230
      %v379 = vunpack.c.h.b16 %v230
      %v380 = vunpack.c.l.b16 %v231
      %v381 = vunpack.c.h.b16 %v231
      %v382 = vunpack.c.l.b16 %v232
      %v383 = vunpack.c.h.b16 %v232
      %v384 = vunpack.c.l.b16 %v233
      %v385 = vunpack.c.h.b16 %v233
      %v386 = vunpack.c.l.b16 %v234
      %v387 = vunpack.c.h.b16 %v234
      %v388 = vunpack.c.l.b16 %v235
      %v389 = vunpack.c.h.b16 %v235
      %v390 = vunpack.c.l.b16 %v236
      %v391 = vunpack.c.h.b16 %v236
      %v392 = vunpack.c.l.b16 %v237
      %v393 = vunpack.c.h.b16 %v237
      %v394 = vunpack.c.l.b16 %v238
      %v395 = vunpack.c.h.b16 %v238
      %v396 = vunpack.c.l.b16 %v239
      %v397 = vunpack.c.h.b16 %v239
      %v398 = vunpack.c.l.b16 %v240
      %v399 = vunpack.c.h.b16 %v240
      %v400 = vunpack.c.l.b16 %v241
      %v401 = vunpack.c.h.b16 %v241
      %v402 = vpack.c.b16 %v374, %v370
      %v403 = vpack.c.b16 %v375, %v371
      %v404 = vpack.c.b16 %v376, %v372
      %v405 = vpack.c.b16 %v377, %v373
      %v406 = vpack.c.b16 %v382, %v378
      %v407 = vpack.c.b16 %v383, %v379
      %v408 = vpack.c.b16 %v384, %v380
      %v409 = vpack.c.b16 %v385, %v381
      %v410 = vpack.c.b16 %v390, %v386
      %v411 = vpack.c.b16 %v391, %v387
      %v412 = vpack.c.b16 %v392, %v388
      %v413 = vpack.c.b16 %v393, %v389
      %v414 = vpack.c.b16 %v398, %v394
      %v415 = vpack.c.b16 %v399, %v395
      %v416 = vpack.c.b16 %v400, %v396
      %v417 = vpack.c.b16 %v401, %v397
      %v498 = vunpack.c.l.b16 %v242
      %v499 = vunpack.c.l.b16 %v243
      %v500 = vunpack.c.l.b16 %v244
      %v501 = vunpack.c.l.b16 %v245
      %v502 = vunpack.c.l.b16 %v246
      %v503 = vunpack.c.l.b16 %v247
      %v504 = vunpack.c.l.b16 %v248
      %v505 = vunpack.c.l.b16 %v249
      %v506 = vunpack.c.l.b16 %v250
      %v507 = vunpack.c.l.b16 %v251
      %v508 = vunpack.c.l.b16 %v252
      %v509 = vunpack.c.l.b16 %v253
      %v510 = vunpack.c.l.b16 %v254
      %v511 = vunpack.c.l.b16 %v255
      %v512 = vunpack.c.l.b16 %v256
      %v513 = vunpack.c.l.b16 %v257
      %v514 = vunpack.c.l.b16 %v258
      %v515 = vunpack.c.l.b16 %v259
      %v516 = vunpack.c.l.b16 %v260
      %v517 = vunpack.c.l.b16 %v261
      %v518 = vunpack.c.l.b16 %v262
      %v519 = vunpack.c.l.b16 %v263
      %v520 = vunpack.c.l.b16 %v264
      %v521 = vunpack.c.l.b16 %v265
      %v522 = vunpack.c.l.b16 %v266
      %v523 = vunpack.c.l.b16 %v267
      %v524 = vunpack.c.l.b16 %v268
      %v525 = vunpack.c.l.b16 %v269
      %v526 = vunpack.c.l.b16 %v270
      %v527 = vunpack.c.l.b16 %v271
      %v528 = vunpack.c.l.b16 %v272
      %v529 = vunpack.c.l.b16 %v273
      %v530 = vunpack.c.l.b16 %v274
      %v531 = vunpack.c.l.b16 %v275
      %v532 = vunpack.c.l.b16 %v276
      %v533 = vunpack.c.l.b16 %v277
      %v534 = vunpack.c.l.b16 %v278
      %v535 = vunpack.c.l.b16 %v279
      %v536 = vunpack.c.l.b16 %v280
      %v537 = vunpack.c.l.b16 %v281
      %v538 = vunpack.c.l.b16 %v282
      %v539 = vunpack.c.l.b16 %v283
      %v540 = vunpack.c.l.b16 %v284
      %v541 = vunpack.c.l.b16 %v285
      %v542 = vunpack.c.l.b16 %v286
      %v543 = vunpack.c.l.b16 %v287
      %v544 = vunpack.c.l.b16 %v288
      %v545 = vunpack.c.l.b16 %v289
      %v546 = vunpack.c.l.b16 %v290
      %v547 = vunpack.c.l.b16 %v291
      %v548 = vunpack.c.l.b16 %v292
      %v549 = vunpack.c.l.b16 %v293
      %v550 = vunpack.c.l.b16 %v294
      %v551 = vunpack.c.l.b16 %v295
      %v552 = vunpack.c.l.b16 %v296
      %v553 = vunpack.c.l.b16 %v297
      %v554 = vunpack.c.l.b16 %v298
      %v555 = vunpack.c.l.b16 %v299
      %v556 = vunpack.c.l.b16 %v300
      %v557 = vunpack.c.l.b16 %v301
      %v558 = vunpack.c.l.b16 %v302
      %v559 = vunpack.c.l.b16 %v303
      %v560 = vunpack.c.l.b16 %v304
      %v561 = vunpack.c.l.b16 %v305
      %v562 = vpack.c.b16 %v499, %v498
      %v563 = vpack.c.b16 %v501, %v500
      %v564 = vpack.c.b16 %v503, %v502
      %v565 = vpack.c.b16 %v505, %v504
      %v566 = vpack.c.b16 %v507, %v506
      %v567 = vpack.c.b16 %v509, %v508
      %v568 = vpack.c.b16 %v511, %v510
      %v569 = vpack.c.b16 %v513, %v512
      %v570 = vpack.c.b16 %v515, %v514
      %v571 = vpack.c.b16 %v517, %v516
      %v572 = vpack.c.b16 %v519, %v518
      %v573 = vpack.c.b16 %v521, %v520
      %v574 = vpack.c.b16 %v523, %v522
      %v575 = vpack.c.b16 %v525, %v524
      %v576 = vpack.c.b16 %v527, %v526
      %v577 = vpack.c.b16 %v529, %v528
      %v578 = vpack.c.b16 %v531, %v530
      %v579 = vpack.c.b16 %v533, %v532
      %v580 = vpack.c.b16 %v535, %v534
      %v581 = vpack.c.b16 %v537, %v536
      %v582 = vpack.c.b16 %v539, %v538
      %v583 = vpack.c.b16 %v541, %v540
      %v584 = vpack.c.b16 %v543, %v542
      %v585 = vpack.c.b16 %v545, %v544
      %v586 = vpack.c.b16 %v547, %v546
      %v587 = vpack.c.b16 %v549, %v548
      %v588 = vpack.c.b16 %v551, %v550
      %v589 = vpack.c.b16 %v553, %v552
      %v590 = vpack.c.b16 %v555, %v554
      %v591 = vpack.c.b16 %v557, %v556
      %v592 = vpack.c.b16 %v559, %v558
      %v593 = vpack.c.b16 %v561, %v560
      %626 = vmatprep.subr.bf16.mxu0 0
      %627 = vmatpush1.bf16.msra.mxu0 %v562
      %628 = vmatprep.subr.bf16.mxu0 0
      %629 = vmatpush1.bf16.msra.mxu0 %v563
      %630 = vmatprep.subr.bf16.mxu0 0
      %631 = vmatpush1.bf16.msra.mxu0 %v564
      %632 = vmatprep.subr.bf16.mxu0 0
      %633 = vmatpush1.bf16.msra.mxu0 %v565
      %634 = vmatprep.subr.bf16.mxu0 0
      %635 = vmatpush1.bf16.msra.mxu0 %v566
      %636 = vmatprep.subr.bf16.mxu0 0
      %637 = vmatpush1.bf16.msra.mxu0 %v567
      %638 = vmatprep.subr.bf16.mxu0 0
      %639 = vmatpush1.bf16.msra.mxu0 %v568
      %640 = vmatprep.subr.bf16.mxu0 0
      %641 = vmatpush1.bf16.msra.mxu0 %v569
      %642 = vmatprep.subr.bf16.mxu0 0
      %643 = vmatpush1.bf16.msra.mxu0 %v570
      %644 = vmatprep.subr.bf16.mxu0 0
      %645 = vmatpush1.bf16.msra.mxu0 %v571
      %646 = vmatprep.subr.bf16.mxu0 0
      %647 = vmatpush1.bf16.msra.mxu0 %v572
      %648 = vmatprep.subr.bf16.mxu0 0
      %649 = vmatpush1.bf16.msra.mxu0 %v573
      %650 = vmatprep.subr.bf16.mxu0 0
      %651 = vmatpush1.bf16.msra.mxu0 %v574
      %652 = vmatprep.subr.bf16.mxu0 0
      %653 = vmatpush1.bf16.msra.mxu0 %v575
      %654 = vmatprep.subr.bf16.mxu0 0
      %655 = vmatpush1.bf16.msra.mxu0 %v576
      %656 = vmatprep.subr.bf16.mxu0 0
      %657 = vmatpush1.bf16.msra.mxu0 %v577
      %658 = vmatprep.mubr.bf16.mxu0 %v403
      %659 = vmatmul.mubr.bf16.gmra.mrb[0].mxu0 %v402
      %v660 = vpop.f32.mrb[0].mxu0
      %v661 = vadd.f32 %v317, %v660
      %v662 = vpop.f32.mrb[0].mxu0
      %v663 = vpop.f32.mrb[0].mxu0
      %v664 = vadd.f32 %v322, %v663
      %v665 = vpop.f32.mrb[0].mxu0
      %666 = vmatprep.mubr.bf16.mxu0 %v407
      %667 = vmatmul.mubr.bf16.gmra.mrb[0].mxu0 %v406
      %v668 = vpop.f32.mrb[0].mxu0
      %v669 = vadd.f32 %v327, %v668
      %v670 = vpop.f32.mrb[0].mxu0
      %v671 = vpop.f32.mrb[0].mxu0
      %v672 = vadd.f32 %v332, %v671
      %v673 = vpop.f32.mrb[0].mxu0
      %674 = vmatprep.mubr.bf16.mxu0 %v411
      %675 = vmatmul.mubr.bf16.gmra.mrb[0].mxu0 %v410
      %v676 = vpop.f32.mrb[0].mxu0
      %v677 = vadd.f32 %v337, %v676
      %v678 = vpop.f32.mrb[0].mxu0
      %v679 = vpop.f32.mrb[0].mxu0
      %v680 = vadd.f32 %v342, %v679
      %v681 = vpop.f32.mrb[0].mxu0
      %682 = vmatprep.mubr.bf16.mxu0 %v415
      %683 = vmatmul.mubr.bf16.gmra.mrb[0].mxu0 %v414
      %v684 = vpop.f32.mrb[0].mxu0
      %v685 = vadd.f32 %v347, %v684
      %v686 = vpop.f32.mrb[0].mxu0
      %v687 = vpop.f32.mrb[0].mxu0
      %v688 = vadd.f32 %v352, %v687
      %v689 = vpop.f32.mrb[0].mxu0
      %690 = vdwg.mxu0
      %691 = vmatprep.subr.bf16.mxu0 0
      %692 = vmatpush1.bf16.msra.mxu0 %v578
      %693 = vmatprep.subr.bf16.mxu0 0
      %694 = vmatpush1.bf16.msra.mxu0 %v579
      %695 = vmatprep.subr.bf16.mxu0 0
      %696 = vmatpush1.bf16.msra.mxu0 %v580
      %697 = vmatprep.subr.bf16.mxu0 0
      %698 = vmatpush1.bf16.msra.mxu0 %v581
      %699 = vmatprep.subr.bf16.mxu0 0
      %700 = vmatpush1.bf16.msra.mxu0 %v582
      %701 = vmatprep.subr.bf16.mxu0 0
      %702 = vmatpush1.bf16.msra.mxu0 %v583
      %703 = vmatprep.subr.bf16.mxu0 0
      %704 = vmatpush1.bf16.msra.mxu0 %v584
      %705 = vmatprep.subr.bf16.mxu0 0
      %706 = vmatpush1.bf16.msra.mxu0 %v585
      %707 = vmatprep.subr.bf16.mxu0 0
      %708 = vmatpush1.bf16.msra.mxu0 %v586
      %709 = vmatprep.subr.bf16.mxu0 0
      %710 = vmatpush1.bf16.msra.mxu0 %v587
      %711 = vmatprep.subr.bf16.mxu0 0
      %712 = vmatpush1.bf16.msra.mxu0 %v588
      %713 = vmatprep.subr.bf16.mxu0 0
      %714 = vmatpush1.bf16.msra.mxu0 %v589
      %715 = vmatprep.subr.bf16.mxu0 0
      %716 = vmatpush1.bf16.msra.mxu0 %v590
      %717 = vmatprep.subr.bf16.mxu0 0
      %718 = vmatpush1.bf16.msra.mxu0 %v591
      %719 = vmatprep.subr.bf16.mxu0 0
      %720 = vmatpush1.bf16.msra.mxu0 %v592
      %721 = vmatprep.subr.bf16.mxu0 0
      %722 = vmatpush1.bf16.msra.mxu0 %v593
      %723 = vmatprep.mubr.bf16.mxu0 %v405
      %724 = vmatmul.mubr.bf16.gmra.mrb[0].mxu0 %v404
      %v725 = vpop.f32.mrb[0].mxu0
      %v726 = vadd.f32 %v661, %v725
      %v727 = vpop.f32.mrb[0].mxu0
      %v728 = vpop.f32.mrb[0].mxu0
      %v729 = vadd.f32 %v664, %v728
      %v730 = vpop.f32.mrb[0].mxu0
      %731 = vmatprep.mubr.bf16.mxu0 %v409
      %732 = vmatmul.mubr.bf16.gmra.mrb[0].mxu0 %v408
      %v733 = vpop.f32.mrb[0].mxu0
      %v734 = vadd.f32 %v669, %v733
      %v735 = vpop.f32.mrb[0].mxu0
      %v736 = vpop.f32.mrb[0].mxu0
      %v737 = vadd.f32 %v672, %v736
      %v738 = vpop.f32.mrb[0].mxu0
      %739 = vmatprep.mubr.bf16.mxu0 %v413
      %740 = vmatmul.mubr.bf16.gmra.mrb[0].mxu0 %v412
      %v741 = vpop.f32.mrb[0].mxu0
      %v742 = vadd.f32 %v677, %v741
      %v743 = vpop.f32.mrb[0].mxu0
      %v744 = vpop.f32.mrb[0].mxu0
      %v745 = vadd.f32 %v680, %v744
      %v746 = vpop.f32.mrb[0].mxu0
      %747 = vmatprep.mubr.bf16.mxu0 %v417
      %748 = vmatmul.mubr.bf16.gmra.mrb[0].mxu0 %v416
      %v749 = vpop.f32.mrb[0].mxu0
      %v750 = vadd.f32 %v685, %v749
      %v751 = vpop.f32.mrb[0].mxu0
      %v752 = vpop.f32.mrb[0].mxu0
      %v753 = vadd.f32 %v688, %v752
      %v754 = vpop.f32.mrb[0].mxu0
      %755 = vdwg.mxu0
      %vm756 = vcmask 523264
      %v757 = vsel %vm756, %v726, 0.0
      %v758 = vsel %vm756, %v729, 0.0
      %v759 = vadd.f32 %v757, %v758
      %v760 = vsel %vm756, %v734, 0.0
      %v761 = vadd.f32 %v759, %v760
      %v762 = vsel %vm756, %v737, 0.0
      %v763 = vadd.f32 %v761, %v762
      %v764 = vsel %vm756, %v742, 0.0
      %v765 = vadd.f32 %v763, %v764
      %v766 = vsel %vm756, %v745, 0.0
      %v767 = vadd.f32 %v765, %v766
      %v768 = vsel %vm756, %v750, 0.0
      %v769 = vadd.f32 %v767, %v768
      %v770 = vsel %vm756, %v753, 0.0
      %v771 = vadd.f32 %v769, %v770
      %772 = vadd.xlane.f32.xlu0 %v771
      %v773 = vpop.xlane.xlu0 %772
      %v774 = vrot.slane %v773, 4
      %v775 = vadd.f32 %v773, %v774
      %v776 = vrot.slane %v775, 2
      %v777 = vadd.f32 %v775, %v776
      %v778 = vrot.slane %v777, 1
      %v779 = vadd.f32 %v777, %v778
      %s780 = vtos %v779
      %s781 = smul.f32 %s780, 0.00024414063
      %v782 = vmul.f32 %v726, %v726
      %v783 = vmul.f32 %v729, %v729
      %v784 = vmul.f32 %v734, %v734
      %v785 = vmul.f32 %v737, %v737
      %v786 = vmul.f32 %v742, %v742
      %v787 = vmul.f32 %v745, %v745
      %v788 = vmul.f32 %v750, %v750
      %v789 = vmul.f32 %v753, %v753
      %v790 = vsel %vm756, %v782, 0.0
      %v791 = vsel %vm756, %v783, 0.0
      %v792 = vadd.f32 %v790, %v791
      %v793 = vsel %vm756, %v784, 0.0
      %v794 = vadd.f32 %v792, %v793
      %v795 = vsel %vm756, %v785, 0.0
      %v796 = vadd.f32 %v794, %v795
      %v797 = vsel %vm756, %v786, 0.0
      %v798 = vadd.f32 %v796, %v797
      %v799 = vsel %vm756, %v787, 0.0
      %v800 = vadd.f32 %v798, %v799
      %v801 = vsel %vm756, %v788, 0.0
      %v802 = vadd.f32 %v800, %v801
      %v803 = vsel %vm756, %v789, 0.0
      %v804 = vadd.f32 %v802, %v803
      %805 = vadd.xlane.f32.xlu0 %v804
      %v806 = vpop.xlane.xlu0 %805
      %v807 = vrot.slane %v806, 4
      %v808 = vadd.f32 %v806, %v807
      %v809 = vrot.slane %v808, 2
      %v810 = vadd.f32 %v808, %v809
      %v811 = vrot.slane %v810, 1
      %v812 = vadd.f32 %v810, %v811
      %s813 = vtos %v812
      %s814 = smul.f32 %s813, 0.00024414063
      %s815 = smul.f32 %s781, %s781
      %s816 = ssub.f32 %s814, %s815
      %v817 = vstv %s781
      %v818 = vsub.f32 %v726, %v817
      %v819 = vsub.f32 %v729, %v817
      %v820 = vsub.f32 %v734, %v817
      %v821 = vsub.f32 %v737, %v817
      %v822 = vsub.f32 %v742, %v817
      %v823 = vsub.f32 %v745, %v817
      %v824 = vsub.f32 %v750, %v817
      %v825 = vsub.f32 %v753, %v817
      %s826 = sadd.f32 %s816, 1e-05
      %v827 = vstv %s826
      %v828 = vrsqrt.pop %v827
      %s829 = vtos %v828
      %v830 = vstv %s829
      %v831 = vmul.f32 %v818, %v830
      %v832 = vmul.f32 %v819, %v830
      %v833 = vmul.f32 %v820, %v830
      %v834 = vmul.f32 %v821, %v830
      %v835 = vmul.f32 %v822, %v830
      %v836 = vmul.f32 %v823, %v830
      %v837 = vmul.f32 %v824, %v830
      %v838 = vmul.f32 %v825, %v830
      %v839 = vld [vmem:[%s3] sm:$0xff]
      %v840 = vld [vmem:[%s3 + $0x8] sm:$0xff]
      %v841 = vld [vmem:[%s3 + $0x10] sm:$0xff]
      %v842 = vld [vmem:[%s3 + $0x18] sm:$0xff]
      %v843 = vld [vmem:[%s3 + $0x20] sm:$0xff]
      %v844 = vld [vmem:[%s3 + $0x28] sm:$0xff]
      %v845 = vld [vmem:[%s3 + $0x30] sm:$0xff]
      %v846 = vld [vmem:[%s3 + $0x38] sm:$0xff]
      %v847 = vmul.f32 %v831, %v839
      %v848 = vmul.f32 %v832, %v840
      %v849 = vmul.f32 %v833, %v841
      %v850 = vmul.f32 %v834, %v842
      %v851 = vmul.f32 %v835, %v843
      %v852 = vmul.f32 %v836, %v844
      %v853 = vmul.f32 %v837, %v845
      %v854 = vmul.f32 %v838, %v846
      %v855 = vld [vmem:[%s4] sm:$0xff]
      %v856 = vld [vmem:[%s4 + $0x8] sm:$0xff]
      %v857 = vld [vmem:[%s4 + $0x10] sm:$0xff]
      %v858 = vld [vmem:[%s4 + $0x18] sm:$0xff]
      %v859 = vld [vmem:[%s4 + $0x20] sm:$0xff]
      %v860 = vld [vmem:[%s4 + $0x28] sm:$0xff]
      %v861 = vld [vmem:[%s4 + $0x30] sm:$0xff]
      %v862 = vld [vmem:[%s4 + $0x38] sm:$0xff]
      %v863 = vadd.f32 %v847, %v855
      %v864 = vadd.f32 %v848, %v856
      %v865 = vadd.f32 %v849, %v857
      %v866 = vadd.f32 %v850, %v858
      %v867 = vadd.f32 %v851, %v859
      %v868 = vadd.f32 %v852, %v860
      %v869 = vadd.f32 %v853, %v861
      %v870 = vadd.f32 %v854, %v862
      %vm871 = vcmp.ge.f32.partialorder %v863, 0.0
      %vm872 = vcmp.ge.f32.partialorder %v864, 0.0
      %vm873 = vcmp.ge.f32.partialorder %v865, 0.0
      %vm874 = vcmp.ge.f32.partialorder %v866, 0.0
      %vm875 = vcmp.ge.f32.partialorder %v867, 0.0
      %vm876 = vcmp.ge.f32.partialorder %v868, 0.0
      %vm877 = vcmp.ge.f32.partialorder %v869, 0.0
      %vm878 = vcmp.ge.f32.partialorder %v870, 0.0
      %v879 = vmul.f32 %v863, 0.2
      %v880 = vmul.f32 %v864, 0.2
      %v881 = vmul.f32 %v865, 0.2
      %v882 = vmul.f32 %v866, 0.2
      %v883 = vmul.f32 %v867, 0.2
      %v884 = vmul.f32 %v868, 0.2
      %v885 = vmul.f32 %v869, 0.2
      %v886 = vmul.f32 %v870, 0.2
      %v887 = vsel %vm871, %v863, %v879
      %v888 = vsel %vm872, %v864, %v880
      %v889 = vsel %vm873, %v865, %v881
      %v890 = vsel %vm874, %v866, %v882
      %v891 = vsel %vm875, %v867, %v883
      %v892 = vsel %vm876, %v868, %v884
      %v893 = vsel %vm877, %v869, %v885
      %v894 = vsel %vm878, %v870, %v886
      %895 = vst.msk [vmem:[%s224] sm:$0xff] %vm756, %v887
      %896 = vst.msk [vmem:[%s224 + $0x8] sm:$0xff] %vm756, %v888
      %897 = vst.msk [vmem:[%s224 + $0x10] sm:$0xff] %vm756, %v889
      %898 = vst.msk [vmem:[%s224 + $0x18] sm:$0xff] %vm756, %v890
      %899 = vst.msk [vmem:[%s224 + $0x20] sm:$0xff] %vm756, %v891
      %900 = vst.msk [vmem:[%s224 + $0x28] sm:$0xff] %vm756, %v892
      %901 = vst.msk [vmem:[%s224 + $0x30] sm:$0xff] %vm756, %v893
      %902 = vst.msk [vmem:[%s224 + $0x38] sm:$0xff] %vm756, %v894
      %p903 = scmp.lt.s32.totalorder %s16, 1
      %s904 = scalar_select %p903, %s16, 1
      %s905 = smul.addr %s904, 8
      %s906 = smul.addr %s905, 8
      %s907 = scalar_lea.vmem %s5, %s906
      // Predicated region
      $region41: #{discriminator_forward.6} parent=39 // pred_check
        %p908 = pneg %p144
      $region42: #{discriminator_forward.6} parent=39 // pred_check_branch
        %910 = sbr.rel (%p908) target = $region44
      $region43: #{discriminator_forward.6} parent=39 // pred_region
        _
      $region44: #{discriminator_forward.6} parent=39 // pred_fallthru
        _
    $region40: #{discriminator_forward.6} parent=5 // pred_fallthru
      _
    %p911 = scmp.le.s32.totalorder 2, %s11
    // Predicated region
    $region45: #{discriminator_forward.6} parent=5 // pred_check
      %p912 = pneg %p911
    $region46: #{discriminator_forward.6} parent=5 // pred_check_branch
      %914 = sbr.rel (%p912) target = $region48
    $region47: #{discriminator_forward.6} parent=5 // pred_region
      %s915 = ssub.s32 %s11, 2
      // Predicated region
      $region49: #{discriminator_forward.6} parent=47 // pred_check
        %p916 = pneg %p150
      $region50: #{discriminator_forward.6} parent=47 // pred_check_branch
        %918 = sbr.rel (%p916) target = $region52
      $region51: #{discriminator_forward.6} parent=47 // pred_region
        %p919 = scmp.lt.s32.totalorder %s17, 1
        %s920 = scalar_select %p919, %s17, 1
        %s921 = smul.addr %s920, 8
        %s922 = smul.addr %s921, 8
        %s923 = scalar_lea.vmem %s5, %s922
      $region52: #{discriminator_forward.6} parent=47 // pred_fallthru
        _
    $region48: #{discriminator_forward.6} parent=5 // pred_fallthru
      _
  $region6: #{discriminator_forward.6} parent=0 // loop_footer
    %s15 = sadd.s32 1, %s11
  $region7: #{discriminator_forward.6} parent=0 // loop_footer_branch
    %10 = sbr.rel target = $region3
  $region8: #{discriminator_forward.6} parent=0 // loop_exit
    _

// kernel: discriminator_forward.7
$region0: #{discriminator_forward.7}
  #allocation0 [shape = 'u32[]', space=smem, size = 0x4, offset = 0x4, fixed_abs, tag = 'smem constant byte address 0x4 - core index']
  #allocation1 [shape = 'u32[144,128]{1,0:T(1,128)}', space=vmem, size = 0x12000, scoped, tag = 'internal scratch']
  #allocation2 [shape = 'f32[1,1]{1,0:T(1,128)S(1)}', space=vmem, size = 0x200, scoped, tag = 'scoped memory for discriminator_forward.7']
  %s0 = inlined_call_operand.vmem [shape: bf16[2,1024,16], index: 0, kind: input, shape index: {}]
  %s1 = inlined_call_operand.vmem [shape: bf16[128,1024], index: 1, kind: input, shape index: {}]
  %s2 = inlined_call_operand.vmem [shape: f32[128,1], index: 2, kind: input, shape index: {}]
  %s3 = inlined_call_operand.vmem [shape: f32[128,16], index: 3, kind: input, shape index: {}]
  %s4 = inlined_call_operand.vmem [shape: f32[128,16], index: 4, kind: input, shape index: {}]
  %s5 = inlined_call_operand.vmem [shape: f32[128,16], index: 5, kind: input, shape index: {}]
  %s6 = inlined_call_operand.<no memory space> [shape: f32[1,1], index: 6, kind: input, shape index: {}]
  %s7 = inlined_call_operand.vmem [shape: f32[2,1,1], index: 7, kind: output, shape index: {}]
  %s8 = sld [smem:[#allocation0]]
  $region61: #{discriminator_forward.7} parent=0
    _
  %s10 = ssub.s32 1, %s8
  %s11 = scalar_select 0, %s10, %s8
  %v12 = vstv %s6
  %13 = vst [vmem:[#allocation2] sm:$0x1] %v12
  loop: start=0, step=1, limit=4
  $region2: #{discriminator_forward.7} parent=0 // loop_pre_header
    _
  $region3: #{discriminator_forward.7} parent=0 // loop_header
    %s15 = sphi 0, %s19
    %p16 = scmp.ge.s32.totalorder %s15, 4
    %s25 = sphi 0, %s27
    %s28 = sphi 0, %s25
    %s29 = sphi 0, %s28
    %s45 = sphi 0, %s29
    %s49 = sphi 0, %s49
    %s51 = sphi 0, %s49
    %s52 = sphi 0, %s51
    %s66 = sphi 0, %s52
    %s70 = sphi 0, %s70
    %s72 = sphi 0, %s70
    %s73 = sphi 0, %s72
    %s87 = sphi 0, %s73
    %s91 = sphi 0, %s91
    %s93 = sphi 0, %s91
    %s94 = sphi 0, %s93
    %s108 = sphi 0, %s94
    %s112 = sphi 0, %s112
    %s114 = sphi 0, %s112
    %s115 = sphi 0, %s114
    %s129 = sphi 0, %s115
    %s133 = sphi 0, %s133
    %s135 = sphi 0, %s133
    %s136 = sphi 0, %s135
    %s150 = sphi 0, %s136
    %s154 = sphi 0, %s154
    %s156 = sphi 0, %s154
    %s157 = sphi 0, %s156
    %s171 = sphi 0, %s157
    %s177 = sphi 0, %s179
    %s180 = sphi 0, %s177
    %s181 = sphi 0, %s180
    %s197 = sphi 0, %s181
  $region4: #{discriminator_forward.7} parent=0 // loop_header_branch
    %18 = sbr.rel (%p16) target = $region8
  $region5: #{discriminator_forward.7} parent=0 // loop_body
    %s20 = ssub.s32 %s15, 1
    %s21 = ssub.s32 %s15, 2
    %s22 = sadd.s32 %s15, 1
    %s23 = ssub.s32 %s15, %s22
    %p24 = scmp.eq.s32.totalorder %s23, 0
    %s26 = sadd.s32 %s25, 1
    %s27 = scalar_select %p24, %s25, %s26
    %p30 = pneg %p24
    %p31 = scmp.eq.s32.totalorder %s15, 1
    %p32 = por %p30, %p31
    %p33 = scmp.ne.s32.totalorder %s25, %s28
    %p34 = scmp.eq.s32.totalorder %s15, 0
    %p35 = por %p33, %p34
    %p36 = scmp.ne.s32.totalorder %s25, %s28
    %p37 = scmp.eq.s32.totalorder %s20, 1
    %p38 = por %p36, %p37
    %p39 = scmp.ne.s32.totalorder %s28, %s29
    %p40 = scmp.eq.s32.totalorder %s20, 0
    %p41 = por %p39, %p40
    %p42 = scmp.ne.s32.totalorder %s28, %s29
    %p43 = scmp.eq.s32.totalorder %s21, 1
    %p44 = por %p42, %p43
    %p46 = scmp.ne.s32.totalorder %s29, %s45
    %p47 = scmp.eq.s32.totalorder %s21, 0
    %p48 = por %p46, %p47
    %s50 = sadd.s32 %s49, 1
    %p53 = scmp.eq.s32.totalorder %s15, 1
    %p54 = scmp.ne.s32.totalorder %s49, %s51
    %p55 = scmp.eq.s32.totalorder %s15, 0
    %p56 = por %p54, %p55
    %p57 = scmp.ne.s32.totalorder %s49, %s51
    %p58 = scmp.eq.s32.totalorder %s20, 1
    %p59 = por %p57, %p58
    %p60 = scmp.ne.s32.totalorder %s51, %s52
    %p61 = scmp.eq.s32.totalorder %s20, 0
    %p62 = por %p60, %p61
    %p63 = scmp.ne.s32.totalorder %s51, %s52
    %p64 = scmp.eq.s32.totalorder %s21, 1
    %p65 = por %p63, %p64
    %p67 = scmp.ne.s32.totalorder %s52, %s66
    %p68 = scmp.eq.s32.totalorder %s21, 0
    %p69 = por %p67, %p68
    %s71 = sadd.s32 %s70, 1
    %p74 = scmp.eq.s32.totalorder %s15, 1
    %p75 = scmp.ne.s32.totalorder %s70, %s72
    %p76 = scmp.eq.s32.totalorder %s15, 0
    %p77 = por %p75, %p76
    %p78 = scmp.ne.s32.totalorder %s70, %s72
    %p79 = scmp.eq.s32.totalorder %s20, 1
    %p80 = por %p78, %p79
    %p81 = scmp.ne.s32.totalorder %s72, %s73
    %p82 = scmp.eq.s32.totalorder %s20, 0
    %p83 = por %p81, %p82
    %p84 = scmp.ne.s32.totalorder %s72, %s73
    %p85 = scmp.eq.s32.totalorder %s21, 1
    %p86 = por %p84, %p85
    %p88 = scmp.ne.s32.totalorder %s73, %s87
    %p89 = scmp.eq.s32.totalorder %s21, 0
    %p90 = por %p88, %p89
    %s92 = sadd.s32 %s91, 1
    %p95 = scmp.eq.s32.totalorder %s15, 1
    %p96 = scmp.ne.s32.totalorder %s91, %s93
    %p97 = scmp.eq.s32.totalorder %s15, 0
    %p98 = por %p96, %p97
    %p99 = scmp.ne.s32.totalorder %s91, %s93
    %p100 = scmp.eq.s32.totalorder %s20, 1
    %p101 = por %p99, %p100
    %p102 = scmp.ne.s32.totalorder %s93, %s94
    %p103 = scmp.eq.s32.totalorder %s20, 0
    %p104 = por %p102, %p103
    %p105 = scmp.ne.s32.totalorder %s93, %s94
    %p106 = scmp.eq.s32.totalorder %s21, 1
    %p107 = por %p105, %p106
    %p109 = scmp.ne.s32.totalorder %s94, %s108
    %p110 = scmp.eq.s32.totalorder %s21, 0
    %p111 = por %p109, %p110
    %s113 = sadd.s32 %s112, 1
    %p116 = scmp.eq.s32.totalorder %s15, 1
    %p117 = scmp.ne.s32.totalorder %s112, %s114
    %p118 = scmp.eq.s32.totalorder %s15, 0
    %p119 = por %p117, %p118
    %p120 = scmp.ne.s32.totalorder %s112, %s114
    %p121 = scmp.eq.s32.totalorder %s20, 1
    %p122 = por %p120, %p121
    %p123 = scmp.ne.s32.totalorder %s114, %s115
    %p124 = scmp.eq.s32.totalorder %s20, 0
    %p125 = por %p123, %p124
    %p126 = scmp.ne.s32.totalorder %s114, %s115
    %p127 = scmp.eq.s32.totalorder %s21, 1
    %p128 = por %p126, %p127
    %p130 = scmp.ne.s32.totalorder %s115, %s129
    %p131 = scmp.eq.s32.totalorder %s21, 0
    %p132 = por %p130, %p131
    %s134 = sadd.s32 %s133, 1
    %p137 = scmp.eq.s32.totalorder %s15, 1
    %p138 = scmp.ne.s32.totalorder %s133, %s135
    %p139 = scmp.eq.s32.totalorder %s15, 0
    %p140 = por %p138, %p139
    %p141 = scmp.ne.s32.totalorder %s133, %s135
    %p142 = scmp.eq.s32.totalorder %s20, 1
    %p143 = por %p141, %p142
    %p144 = scmp.ne.s32.totalorder %s135, %s136
    %p145 = scmp.eq.s32.totalorder %s20, 0
    %p146 = por %p144, %p145
    %p147 = scmp.ne.s32.totalorder %s135, %s136
    %p148 = scmp.eq.s32.totalorder %s21, 1
    %p149 = por %p147, %p148
    %p151 = scmp.ne.s32.totalorder %s136, %s150
    %p152 = scmp.eq.s32.totalorder %s21, 0
    %p153 = por %p151, %p152
    %s155 = sadd.s32 %s154, 1
    %p158 = scmp.eq.s32.totalorder %s15, 1
    %p159 = scmp.ne.s32.totalorder %s154, %s156
    %p160 = scmp.eq.s32.totalorder %s15, 0
    %p161 = por %p159, %p160
    %p162 = scmp.ne.s32.totalorder %s154, %s156
    %p163 = scmp.eq.s32.totalorder %s20, 1
    %p164 = por %p162, %p163
    %p165 = scmp.ne.s32.totalorder %s156, %s157
    %p166 = scmp.eq.s32.totalorder %s20, 0
    %p167 = por %p165, %p166
    %p168 = scmp.ne.s32.totalorder %s156, %s157
    %p169 = scmp.eq.s32.totalorder %s21, 1
    %p170 = por %p168, %p169
    %p172 = scmp.ne.s32.totalorder %s157, %s171
    %p173 = scmp.eq.s32.totalorder %s21, 0
    %p174 = por %p172, %p173
    %s175 = ssub.s32 %s15, %s22
    %p176 = scmp.eq.s32.totalorder %s175, 0
    %s178 = sadd.s32 %s177, 1
    %s179 = scalar_select %p176, %s177, %s178
    %p182 = pneg %p176
    %p183 = scmp.eq.s32.totalorder %s15, 1
    %p184 = por %p182, %p183
    %p185 = scmp.ne.s32.totalorder %s177, %s180
    %p186 = scmp.eq.s32.totalorder %s15, 0
    %p187 = por %p185, %p186
    %p188 = scmp.ne.s32.totalorder %s177, %s180
    %p189 = scmp.eq.s32.totalorder %s20, 1
    %p190 = por %p188, %p189
    %p191 = scmp.ne.s32.totalorder %s180, %s181
    %p192 = scmp.eq.s32.totalorder %s20, 0
    %p193 = por %p191, %p192
    %p194 = scmp.ne.s32.totalorder %s180, %s181
    %p195 = scmp.eq.s32.totalorder %s21, 1
    %p196 = por %p194, %p195
    %p198 = scmp.ne.s32.totalorder %s181, %s197
    %p199 = scmp.eq.s32.totalorder %s21, 0
    %p200 = por %p198, %p199
    %p201 = scmp.le.s32.totalorder 1, %s15
    %p202 = scmp.lt.s32.totalorder %s15, 3
    %p203 = pnand %p201, %p202
    %p204 = pneg %p203
    // Predicated region
    $region9: #{discriminator_forward.7} parent=5 // pred_check
      _
    $region10: #{discriminator_forward.7} parent=5 // pred_check_branch
      %206 = sbr.rel (%p203) target = $region12
    $region11: #{discriminator_forward.7} parent=5 // pred_region
      %s207 = ssub.s32 %s15, 1
      // Predicated region
      $region13: #{discriminator_forward.7} parent=11 // pred_check
        %p208 = pneg %p62
      $region14: #{discriminator_forward.7} parent=11 // pred_check_branch
        %210 = sbr.rel (%p208) target = $region16
      $region15: #{discriminator_forward.7} parent=11 // pred_region
        _
      $region16: #{discriminator_forward.7} parent=11 // pred_fallthru
        _
      // Predicated region
      $region17: #{discriminator_forward.7} parent=11 // pred_check
        %p211 = pneg %p83
      $region18: #{discriminator_forward.7} parent=11 // pred_check_branch
        %213 = sbr.rel (%p211) target = $region20
      $region19: #{discriminator_forward.7} parent=11 // pred_region
        _
      $region20: #{discriminator_forward.7} parent=11 // pred_fallthru
        _
      // Predicated region
      $region21: #{discriminator_forward.7} parent=11 // pred_check
        %p214 = pneg %p104
      $region22: #{discriminator_forward.7} parent=11 // pred_check_branch
        %216 = sbr.rel (%p214) target = $region24
      $region23: #{discriminator_forward.7} parent=11 // pred_region
        _
      $region24: #{discriminator_forward.7} parent=11 // pred_fallthru
        _
      // Predicated region
      $region25: #{discriminator_forward.7} parent=11 // pred_check
        %p217 = pneg %p125
      $region26: #{discriminator_forward.7} parent=11 // pred_check_branch
        %219 = sbr.rel (%p217) target = $region28
      $region27: #{discriminator_forward.7} parent=11 // pred_region
        _
      $region28: #{discriminator_forward.7} parent=11 // pred_fallthru
        _
      // Predicated region
      $region29: #{discriminator_forward.7} parent=11 // pred_check
        %p220 = pneg %p146
      $region30: #{discriminator_forward.7} parent=11 // pred_check_branch
        %222 = sbr.rel (%p220) target = $region32
      $region31: #{discriminator_forward.7} parent=11 // pred_region
        _
      $region32: #{discriminator_forward.7} parent=11 // pred_fallthru
        _
      // Predicated region
      $region33: #{discriminator_forward.7} parent=11 // pred_check
        %p223 = pneg %p167
      $region34: #{discriminator_forward.7} parent=11 // pred_check_branch
        %225 = sbr.rel (%p223) target = $region36
      $region35: #{discriminator_forward.7} parent=11 // pred_region
        _
      $region36: #{discriminator_forward.7} parent=11 // pred_fallthru
        _
    $region12: #{discriminator_forward.7} parent=5 // pred_fallthru
      _
    %p226 = scmp.lt.s32.totalorder %s15, 2
    // Predicated region
    $region37: #{discriminator_forward.7} parent=5 // pred_check
      %p227 = pneg %p226
    $region38: #{discriminator_forward.7} parent=5 // pred_check_branch
      %229 = sbr.rel (%p227) target = $region40
    $region39: #{discriminator_forward.7} parent=5 // pred_region
      // Predicated region
      $region41: #{discriminator_forward.7} parent=39 // pred_check
        %p230 = pneg %p35
      $region42: #{discriminator_forward.7} parent=39 // pred_check_branch
        %232 = sbr.rel (%p230) target = $region44
      $region43: #{discriminator_forward.7} parent=39 // pred_region
        %p233 = scmp.lt.s32.totalorder %s15, 1
        %s234 = scalar_select %p233, %s15, 1
        %s235 = smul.addr %s234, 128
        %s236 = smul.addr %s235, 4
        %s237 = scalar_lea.vmem %s0, %s236
      $region44: #{discriminator_forward.7} parent=39 // pred_fallthru
        _
    $region40: #{discriminator_forward.7} parent=5 // pred_fallthru
      _
    %p238 = scmp.le.s32.totalorder 1, %s15
    %p239 = scmp.lt.s32.totalorder %s15, 3
    %p240 = pnand %p238, %p239
    %p241 = pneg %p240
    // Predicated region
    $region45: #{discriminator_forward.7} parent=5 // pred_check
      _
    $region46: #{discriminator_forward.7} parent=5 // pred_check_branch
      %243 = sbr.rel (%p240) target = $region48
    $region47: #{discriminator_forward.7} parent=5 // pred_region
      %s244 = ssub.s32 %s15, 1
      %p245 = scmp.lt.s32.totalorder %s20, 1
      %s246 = scalar_select %p245, %s20, 1
      %s247 = smul.addr %s246, 128
      %s248 = smul.addr %s247, 4
      %s249 = scalar_lea.vmem %s0, %s248
      %p250 = pneg %p41
      %p251 = pneg %p38
      %p252 = pneg %p62
      %p253 = pneg %p59
      %p254 = pneg %p83
      %p255 = pneg %p80
      %p256 = pneg %p104
      %p257 = pneg %p101
      %p258 = pneg %p125
      %p259 = pneg %p122
      %p260 = pneg %p146
      %p261 = pneg %p143
      %p262 = pneg %p167
      %p263 = pneg %p164
      %p264 = pneg %p193
      %p265 = pneg %p190
      %p266 = scmp.lt.s32.totalorder %s20, 1
      %s267 = scalar_select %p266, %s20, 1
      %s268 = scalar_lea.vmem %s7, %s267
      %p269 = scmp.lt.s32.totalorder %s20, 1
      %s270 = scalar_select %p269, %s20, 1
      %s271 = smul.addr %s270, 128
      %s272 = smul.addr %s271, 4
      %s273 = scalar_lea.vmem %s0, %s272
      %p274 = scmp.lt.s32.totalorder %s20, 1
      %s275 = scalar_select %p274, %s20, 1
      %s276 = scalar_lea.vmem %s7, %s275
      %v278 = vld [vmem:[%s1] sm:$0xff]
      %v279 = vld [vmem:[%s1 + $0x8] sm:$0xff]
      %v280 = vld [vmem:[%s1 + $0x10] sm:$0xff]
      %v281 = vld [vmem:[%s1 + $0x18] sm:$0xff]
      %v282 = vld [vmem:[%s1 + $0x20] sm:$0xff]
      %v283 = vld [vmem:[%s1 + $0x28] sm:$0xff]
      %v284 = vld [vmem:[%s1 + $0x30] sm:$0xff]
      %v285 = vld [vmem:[%s1 + $0x38] sm:$0xff]
      %v286 = vld [vmem:[%s1 + $0x40] sm:$0xff]
      %v287 = vld [vmem:[%s1 + $0x48] sm:$0xff]
      %v288 = vld [vmem:[%s1 + $0x50] sm:$0xff]
      %v289 = vld [vmem:[%s1 + $0x58] sm:$0xff]
      %v290 = vld [vmem:[%s1 + $0x60] sm:$0xff]
      %v291 = vld [vmem:[%s1 + $0x68] sm:$0xff]
      %v292 = vld [vmem:[%s1 + $0x70] sm:$0xff]
      %v293 = vld [vmem:[%s1 + $0x78] sm:$0xff]
      %v294 = vld [vmem:[%s1 + $0x80] sm:$0xff]
      %v295 = vld [vmem:[%s1 + $0x88] sm:$0xff]
      %v296 = vld [vmem:[%s1 + $0x90] sm:$0xff]
      %v297 = vld [vmem:[%s1 + $0x98] sm:$0xff]
      %v298 = vld [vmem:[%s1 + $0xa0] sm:$0xff]
      %v299 = vld [vmem:[%s1 + $0xa8] sm:$0xff]
      %v300 = vld [vmem:[%s1 + $0xb0] sm:$0xff]
      %v301 = vld [vmem:[%s1 + $0xb8] sm:$0xff]
      %v302 = vld [vmem:[%s1 + $0xc0] sm:$0xff]
      %v303 = vld [vmem:[%s1 + $0xc8] sm:$0xff]
      %v304 = vld [vmem:[%s1 + $0xd0] sm:$0xff]
      %v305 = vld [vmem:[%s1 + $0xd8] sm:$0xff]
      %v306 = vld [vmem:[%s1 + $0xe0] sm:$0xff]
      %v307 = vld [vmem:[%s1 + $0xe8] sm:$0xff]
      %v308 = vld [vmem:[%s1 + $0xf0] sm:$0xff]
      %v309 = vld [vmem:[%s1 + $0xf8] sm:$0xff]
      %v310 = vld [vmem:[%s1 + $0x100] sm:$0xff]
      %v311 = vld [vmem:[%s1 + $0x108] sm:$0xff]
      %v312 = vld [vmem:[%s1 + $0x110] sm:$0xff]
      %v313 = vld [vmem:[%s1 + $0x118] sm:$0xff]
      %v314 = vld [vmem:[%s1 + $0x120] sm:$0xff]
      %v315 = vld [vmem:[%s1 + $0x128] sm:$0xff]
      %v316 = vld [vmem:[%s1 + $0x130] sm:$0xff]
      %v317 = vld [vmem:[%s1 + $0x138] sm:$0xff]
      %v318 = vld [vmem:[%s1 + $0x140] sm:$0xff]
      %v319 = vld [vmem:[%s1 + $0x148] sm:$0xff]
      %v320 = vld [vmem:[%s1 + $0x150] sm:$0xff]
      %v321 = vld [vmem:[%s1 + $0x158] sm:$0xff]
      %v322 = vld [vmem:[%s1 + $0x160] sm:$0xff]
      %v323 = vld [vmem:[%s1 + $0x168] sm:$0xff]
      %v324 = vld [vmem:[%s1 + $0x170] sm:$0xff]
      %v325 = vld [vmem:[%s1 + $0x178] sm:$0xff]
      %v326 = vld [vmem:[%s1 + $0x180] sm:$0xff]
      %v327 = vld [vmem:[%s1 + $0x188] sm:$0xff]
      %v328 = vld [vmem:[%s1 + $0x190] sm:$0xff]
      %v329 = vld [vmem:[%s1 + $0x198] sm:$0xff]
      %v330 = vld [vmem:[%s1 + $0x1a0] sm:$0xff]
      %v331 = vld [vmem:[%s1 + $0x1a8] sm:$0xff]
      %v332 = vld [vmem:[%s1 + $0x1b0] sm:$0xff]
      %v333 = vld [vmem:[%s1 + $0x1b8] sm:$0xff]
      %v334 = vld [vmem:[%s1 + $0x1c0] sm:$0xff]
      %v335 = vld [vmem:[%s1 + $0x1c8] sm:$0xff]
      %v336 = vld [vmem:[%s1 + $0x1d0] sm:$0xff]
      %v337 = vld [vmem:[%s1 + $0x1d8] sm:$0xff]
      %v338 = vld [vmem:[%s1 + $0x1e0] sm:$0xff]
      %v339 = vld [vmem:[%s1 + $0x1e8] sm:$0xff]
      %v340 = vld [vmem:[%s1 + $0x1f0] sm:$0xff]
      %v341 = vld [vmem:[%s1 + $0x1f8] sm:$0xff]
      %v342 = vld [vmem:[%s273] sm:$0xf]
      %v343 = vld [vmem:[%s273 + $0x4] sm:$0xf]
      %v344 = vld [vmem:[%s273 + $0x8] sm:$0xf]
      %v345 = vld [vmem:[%s273 + $0xc] sm:$0xf]
      %v346 = vld [vmem:[%s273 + $0x10] sm:$0xf]
      %v347 = vld [vmem:[%s273 + $0x14] sm:$0xf]
      %v348 = vld [vmem:[%s273 + $0x18] sm:$0xf]
      %v349 = vld [vmem:[%s273 + $0x1c] sm:$0xf]
      %v350 = vld [vmem:[%s273 + $0x20] sm:$0xf]
      %v351 = vld [vmem:[%s273 + $0x24] sm:$0xf]
      %v352 = vld [vmem:[%s273 + $0x28] sm:$0xf]
      %v353 = vld [vmem:[%s273 + $0x2c] sm:$0xf]
      %v354 = vld [vmem:[%s273 + $0x30] sm:$0xf]
      %v355 = vld [vmem:[%s273 + $0x34] sm:$0xf]
      %v356 = vld [vmem:[%s273 + $0x38] sm:$0xf]
      %v357 = vld [vmem:[%s273 + $0x3c] sm:$0xf]
      %v358 = vld [vmem:[%s273 + $0x40] sm:$0xf]
      %v359 = vld [vmem:[%s273 + $0x44] sm:$0xf]
      %v360 = vld [vmem:[%s273 + $0x48] sm:$0xf]
      %v361 = vld [vmem:[%s273 + $0x4c] sm:$0xf]
      %v362 = vld [vmem:[%s273 + $0x50] sm:$0xf]
      %v363 = vld [vmem:[%s273 + $0x54] sm:$0xf]
      %v364 = vld [vmem:[%s273 + $0x58] sm:$0xf]
      %v365 = vld [vmem:[%s273 + $0x5c] sm:$0xf]
      %v366 = vld [vmem:[%s273 + $0x60] sm:$0xf]
      %v367 = vld [vmem:[%s273 + $0x64] sm:$0xf]
      %v368 = vld [vmem:[%s273 + $0x68] sm:$0xf]
      %v369 = vld [vmem:[%s273 + $0x6c] sm:$0xf]
      %v370 = vld [vmem:[%s273 + $0x70] sm:$0xf]
      %v371 = vld [vmem:[%s273 + $0x74] sm:$0xf]
      %v372 = vld [vmem:[%s273 + $0x78] sm:$0xf]
      %v373 = vld [vmem:[%s273 + $0x7c] sm:$0xf]
      %v374 = vld [vmem:[%s273 + $0x80] sm:$0xf]
      %v375 = vld [vmem:[%s273 + $0x84] sm:$0xf]
      %v376 = vld [vmem:[%s273 + $0x88] sm:$0xf]
      %v377 = vld [vmem:[%s273 + $0x8c] sm:$0xf]
      %v378 = vld [vmem:[%s273 + $0x90] sm:$0xf]
      %v379 = vld [vmem:[%s273 + $0x94] sm:$0xf]
      %v380 = vld [vmem:[%s273 + $0x98] sm:$0xf]
      %v381 = vld [vmem:[%s273 + $0x9c] sm:$0xf]
      %v382 = vld [vmem:[%s273 + $0xa0] sm:$0xf]
      %v383 = vld [vmem:[%s273 + $0xa4] sm:$0xf]
      %v384 = vld [vmem:[%s273 + $0xa8] sm:$0xf]
      %v385 = vld [vmem:[%s273 + $0xac] sm:$0xf]
      %v386 = vld [vmem:[%s273 + $0xb0] sm:$0xf]
      %v387 = vld [vmem:[%s273 + $0xb4] sm:$0xf]
      %v388 = vld [vmem:[%s273 + $0xb8] sm:$0xf]
      %v389 = vld [vmem:[%s273 + $0xbc] sm:$0xf]
      %v390 = vld [vmem:[%s273 + $0xc0] sm:$0xf]
      %v391 = vld [vmem:[%s273 + $0xc4] sm:$0xf]
      %v392 = vld [vmem:[%s273 + $0xc8] sm:$0xf]
      %v393 = vld [vmem:[%s273 + $0xcc] sm:$0xf]
      %v394 = vld [vmem:[%s273 + $0xd0] sm:$0xf]
      %v395 = vld [vmem:[%s273 + $0xd4] sm:$0xf]
      %v396 = vld [vmem:[%s273 + $0xd8] sm:$0xf]
      %v397 = vld [vmem:[%s273 + $0xdc] sm:$0xf]
      %v398 = vld [vmem:[%s273 + $0xe0] sm:$0xf]
      %v399 = vld [vmem:[%s273 + $0xe4] sm:$0xf]
      %v400 = vld [vmem:[%s273 + $0xe8] sm:$0xf]
      %v401 = vld [vmem:[%s273 + $0xec] sm:$0xf]
      %v402 = vld [vmem:[%s273 + $0xf0] sm:$0xf]
      %v403 = vld [vmem:[%s273 + $0xf4] sm:$0xf]
      %v404 = vld [vmem:[%s273 + $0xf8] sm:$0xf]
      %v405 = vld [vmem:[%s273 + $0xfc] sm:$0xf]
      %v406 = vld [vmem:[%s273 + $0x100] sm:$0xf]
      %v407 = vld [vmem:[%s273 + $0x104] sm:$0xf]
      %v408 = vld [vmem:[%s273 + $0x108] sm:$0xf]
      %v409 = vld [vmem:[%s273 + $0x10c] sm:$0xf]
      %v410 = vld [vmem:[%s273 + $0x110] sm:$0xf]
      %v411 = vld [vmem:[%s273 + $0x114] sm:$0xf]
      %v412 = vld [vmem:[%s273 + $0x118] sm:$0xf]
      %v413 = vld [vmem:[%s273 + $0x11c] sm:$0xf]
      %v414 = vld [vmem:[%s273 + $0x120] sm:$0xf]
      %v415 = vld [vmem:[%s273 + $0x124] sm:$0xf]
      %v416 = vld [vmem:[%s273 + $0x128] sm:$0xf]
      %v417 = vld [vmem:[%s273 + $0x12c] sm:$0xf]
      %v418 = vld [vmem:[%s273 + $0x130] sm:$0xf]
      %v419 = vld [vmem:[%s273 + $0x134] sm:$0xf]
      %v420 = vld [vmem:[%s273 + $0x138] sm:$0xf]
      %v421 = vld [vmem:[%s273 + $0x13c] sm:$0xf]
      %v422 = vld [vmem:[%s273 + $0x140] sm:$0xf]
      %v423 = vld [vmem:[%s273 + $0x144] sm:$0xf]
      %v424 = vld [vmem:[%s273 + $0x148] sm:$0xf]
      %v425 = vld [vmem:[%s273 + $0x14c] sm:$0xf]
      %v426 = vld [vmem:[%s273 + $0x150] sm:$0xf]
      %v427 = vld [vmem:[%s273 + $0x154] sm:$0xf]
      %v428 = vld [vmem:[%s273 + $0x158] sm:$0xf]
      %v429 = vld [vmem:[%s273 + $0x15c] sm:$0xf]
      %v430 = vld [vmem:[%s273 + $0x160] sm:$0xf]
      %v431 = vld [vmem:[%s273 + $0x164] sm:$0xf]
      %v432 = vld [vmem:[%s273 + $0x168] sm:$0xf]
      %v433 = vld [vmem:[%s273 + $0x16c] sm:$0xf]
      %v434 = vld [vmem:[%s273 + $0x170] sm:$0xf]
      %v435 = vld [vmem:[%s273 + $0x174] sm:$0xf]
      %v436 = vld [vmem:[%s273 + $0x178] sm:$0xf]
      %v437 = vld [vmem:[%s273 + $0x17c] sm:$0xf]
      %v438 = vld [vmem:[%s273 + $0x180] sm:$0xf]
      %v439 = vld [vmem:[%s273 + $0x184] sm:$0xf]
      %v440 = vld [vmem:[%s273 + $0x188] sm:$0xf]
      %v441 = vld [vmem:[%s273 + $0x18c] sm:$0xf]
      %v442 = vld [vmem:[%s273 + $0x190] sm:$0xf]
      %v443 = vld [vmem:[%s273 + $0x194] sm:$0xf]
      %v444 = vld [vmem:[%s273 + $0x198] sm:$0xf]
      %v445 = vld [vmem:[%s273 + $0x19c] sm:$0xf]
      %v446 = vld [vmem:[%s273 + $0x1a0] sm:$0xf]
      %v447 = vld [vmem:[%s273 + $0x1a4] sm:$0xf]
      %v448 = vld [vmem:[%s273 + $0x1a8] sm:$0xf]
      %v449 = vld [vmem:[%s273 + $0x1ac] sm:$0xf]
      %v450 = vld [vmem:[%s273 + $0x1b0] sm:$0xf]
      %v451 = vld [vmem:[%s273 + $0x1b4] sm:$0xf]
      %v452 = vld [vmem:[%s273 + $0x1b8] sm:$0xf]
      %v453 = vld [vmem:[%s273 + $0x1bc] sm:$0xf]
      %v454 = vld [vmem:[%s273 + $0x1c0] sm:$0xf]
      %v455 = vld [vmem:[%s273 + $0x1c4] sm:$0xf]
      %v456 = vld [vmem:[%s273 + $0x1c8] sm:$0xf]
      %v457 = vld [vmem:[%s273 + $0x1cc] sm:$0xf]
      %v458 = vld [vmem:[%s273 + $0x1d0] sm:$0xf]
      %v459 = vld [vmem:[%s273 + $0x1d4] sm:$0xf]
      %v460 = vld [vmem:[%s273 + $0x1d8] sm:$0xf]
      %v461 = vld [vmem:[%s273 + $0x1dc] sm:$0xf]
      %v462 = vld [vmem:[%s273 + $0x1e0] sm:$0xf]
      %v463 = vld [vmem:[%s273 + $0x1e4] sm:$0xf]
      %v464 = vld [vmem:[%s273 + $0x1e8] sm:$0xf]
      %v465 = vld [vmem:[%s273 + $0x1ec] sm:$0xf]
      %v466 = vld [vmem:[%s273 + $0x1f0] sm:$0xf]
      %v467 = vld [vmem:[%s273 + $0x1f4] sm:$0xf]
      %v468 = vld [vmem:[%s273 + $0x1f8] sm:$0xf]
      %v469 = vld [vmem:[%s273 + $0x1fc] sm:$0xf]
      %v470 = vld [vmem:[%s2] sm:$0xff]
      %v471 = vld [vmem:[%s2 + $0x8] sm:$0xff]
      %v472 = vld [vmem:[%s2 + $0x10] sm:$0xff]
      %v473 = vld [vmem:[%s2 + $0x18] sm:$0xff]
      %v474 = vld [vmem:[%s2 + $0x20] sm:$0xff]
      %v475 = vld [vmem:[%s2 + $0x28] sm:$0xff]
      %v476 = vld [vmem:[%s2 + $0x30] sm:$0xff]
      %v477 = vld [vmem:[%s2 + $0x38] sm:$0xff]
      %v478 = vld [vmem:[%s2 + $0x40] sm:$0xff]
      %v479 = vld [vmem:[%s2 + $0x48] sm:$0xff]
      %v480 = vld [vmem:[%s2 + $0x50] sm:$0xff]
      %v481 = vld [vmem:[%s2 + $0x58] sm:$0xff]
      %v482 = vld [vmem:[%s2 + $0x60] sm:$0xff]
      %v483 = vld [vmem:[%s2 + $0x68] sm:$0xff]
      %v484 = vld [vmem:[%s2 + $0x70] sm:$0xff]
      %v485 = vld [vmem:[%s2 + $0x78] sm:$0xff]
      %487 = vset.pattern.permute.xlu0 0
      %488 = vperm.xlu0 %487, %v470
      %v489 = vpop.permute.xlu0 %488
      %492 = vset.pattern.permute.xlu0 0
      %493 = vperm.xlu0 %492, %v471
      %v494 = vpop.permute.xlu0 %493
      %497 = vset.pattern.permute.xlu0 0
      %498 = vperm.xlu0 %497, %v472
      %v499 = vpop.permute.xlu0 %498
      %502 = vset.pattern.permute.xlu0 0
      %503 = vperm.xlu0 %502, %v473
      %v504 = vpop.permute.xlu0 %503
      %507 = vset.pattern.permute.xlu0 0
      %508 = vperm.xlu0 %507, %v474
      %v509 = vpop.permute.xlu0 %508
      %512 = vset.pattern.permute.xlu0 0
      %513 = vperm.xlu0 %512, %v475
      %v514 = vpop.permute.xlu0 %513
      %517 = vset.pattern.permute.xlu0 0
      %518 = vperm.xlu0 %517, %v476
      %v519 = vpop.permute.xlu0 %518
      %522 = vset.pattern.permute.xlu0 0
      %523 = vperm.xlu0 %522, %v477
      %v524 = vpop.permute.xlu0 %523
      %527 = vset.pattern.permute.xlu0 0
      %528 = vperm.xlu0 %527, %v478
      %v529 = vpop.permute.xlu0 %528
      %532 = vset.pattern.permute.xlu0 0
      %533 = vperm.xlu0 %532, %v479
      %v534 = vpop.permute.xlu0 %533
      %537 = vset.pattern.permute.xlu0 0
      %538 = vperm.xlu0 %537, %v480
      %v539 = vpop.permute.xlu0 %538
      %542 = vset.pattern.permute.xlu0 0
      %543 = vperm.xlu0 %542, %v481
      %v544 = vpop.permute.xlu0 %543
      %547 = vset.pattern.permute.xlu0 0
      %548 = vperm.xlu0 %547, %v482
      %v549 = vpop.permute.xlu0 %548
      %552 = vset.pattern.permute.xlu0 0
      %553 = vperm.xlu0 %552, %v483
      %v554 = vpop.permute.xlu0 %553
      %557 = vset.pattern.permute.xlu0 0
      %558 = vperm.xlu0 %557, %v484
      %v559 = vpop.permute.xlu0 %558
      %562 = vset.pattern.permute.xlu0 0
      %563 = vperm.xlu0 %562, %v485
      %v564 = vpop.permute.xlu0 %563
      %v630 = vunpack.c.l.b16 %v278
      %v631 = vunpack.c.h.b16 %v278
      %v632 = vunpack.c.l.b16 %v279
      %v633 = vunpack.c.h.b16 %v279
      %v634 = vunpack.c.l.b16 %v280
      %v635 = vunpack.c.h.b16 %v280
      %v636 = vunpack.c.l.b16 %v281
      %v637 = vunpack.c.h.b16 %v281
      %v638 = vunpack.c.l.b16 %v282
      %v639 = vunpack.c.h.b16 %v282
      %v640 = vunpack.c.l.b16 %v283
      %v641 = vunpack.c.h.b16 %v283
      %v642 = vunpack.c.l.b16 %v284
      %v643 = vunpack.c.h.b16 %v284
      %v644 = vunpack.c.l.b16 %v285
      %v645 = vunpack.c.h.b16 %v285
      %v646 = vunpack.c.l.b16 %v286
      %v647 = vunpack.c.h.b16 %v286
      %v648 = vunpack.c.l.b16 %v287
      %v649 = vunpack.c.h.b16 %v287
      %v650 = vunpack.c.l.b16 %v288
      %v651 = vunpack.c.h.b16 %v288
      %v652 = vunpack.c.l.b16 %v289
      %v653 = vunpack.c.h.b16 %v289
      %v654 = vunpack.c.l.b16 %v290
      %v655 = vunpack.c.h.b16 %v290
      %v656 = vunpack.c.l.b16 %v291
      %v657 = vunpack.c.h.b16 %v291
      %v658 = vunpack.c.l.b16 %v292
      %v659 = vunpack.c.h.b16 %v292
      %v660 = vunpack.c.l.b16 %v293
      %v661 = vunpack.c.h.b16 %v293
      %v662 = vunpack.c.l.b16 %v294
      %v663 = vunpack.c.h.b16 %v294
      %v664 = vunpack.c.l.b16 %v295
      %v665 = vunpack.c.h.b16 %v295
      %v666 = vunpack.c.l.b16 %v296
      %v667 = vunpack.c.h.b16 %v296
      %v668 = vunpack.c.l.b16 %v297
      %v669 = vunpack.c.h.b16 %v297
      %v670 = vunpack.c.l.b16 %v298
      %v671 = vunpack.c.h.b16 %v298
      %v672 = vunpack.c.l.b16 %v299
      %v673 = vunpack.c.h.b16 %v299
      %v674 = vunpack.c.l.b16 %v300
      %v675 = vunpack.c.h.b16 %v300
      %v676 = vunpack.c.l.b16 %v301
      %v677 = vunpack.c.h.b16 %v301
      %v678 = vunpack.c.l.b16 %v302
      %v679 = vunpack.c.h.b16 %v302
      %v680 = vunpack.c.l.b16 %v303
      %v681 = vunpack.c.h.b16 %v303
      %v682 = vunpack.c.l.b16 %v304
      %v683 = vunpack.c.h.b16 %v304
      %v684 = vunpack.c.l.b16 %v305
      %v685 = vunpack.c.h.b16 %v305
      %v686 = vunpack.c.l.b16 %v306
      %v687 = vunpack.c.h.b16 %v306
      %v688 = vunpack.c.l.b16 %v307
      %v689 = vunpack.c.h.b16 %v307
      %v690 = vunpack.c.l.b16 %v308
      %v691 = vunpack.c.h.b16 %v308
      %v692 = vunpack.c.l.b16 %v309
      %v693 = vunpack.c.h.b16 %v309
      %v694 = vunpack.c.l.b16 %v310
      %v695 = vunpack.c.h.b16 %v310
      %v696 = vunpack.c.l.b16 %v311
      %v697 = vunpack.c.h.b16 %v311
      %v698 = vunpack.c.l.b16 %v312
      %v699 = vunpack.c.h.b16 %v312
      %v700 = vunpack.c.l.b16 %v313
      %v701 = vunpack.c.h.b16 %v313
      %v702 = vunpack.c.l.b16 %v314
      %v703 = vunpack.c.h.b16 %v314
      %v704 = vunpack.c.l.b16 %v315
      %v705 = vunpack.c.h.b16 %v315
      %v706 = vunpack.c.l.b16 %v316
      %v707 = vunpack.c.h.b16 %v316
      %v708 = vunpack.c.l.b16 %v317
      %v709 = vunpack.c.h.b16 %v317
      %v710 = vunpack.c.l.b16 %v318
      %v711 = vunpack.c.h.b16 %v318
      %v712 = vunpack.c.l.b16 %v319
      %v713 = vunpack.c.h.b16 %v319
      %v714 = vunpack.c.l.b16 %v320
      %v715 = vunpack.c.h.b16 %v320
      %v716 = vunpack.c.l.b16 %v321
      %v717 = vunpack.c.h.b16 %v321
      %v718 = vunpack.c.l.b16 %v322
      %v719 = vunpack.c.h.b16 %v322
      %v720 = vunpack.c.l.b16 %v323
      %v721 = vunpack.c.h.b16 %v323
      %v722 = vunpack.c.l.b16 %v324
      %v723 = vunpack.c.h.b16 %v324
      %v724 = vunpack.c.l.b16 %v325
      %v725 = vunpack.c.h.b16 %v325
      %v726 = vunpack.c.l.b16 %v326
      %v727 = vunpack.c.h.b16 %v326
      %v728 = vunpack.c.l.b16 %v327
      %v729 = vunpack.c.h.b16 %v327
      %v730 = vunpack.c.l.b16 %v328
      %v731 = vunpack.c.h.b16 %v328
      %v732 = vunpack.c.l.b16 %v329
      %v733 = vunpack.c.h.b16 %v329
      %v734 = vunpack.c.l.b16 %v330
      %v735 = vunpack.c.h.b16 %v330
      %v736 = vunpack.c.l.b16 %v331
      %v737 = vunpack.c.h.b16 %v331
      %v738 = vunpack.c.l.b16 %v332
      %v739 = vunpack.c.h.b16 %v332
      %v740 = vunpack.c.l.b16 %v333
      %v741 = vunpack.c.h.b16 %v333
      %v742 = vunpack.c.l.b16 %v334
      %v743 = vunpack.c.h.b16 %v334
      %v744 = vunpack.c.l.b16 %v335
      %v745 = vunpack.c.h.b16 %v335
      %v746 = vunpack.c.l.b16 %v336
      %v747 = vunpack.c.h.b16 %v336
      %v748 = vunpack.c.l.b16 %v337
      %v749 = vunpack.c.h.b16 %v337
      %v750 = vunpack.c.l.b16 %v338
      %v751 = vunpack.c.h.b16 %v338
      %v752 = vunpack.c.l.b16 %v339
      %v753 = vunpack.c.h.b16 %v339
      %v754 = vunpack.c.l.b16 %v340
      %v755 = vunpack.c.h.b16 %v340
      %v756 = vunpack.c.l.b16 %v341
      %v757 = vunpack.c.h.b16 %v341
      %v758 = vpack.c.b16 %v638, %v630
      %v759 = vpack.c.b16 %v639, %v631
      %v760 = vpack.c.b16 %v640, %v632
      %v761 = vpack.c.b16 %v641, %v633
      %v762 = vpack.c.b16 %v642, %v634
      %v763 = vpack.c.b16 %v643, %v635
      %v764 = vpack.c.b16 %v644, %v636
      %v765 = vpack.c.b16 %v645, %v637
      %v766 = vpack.c.b16 %v654, %v646
      %v767 = vpack.c.b16 %v655, %v647
      %v768 = vpack.c.b16 %v656, %v648
      %v769 = vpack.c.b16 %v657, %v649
      %v770 = vpack.c.b16 %v658, %v650
      %v771 = vpack.c.b16 %v659, %v651
      %v772 = vpack.c.b16 %v660, %v652
      %v773 = vpack.c.b16 %v661, %v653
      %v774 = vpack.c.b16 %v670, %v662
      %v775 = vpack.c.b16 %v671, %v663
      %v776 = vpack.c.b16 %v672, %v664
      %v777 = vpack.c.b16 %v673, %v665
      %v778 = vpack.c.b16 %v674, %v666
      %v779 = vpack.c.b16 %v675, %v667
      %v780 = vpack.c.b16 %v676, %v668
      %v781 = vpack.c.b16 %v677, %v669
      %v782 = vpack.c.b16 %v686, %v678
      %v783 = vpack.c.b16 %v687, %v679
      %v784 = vpack.c.b16 %v688, %v680
      %v785 = vpack.c.b16 %v689, %v681
      %v786 = vpack.c.b16 %v690, %v682
      %v787 = vpack.c.b16 %v691, %v683
      %v788 = vpack.c.b16 %v692, %v684
      %v789 = vpack.c.b16 %v693, %v685
      %v790 = vpack.c.b16 %v702, %v694
      %v791 = vpack.c.b16 %v703, %v695
      %v792 = vpack.c.b16 %v704, %v696
      %v793 = vpack.c.b16 %v705, %v697
      %v794 = vpack.c.b16 %v706, %v698
      %v795 = vpack.c.b16 %v707, %v699
      %v796 = vpack.c.b16 %v708, %v700
      %v797 = vpack.c.b16 %v709, %v701
      %v798 = vpack.c.b16 %v718, %v710
      %v799 = vpack.c.b16 %v719, %v711
      %v800 = vpack.c.b16 %v720, %v712
      %v801 = vpack.c.b16 %v721, %v713
      %v802 = vpack.c.b16 %v722, %v714
      %v803 = vpack.c.b16 %v723, %v715
      %v804 = vpack.c.b16 %v724, %v716
      %v805 = vpack.c.b16 %v725, %v717
      %v806 = vpack.c.b16 %v734, %v726
      %v807 = vpack.c.b16 %v735, %v727
      %v808 = vpack.c.b16 %v736, %v728
      %v809 = vpack.c.b16 %v737, %v729
      %v810 = vpack.c.b16 %v738, %v730
      %v811 = vpack.c.b16 %v739, %v731
      %v812 = vpack.c.b16 %v740, %v732
      %v813 = vpack.c.b16 %v741, %v733
      %v814 = vpack.c.b16 %v750, %v742
      %v815 = vpack.c.b16 %v751, %v743
      %v816 = vpack.c.b16 %v752, %v744
      %v817 = vpack.c.b16 %v753, %v745
      %v818 = vpack.c.b16 %v754, %v746
      %v819 = vpack.c.b16 %v755, %v747
      %v820 = vpack.c.b16 %v756, %v748
      %v821 = vpack.c.b16 %v757, %v749
      %v1014 = vunpack.c.l.b16 %v342
      %v1015 = vunpack.c.l.b16 %v343
      %v1016 = vunpack.c.l.b16 %v344
      %v1017 = vunpack.c.l.b16 %v345
      %v1018 = vunpack.c.l.b16 %v346
      %v1019 = vunpack.c.l.b16 %v347
      %v1020 = vunpack.c.l.b16 %v348
      %v1021 = vunpack.c.l.b16 %v349
      %v1022 = vunpack.c.l.b16 %v350
      %v1023 = vunpack.c.l.b16 %v351
      %v1024 = vunpack.c.l.b16 %v352
      %v1025 = vunpack.c.l.b16 %v353
      %v1026 = vunpack.c.l.b16 %v354
      %v1027 = vunpack.c.l.b16 %v355
      %v1028 = vunpack.c.l.b16 %v356
      %v1029 = vunpack.c.l.b16 %v357
      %v1030 = vunpack.c.l.b16 %v358
      %v1031 = vunpack.c.l.b16 %v359
      %v1032 = vunpack.c.l.b16 %v360
      %v1033 = vunpack.c.l.b16 %v361
      %v1034 = vunpack.c.l.b16 %v362
      %v1035 = vunpack.c.l.b16 %v363
      %v1036 = vunpack.c.l.b16 %v364
      %v1037 = vunpack.c.l.b16 %v365
      %v1038 = vunpack.c.l.b16 %v366
      %v1039 = vunpack.c.l.b16 %v367
      %v1040 = vunpack.c.l.b16 %v368
      %v1041 = vunpack.c.l.b16 %v369
      %v1042 = vunpack.c.l.b16 %v370
      %v1043 = vunpack.c.l.b16 %v371
      %v1044 = vunpack.c.l.b16 %v372
      %v1045 = vunpack.c.l.b16 %v373
      %v1046 = vunpack.c.l.b16 %v374
      %v1047 = vunpack.c.l.b16 %v375
      %v1048 = vunpack.c.l.b16 %v376
      %v1049 = vunpack.c.l.b16 %v377
      %v1050 = vunpack.c.l.b16 %v378
      %v1051 = vunpack.c.l.b16 %v379
      %v1052 = vunpack.c.l.b16 %v380
      %v1053 = vunpack.c.l.b16 %v381
      %v1054 = vunpack.c.l.b16 %v382
      %v1055 = vunpack.c.l.b16 %v383
      %v1056 = vunpack.c.l.b16 %v384
      %v1057 = vunpack.c.l.b16 %v385
      %v1058 = vunpack.c.l.b16 %v386
      %v1059 = vunpack.c.l.b16 %v387
      %v1060 = vunpack.c.l.b16 %v388
      %v1061 = vunpack.c.l.b16 %v389
      %v1062 = vunpack.c.l.b16 %v390
      %v1063 = vunpack.c.l.b16 %v391
      %v1064 = vunpack.c.l.b16 %v392
      %v1065 = vunpack.c.l.b16 %v393
      %v1066 = vunpack.c.l.b16 %v394
      %v1067 = vunpack.c.l.b16 %v395
      %v1068 = vunpack.c.l.b16 %v396
      %v1069 = vunpack.c.l.b16 %v397
      %v1070 = vunpack.c.l.b16 %v398
      %v1071 = vunpack.c.l.b16 %v399
      %v1072 = vunpack.c.l.b16 %v400
      %v1073 = vunpack.c.l.b16 %v401
      %v1074 = vunpack.c.l.b16 %v402
      %v1075 = vunpack.c.l.b16 %v403
      %v1076 = vunpack.c.l.b16 %v404
      %v1077 = vunpack.c.l.b16 %v405
      %v1078 = vunpack.c.l.b16 %v406
      %v1079 = vunpack.c.l.b16 %v407
      %v1080 = vunpack.c.l.b16 %v408
      %v1081 = vunpack.c.l.b16 %v409
      %v1082 = vunpack.c.l.b16 %v410
      %v1083 = vunpack.c.l.b16 %v411
      %v1084 = vunpack.c.l.b16 %v412
      %v1085 = vunpack.c.l.b16 %v413
      %v1086 = vunpack.c.l.b16 %v414
      %v1087 = vunpack.c.l.b16 %v415
      %v1088 = vunpack.c.l.b16 %v416
      %v1089 = vunpack.c.l.b16 %v417
      %v1090 = vunpack.c.l.b16 %v418
      %v1091 = vunpack.c.l.b16 %v419
      %v1092 = vunpack.c.l.b16 %v420
      %v1093 = vunpack.c.l.b16 %v421
      %v1094 = vunpack.c.l.b16 %v422
      %v1095 = vunpack.c.l.b16 %v423
      %v1096 = vunpack.c.l.b16 %v424
      %v1097 = vunpack.c.l.b16 %v425
      %v1098 = vunpack.c.l.b16 %v426
      %v1099 = vunpack.c.l.b16 %v427
      %v1100 = vunpack.c.l.b16 %v428
      %v1101 = vunpack.c.l.b16 %v429
      %v1102 = vunpack.c.l.b16 %v430
      %v1103 = vunpack.c.l.b16 %v431
      %v1104 = vunpack.c.l.b16 %v432
      %v1105 = vunpack.c.l.b16 %v433
      %v1106 = vunpack.c.l.b16 %v434
      %v1107 = vunpack.c.l.b16 %v435
      %v1108 = vunpack.c.l.b16 %v436
      %v1109 = vunpack.c.l.b16 %v437
      %v1110 = vunpack.c.l.b16 %v438
      %v1111 = vunpack.c.l.b16 %v439
      %v1112 = vunpack.c.l.b16 %v440
      %v1113 = vunpack.c.l.b16 %v441
      %v1114 = vunpack.c.l.b16 %v442
      %v1115 = vunpack.c.l.b16 %v443
      %v1116 = vunpack.c.l.b16 %v444
      %v1117 = vunpack.c.l.b16 %v445
      %v1118 = vunpack.c.l.b16 %v446
      %v1119 = vunpack.c.l.b16 %v447
      %v1120 = vunpack.c.l.b16 %v448
      %v1121 = vunpack.c.l.b16 %v449
      %v1122 = vunpack.c.l.b16 %v450
      %v1123 = vunpack.c.l.b16 %v451
      %v1124 = vunpack.c.l.b16 %v452
      %v1125 = vunpack.c.l.b16 %v453
      %v1126 = vunpack.c.l.b16 %v454
      %v1127 = vunpack.c.l.b16 %v455
      %v1128 = vunpack.c.l.b16 %v456
      %v1129 = vunpack.c.l.b16 %v457
      %v1130 = vunpack.c.l.b16 %v458
      %v1131 = vunpack.c.l.b16 %v459
      %v1132 = vunpack.c.l.b16 %v460
      %v1133 = vunpack.c.l.b16 %v461
      %v1134 = vunpack.c.l.b16 %v462
      %v1135 = vunpack.c.l.b16 %v463
      %v1136 = vunpack.c.l.b16 %v464
      %v1137 = vunpack.c.l.b16 %v465
      %v1138 = vunpack.c.l.b16 %v466
      %v1139 = vunpack.c.l.b16 %v467
      %v1140 = vunpack.c.l.b16 %v468
      %v1141 = vunpack.c.l.b16 %v469
      %v1142 = vpack.c.b16 %v1015, %v1014
      %v1143 = vpack.c.b16 %v1017, %v1016
      %v1144 = vpack.c.b16 %v1019, %v1018
      %v1145 = vpack.c.b16 %v1021, %v1020
      %v1146 = vpack.c.b16 %v1023, %v1022
      %v1147 = vpack.c.b16 %v1025, %v1024
      %v1148 = vpack.c.b16 %v1027, %v1026
      %v1149 = vpack.c.b16 %v1029, %v1028
      %v1150 = vpack.c.b16 %v1031, %v1030
      %v1151 = vpack.c.b16 %v1033, %v1032
      %v1152 = vpack.c.b16 %v1035, %v1034
      %v1153 = vpack.c.b16 %v1037, %v1036
      %v1154 = vpack.c.b16 %v1039, %v1038
      %v1155 = vpack.c.b16 %v1041, %v1040
      %v1156 = vpack.c.b16 %v1043, %v1042
      %v1157 = vpack.c.b16 %v1045, %v1044
      %v1158 = vpack.c.b16 %v1047, %v1046
      %v1159 = vpack.c.b16 %v1049, %v1048
      %v1160 = vpack.c.b16 %v1051, %v1050
      %v1161 = vpack.c.b16 %v1053, %v1052
      %v1162 = vpack.c.b16 %v1055, %v1054
      %v1163 = vpack.c.b16 %v1057, %v1056
      %v1164 = vpack.c.b16 %v1059, %v1058
      %v1165 = vpack.c.b16 %v1061, %v1060
      %v1166 = vpack.c.b16 %v1063, %v1062
      %v1167 = vpack.c.b16 %v1065, %v1064
      %v1168 = vpack.c.b16 %v1067, %v1066
      %v1169 = vpack.c.b16 %v1069, %v1068
      %v1170 = vpack.c.b16 %v1071, %v1070
      %v1171 = vpack.c.b16 %v1073, %v1072
      %v1172 = vpack.c.b16 %v1075, %v1074
      %v1173 = vpack.c.b16 %v1077, %v1076
      %v1174 = vpack.c.b16 %v1079, %v1078
      %v1175 = vpack.c.b16 %v1081, %v1080
      %v1176 = vpack.c.b16 %v1083, %v1082
      %v1177 = vpack.c.b16 %v1085, %v1084
      %v1178 = vpack.c.b16 %v1087, %v1086
      %v1179 = vpack.c.b16 %v1089, %v1088
      %v1180 = vpack.c.b16 %v1091, %v1090
      %v1181 = vpack.c.b16 %v1093, %v1092
      %v1182 = vpack.c.b16 %v1095, %v1094
      %v1183 = vpack.c.b16 %v1097, %v1096
      %v1184 = vpack.c.b16 %v1099, %v1098
      %v1185 = vpack.c.b16 %v1101, %v1100
      %v1186 = vpack.c.b16 %v1103, %v1102
      %v1187 = vpack.c.b16 %v1105, %v1104
      %v1188 = vpack.c.b16 %v1107, %v1106
      %v1189 = vpack.c.b16 %v1109, %v1108
      %v1190 = vpack.c.b16 %v1111, %v1110
      %v1191 = vpack.c.b16 %v1113, %v1112
      %v1192 = vpack.c.b16 %v1115, %v1114
      %v1193 = vpack.c.b16 %v1117, %v1116
      %v1194 = vpack.c.b16 %v1119, %v1118
      %v1195 = vpack.c.b16 %v1121, %v1120
      %v1196 = vpack.c.b16 %v1123, %v1122
      %v1197 = vpack.c.b16 %v1125, %v1124
      %v1198 = vpack.c.b16 %v1127, %v1126
      %v1199 = vpack.c.b16 %v1129, %v1128
      %v1200 = vpack.c.b16 %v1131, %v1130
      %v1201 = vpack.c.b16 %v1133, %v1132
      %v1202 = vpack.c.b16 %v1135, %v1134
      %v1203 = vpack.c.b16 %v1137, %v1136
      %v1204 = vpack.c.b16 %v1139, %v1138
      %v1205 = vpack.c.b16 %v1141, %v1140
      %1270 = vmatprep.subr.bf16.mxu0 0
      %1271 = vmatpush1.bf16.msra.mxu0 %v1142
      %1272 = vmatprep.subr.bf16.mxu0 0
      %1273 = vmatpush1.bf16.msra.mxu0 %v1143
      %1274 = vmatprep.subr.bf16.mxu0 0
      %1275 = vmatpush1.bf16.msra.mxu0 %v1144
      %1276 = vmatprep.subr.bf16.mxu0 0
      %1277 = vmatpush1.bf16.msra.mxu0 %v1145
      %1278 = vmatprep.subr.bf16.mxu0 0
      %1279 = vmatpush1.bf16.msra.mxu0 %v1146
      %1280 = vmatprep.subr.bf16.mxu0 0
      %1281 = vmatpush1.bf16.msra.mxu0 %v1147
      %1282 = vmatprep.subr.bf16.mxu0 0
      %1283 = vmatpush1.bf16.msra.mxu0 %v1148
      %1284 = vmatprep.subr.bf16.mxu0 0
      %1285 = vmatpush1.bf16.msra.mxu0 %v1149
      %1286 = vmatprep.subr.bf16.mxu0 0
      %1287 = vmatpush1.bf16.msra.mxu0 %v1150
      %1288 = vmatprep.subr.bf16.mxu0 0
      %1289 = vmatpush1.bf16.msra.mxu0 %v1151
      %1290 = vmatprep.subr.bf16.mxu0 0
      %1291 = vmatpush1.bf16.msra.mxu0 %v1152
      %1292 = vmatprep.subr.bf16.mxu0 0
      %1293 = vmatpush1.bf16.msra.mxu0 %v1153
      %1294 = vmatprep.subr.bf16.mxu0 0
      %1295 = vmatpush1.bf16.msra.mxu0 %v1154
      %1296 = vmatprep.subr.bf16.mxu0 0
      %1297 = vmatpush1.bf16.msra.mxu0 %v1155
      %1298 = vmatprep.subr.bf16.mxu0 0
      %1299 = vmatpush1.bf16.msra.mxu0 %v1156
      %1300 = vmatprep.subr.bf16.mxu0 0
      %1301 = vmatpush1.bf16.msra.mxu0 %v1157
      %1302 = vmatprep.mubr.bf16.mxu0 %v759
      %1303 = vmatmul.mubr.bf16.gmra.mrb[0].mxu0 %v758
      %v1304 = vpop.f32.mrb[0].mxu0
      %v1305 = vadd.f32 %v489, %v1304
      %v1306 = vpop.f32.mrb[0].mxu0
      %v1307 = vpop.f32.mrb[0].mxu0
      %v1308 = vadd.f32 %v494, %v1307
      %v1309 = vpop.f32.mrb[0].mxu0
      %1310 = vmatprep.mubr.bf16.mxu0 %v767
      %1311 = vmatmul.mubr.bf16.gmra.mrb[0].mxu0 %v766
      %v1312 = vpop.f32.mrb[0].mxu0
      %v1313 = vadd.f32 %v499, %v1312
      %v1314 = vpop.f32.mrb[0].mxu0
      %v1315 = vpop.f32.mrb[0].mxu0
      %v1316 = vadd.f32 %v504, %v1315
      %v1317 = vpop.f32.mrb[0].mxu0
      %1318 = vmatprep.mubr.bf16.mxu0 %v775
      %1319 = vmatmul.mubr.bf16.gmra.mrb[0].mxu0 %v774
      %v1320 = vpop.f32.mrb[0].mxu0
      %v1321 = vadd.f32 %v509, %v1320
      %v1322 = vpop.f32.mrb[0].mxu0
      %v1323 = vpop.f32.mrb[0].mxu0
      %v1324 = vadd.f32 %v514, %v1323
      %v1325 = vpop.f32.mrb[0].mxu0
      %1326 = vmatprep.mubr.bf16.mxu0 %v783
      %1327 = vmatmul.mubr.bf16.gmra.mrb[0].mxu0 %v782
      %v1328 = vpop.f32.mrb[0].mxu0
      %v1329 = vadd.f32 %v519, %v1328
      %v1330 = vpop.f32.mrb[0].mxu0
      %v1331 = vpop.f32.mrb[0].mxu0
      %v1332 = vadd.f32 %v524, %v1331
      %v1333 = vpop.f32.mrb[0].mxu0
      %1334 = vmatprep.mubr.bf16.mxu0 %v791
      %1335 = vmatmul.mubr.bf16.gmra.mrb[0].mxu0 %v790
      %v1336 = vpop.f32.mrb[0].mxu0
      %v1337 = vadd.f32 %v529, %v1336
      %v1338 = vpop.f32.mrb[0].mxu0
      %v1339 = vpop.f32.mrb[0].mxu0
      %v1340 = vadd.f32 %v534, %v1339
      %v1341 = vpop.f32.mrb[0].mxu0
      %1342 = vmatprep.mubr.bf16.mxu0 %v799
      %1343 = vmatmul.mubr.bf16.gmra.mrb[0].mxu0 %v798
      %v1344 = vpop.f32.mrb[0].mxu0
      %v1345 = vadd.f32 %v539, %v1344
      %v1346 = vpop.f32.mrb[0].mxu0
      %v1347 = vpop.f32.mrb[0].mxu0
      %v1348 = vadd.f32 %v544, %v1347
      %v1349 = vpop.f32.mrb[0].mxu0
      %1350 = vmatprep.mubr.bf16.mxu0 %v807
      %1351 = vmatmul.mubr.bf16.gmra.mrb[0].mxu0 %v806
      %v1352 = vpop.f32.mrb[0].mxu0
      %v1353 = vadd.f32 %v549, %v1352
      %v1354 = vpop.f32.mrb[0].mxu0
      %v1355 = vpop.f32.mrb[0].mxu0
      %v1356 = vadd.f32 %v554, %v1355
      %v1357 = vpop.f32.mrb[0].mxu0
      %1358 = vmatprep.mubr.bf16.mxu0 %v815
      %1359 = vmatmul.mubr.bf16.gmra.mrb[0].mxu0 %v814
      %v1360 = vpop.f32.mrb[0].mxu0
      %v1361 = vadd.f32 %v559, %v1360
      %v1362 = vpop.f32.mrb[0].mxu0
      %v1363 = vpop.f32.mrb[0].mxu0
      %v1364 = vadd.f32 %v564, %v1363
      %v1365 = vpop.f32.mrb[0].mxu0
      %1366 = vdwg.mxu0
      %1367 = vmatprep.subr.bf16.mxu0 0
      %1368 = vmatpush1.bf16.msra.mxu0 %v1158
      %1369 = vmatprep.subr.bf16.mxu0 0
      %1370 = vmatpush1.bf16.msra.mxu0 %v1159
      %1371 = vmatprep.subr.bf16.mxu0 0
      %1372 = vmatpush1.bf16.msra.mxu0 %v1160
      %1373 = vmatprep.subr.bf16.mxu0 0
      %1374 = vmatpush1.bf16.msra.mxu0 %v1161
      %1375 = vmatprep.subr.bf16.mxu0 0
      %1376 = vmatpush1.bf16.msra.mxu0 %v1162
      %1377 = vmatprep.subr.bf16.mxu0 0
      %1378 = vmatpush1.bf16.msra.mxu0 %v1163
      %1379 = vmatprep.subr.bf16.mxu0 0
      %1380 = vmatpush1.bf16.msra.mxu0 %v1164
      %1381 = vmatprep.subr.bf16.mxu0 0
      %1382 = vmatpush1.bf16.msra.mxu0 %v1165
      %1383 = vmatprep.subr.bf16.mxu0 0
      %1384 = vmatpush1.bf16.msra.mxu0 %v1166
      %1385 = vmatprep.subr.bf16.mxu0 0
      %1386 = vmatpush1.bf16.msra.mxu0 %v1167
      %1387 = vmatprep.subr.bf16.mxu0 0
      %1388 = vmatpush1.bf16.msra.mxu0 %v1168
      %1389 = vmatprep.subr.bf16.mxu0 0
      %1390 = vmatpush1.bf16.msra.mxu0 %v1169
      %1391 = vmatprep.subr.bf16.mxu0 0
      %1392 = vmatpush1.bf16.msra.mxu0 %v1170
      %1393 = vmatprep.subr.bf16.mxu0 0
      %1394 = vmatpush1.bf16.msra.mxu0 %v1171
      %1395 = vmatprep.subr.bf16.mxu0 0
      %1396 = vmatpush1.bf16.msra.mxu0 %v1172
      %1397 = vmatprep.subr.bf16.mxu0 0
      %1398 = vmatpush1.bf16.msra.mxu0 %v1173
      %1399 = vmatprep.mubr.bf16.mxu0 %v761
      %1400 = vmatmul.mubr.bf16.gmra.mrb[0].mxu0 %v760
      %v1401 = vpop.f32.mrb[0].mxu0
      %v1402 = vadd.f32 %v1305, %v1401
      %v1403 = vpop.f32.mrb[0].mxu0
      %v1404 = vpop.f32.mrb[0].mxu0
      %v1405 = vadd.f32 %v1308, %v1404
      %v1406 = vpop.f32.mrb[0].mxu0
      %1407 = vmatprep.mubr.bf16.mxu0 %v769
      %1408 = vmatmul.mubr.bf16.gmra.mrb[0].mxu0 %v768
      %v1409 = vpop.f32.mrb[0].mxu0
      %v1410 = vadd.f32 %v1313, %v1409
      %v1411 = vpop.f32.mrb[0].mxu0
      %v1412 = vpop.f32.mrb[0].mxu0
      %v1413 = vadd.f32 %v1316, %v1412
      %v1414 = vpop.f32.mrb[0].mxu0
      %1415 = vmatprep.mubr.bf16.mxu0 %v777
      %1416 = vmatmul.mubr.bf16.gmra.mrb[0].mxu0 %v776
      %v1417 = vpop.f32.mrb[0].mxu0
      %v1418 = vadd.f32 %v1321, %v1417
      %v1419 = vpop.f32.mrb[0].mxu0
      %v1420 = vpop.f32.mrb[0].mxu0
      %v1421 = vadd.f32 %v1324, %v1420
      %v1422 = vpop.f32.mrb[0].mxu0
      %1423 = vmatprep.mubr.bf16.mxu0 %v785
      %1424 = vmatmul.mubr.bf16.gmra.mrb[0].mxu0 %v784
      %v1425 = vpop.f32.mrb[0].mxu0
      %v1426 = vadd.f32 %v1329, %v1425
      %v1427 = vpop.f32.mrb[0].mxu0
      %v1428 = vpop.f32.mrb[0].mxu0
      %v1429 = vadd.f32 %v1332, %v1428
      %v1430 = vpop.f32.mrb[0].mxu0
      %1431 = vmatprep.mubr.bf16.mxu0 %v793
      %1432 = vmatmul.mubr.bf16.gmra.mrb[0].mxu0 %v792
      %v1433 = vpop.f32.mrb[0].mxu0
      %v1434 = vadd.f32 %v1337, %v1433
      %v1435 = vpop.f32.mrb[0].mxu0
      %v1436 = vpop.f32.mrb[0].mxu0
      %v1437 = vadd.f32 %v1340, %v1436
      %v1438 = vpop.f32.mrb[0].mxu0
      %1439 = vmatprep.mubr.bf16.mxu0 %v801
      %1440 = vmatmul.mubr.bf16.gmra.mrb[0].mxu0 %v800
      %v1441 = vpop.f32.mrb[0].mxu0
      %v1442 = vadd.f32 %v1345, %v1441
      %v1443 = vpop.f32.mrb[0].mxu0
      %v1444 = vpop.f32.mrb[0].mxu0
      %v1445 = vadd.f32 %v1348, %v1444
      %v1446 = vpop.f32.mrb[0].mxu0
      %1447 = vmatprep.mubr.bf16.mxu0 %v809
      %1448 = vmatmul.mubr.bf16.gmra.mrb[0].mxu0 %v808
      %v1449 = vpop.f32.mrb[0].mxu0
      %v1450 = vadd.f32 %v1353, %v1449
      %v1451 = vpop.f32.mrb[0].mxu0
      %v1452 = vpop.f32.mrb[0].mxu0
      %v1453 = vadd.f32 %v1356, %v1452
      %v1454 = vpop.f32.mrb[0].mxu0
      %1455 = vmatprep.mubr.bf16.mxu0 %v817
      %1456 = vmatmul.mubr.bf16.gmra.mrb[0].mxu0 %v816
      %v1457 = vpop.f32.mrb[0].mxu0
      %v1458 = vadd.f32 %v1361, %v1457
      %v1459 = vpop.f32.mrb[0].mxu0
      %v1460 = vpop.f32.mrb[0].mxu0
      %v1461 = vadd.f32 %v1364, %v1460
      %v1462 = vpop.f32.mrb[0].mxu0
      %1463 = vdwg.mxu0
      %1464 = vmatprep.subr.bf16.mxu0 0
      %1465 = vmatpush1.bf16.msra.mxu0 %v1174
      %1466 = vmatprep.subr.bf16.mxu0 0
      %1467 = vmatpush1.bf16.msra.mxu0 %v1175
      %1468 = vmatprep.subr.bf16.mxu0 0
      %1469 = vmatpush1.bf16.msra.mxu0 %v1176
      %1470 = vmatprep.subr.bf16.mxu0 0
      %1471 = vmatpush1.bf16.msra.mxu0 %v1177
      %1472 = vmatprep.subr.bf16.mxu0 0
      %1473 = vmatpush1.bf16.msra.mxu0 %v1178
      %1474 = vmatprep.subr.bf16.mxu0 0
      %1475 = vmatpush1.bf16.msra.mxu0 %v1179
      %1476 = vmatprep.subr.bf16.mxu0 0
      %1477 = vmatpush1.bf16.msra.mxu0 %v1180
      %1478 = vmatprep.subr.bf16.mxu0 0
      %1479 = vmatpush1.bf16.msra.mxu0 %v1181
      %1480 = vmatprep.subr.bf16.mxu0 0
      %1481 = vmatpush1.bf16.msra.mxu0 %v1182
      %1482 = vmatprep.subr.bf16.mxu0 0
      %1483 = vmatpush1.bf16.msra.mxu0 %v1183
      %1484 = vmatprep.subr.bf16.mxu0 0
      %1485 = vmatpush1.bf16.msra.mxu0 %v1184
      %1486 = vmatprep.subr.bf16.mxu0 0
      %1487 = vmatpush1.bf16.msra.mxu0 %v1185
      %1488 = vmatprep.subr.bf16.mxu0 0
      %1489 = vmatpush1.bf16.msra.mxu0 %v1186
      %1490 = vmatprep.subr.bf16.mxu0 0
      %1491 = vmatpush1.bf16.msra.mxu0 %v1187
      %1492 = vmatprep.subr.bf16.mxu0 0
      %1493 = vmatpush1.bf16.msra.mxu0 %v1188
      %1494 = vmatprep.subr.bf16.mxu0 0
      %1495 = vmatpush1.bf16.msra.mxu0 %v1189
      %1496 = vmatprep.mubr.bf16.mxu0 %v763
      %1497 = vmatmul.mubr.bf16.gmra.mrb[0].mxu0 %v762
      %v1498 = vpop.f32.mrb[0].mxu0
      %v1499 = vadd.f32 %v1402, %v1498
      %v1500 = vpop.f32.mrb[0].mxu0
      %v1501 = vpop.f32.mrb[0].mxu0
      %v1502 = vadd.f32 %v1405, %v1501
      %v1503 = vpop.f32.mrb[0].mxu0
      %1504 = vmatprep.mubr.bf16.mxu0 %v771
      %1505 = vmatmul.mubr.bf16.gmra.mrb[0].mxu0 %v770
      %v1506 = vpop.f32.mrb[0].mxu0
      %v1507 = vadd.f32 %v1410, %v1506
      %v1508 = vpop.f32.mrb[0].mxu0
      %v1509 = vpop.f32.mrb[0].mxu0
      %v1510 = vadd.f32 %v1413, %v1509
      %v1511 = vpop.f32.mrb[0].mxu0
      %1512 = vmatprep.mubr.bf16.mxu0 %v779
      %1513 = vmatmul.mubr.bf16.gmra.mrb[0].mxu0 %v778
      %v1514 = vpop.f32.mrb[0].mxu0
      %v1515 = vadd.f32 %v1418, %v1514
      %v1516 = vpop.f32.mrb[0].mxu0
      %v1517 = vpop.f32.mrb[0].mxu0
      %v1518 = vadd.f32 %v1421, %v1517
      %v1519 = vpop.f32.mrb[0].mxu0
      %1520 = vmatprep.mubr.bf16.mxu0 %v787
      %1521 = vmatmul.mubr.bf16.gmra.mrb[0].mxu0 %v786
      %v1522 = vpop.f32.mrb[0].mxu0
      %v1523 = vadd.f32 %v1426, %v1522
      %v1524 = vpop.f32.mrb[0].mxu0
      %v1525 = vpop.f32.mrb[0].mxu0
      %v1526 = vadd.f32 %v1429, %v1525
      %v1527 = vpop.f32.mrb[0].mxu0
      %1528 = vmatprep.mubr.bf16.mxu0 %v795
      %1529 = vmatmul.mubr.bf16.gmra.mrb[0].mxu0 %v794
      %v1530 = vpop.f32.mrb[0].mxu0
      %v1531 = vadd.f32 %v1434, %v1530
      %v1532 = vpop.f32.mrb[0].mxu0
      %v1533 = vpop.f32.mrb[0].mxu0
      %v1534 = vadd.f32 %v1437, %v1533
      %v1535 = vpop.f32.mrb[0].mxu0
      %1536 = vmatprep.mubr.bf16.mxu0 %v803
      %1537 = vmatmul.mubr.bf16.gmra.mrb[0].mxu0 %v802
      %v1538 = vpop.f32.mrb[0].mxu0
      %v1539 = vadd.f32 %v1442, %v1538
      %v1540 = vpop.f32.mrb[0].mxu0
      %v1541 = vpop.f32.mrb[0].mxu0
      %v1542 = vadd.f32 %v1445, %v1541
      %v1543 = vpop.f32.mrb[0].mxu0
      %1544 = vmatprep.mubr.bf16.mxu0 %v811
      %1545 = vmatmul.mubr.bf16.gmra.mrb[0].mxu0 %v810
      %v1546 = vpop.f32.mrb[0].mxu0
      %v1547 = vadd.f32 %v1450, %v1546
      %v1548 = vpop.f32.mrb[0].mxu0
      %v1549 = vpop.f32.mrb[0].mxu0
      %v1550 = vadd.f32 %v1453, %v1549
      %v1551 = vpop.f32.mrb[0].mxu0
      %1552 = vmatprep.mubr.bf16.mxu0 %v819
      %1553 = vmatmul.mubr.bf16.gmra.mrb[0].mxu0 %v818
      %v1554 = vpop.f32.mrb[0].mxu0
      %v1555 = vadd.f32 %v1458, %v1554
      %v1556 = vpop.f32.mrb[0].mxu0
      %v1557 = vpop.f32.mrb[0].mxu0
      %v1558 = vadd.f32 %v1461, %v1557
      %v1559 = vpop.f32.mrb[0].mxu0
      %1560 = vdwg.mxu0
      %1561 = vmatprep.subr.bf16.mxu0 0
      %1562 = vmatpush1.bf16.msra.mxu0 %v1190
      %1563 = vmatprep.subr.bf16.mxu0 0
      %1564 = vmatpush1.bf16.msra.mxu0 %v1191
      %1565 = vmatprep.subr.bf16.mxu0 0
      %1566 = vmatpush1.bf16.msra.mxu0 %v1192
      %1567 = vmatprep.subr.bf16.mxu0 0
      %1568 = vmatpush1.bf16.msra.mxu0 %v1193
      %1569 = vmatprep.subr.bf16.mxu0 0
      %1570 = vmatpush1.bf16.msra.mxu0 %v1194
      %1571 = vmatprep.subr.bf16.mxu0 0
      %1572 = vmatpush1.bf16.msra.mxu0 %v1195
      %1573 = vmatprep.subr.bf16.mxu0 0
      %1574 = vmatpush1.bf16.msra.mxu0 %v1196
      %1575 = vmatprep.subr.bf16.mxu0 0
      %1576 = vmatpush1.bf16.msra.mxu0 %v1197
      %1577 = vmatprep.subr.bf16.mxu0 0
      %1578 = vmatpush1.bf16.msra.mxu0 %v1198
      %1579 = vmatprep.subr.bf16.mxu0 0
      %1580 = vmatpush1.bf16.msra.mxu0 %v1199
      %1581 = vmatprep.subr.bf16.mxu0 0
      %1582 = vmatpush1.bf16.msra.mxu0 %v1200
      %1583 = vmatprep.subr.bf16.mxu0 0
      %1584 = vmatpush1.bf16.msra.mxu0 %v1201
      %1585 = vmatprep.subr.bf16.mxu0 0
      %1586 = vmatpush1.bf16.msra.mxu0 %v1202
      %1587 = vmatprep.subr.bf16.mxu0 0
      %1588 = vmatpush1.bf16.msra.mxu0 %v1203
      %1589 = vmatprep.subr.bf16.mxu0 0
      %1590 = vmatpush1.bf16.msra.mxu0 %v1204
      %1591 = vmatprep.subr.bf16.mxu0 0
      %1592 = vmatpush1.bf16.msra.mxu0 %v1205
      %1593 = vmatprep.mubr.bf16.mxu0 %v765
      %1594 = vmatmul.mubr.bf16.gmra.mrb[0].mxu0 %v764
      %v1595 = vpop.f32.mrb[0].mxu0
      %v1596 = vadd.f32 %v1499, %v1595
      %v1597 = vpop.f32.mrb[0].mxu0
      %v1598 = vpop.f32.mrb[0].mxu0
      %v1599 = vadd.f32 %v1502, %v1598
      %v1600 = vpop.f32.mrb[0].mxu0
      %1601 = vmatprep.mubr.bf16.mxu0 %v773
      %1602 = vmatmul.mubr.bf16.gmra.mrb[0].mxu0 %v772
      %v1603 = vpop.f32.mrb[0].mxu0
      %v1604 = vadd.f32 %v1507, %v1603
      %v1605 = vpop.f32.mrb[0].mxu0
      %v1606 = vpop.f32.mrb[0].mxu0
      %v1607 = vadd.f32 %v1510, %v1606
      %v1608 = vpop.f32.mrb[0].mxu0
      %1609 = vmatprep.mubr.bf16.mxu0 %v781
      %1610 = vmatmul.mubr.bf16.gmra.mrb[0].mxu0 %v780
      %v1611 = vpop.f32.mrb[0].mxu0
      %v1612 = vadd.f32 %v1515, %v1611
      %v1613 = vpop.f32.mrb[0].mxu0
      %v1614 = vpop.f32.mrb[0].mxu0
      %v1615 = vadd.f32 %v1518, %v1614
      %v1616 = vpop.f32.mrb[0].mxu0
      %1617 = vmatprep.mubr.bf16.mxu0 %v789
      %1618 = vmatmul.mubr.bf16.gmra.mrb[0].mxu0 %v788
      %v1619 = vpop.f32.mrb[0].mxu0
      %v1620 = vadd.f32 %v1523, %v1619
      %v1621 = vpop.f32.mrb[0].mxu0
      %v1622 = vpop.f32.mrb[0].mxu0
      %v1623 = vadd.f32 %v1526, %v1622
      %v1624 = vpop.f32.mrb[0].mxu0
      %1625 = vmatprep.mubr.bf16.mxu0 %v797
      %1626 = vmatmul.mubr.bf16.gmra.mrb[0].mxu0 %v796
      %v1627 = vpop.f32.mrb[0].mxu0
      %v1628 = vadd.f32 %v1531, %v1627
      %v1629 = vpop.f32.mrb[0].mxu0
      %v1630 = vpop.f32.mrb[0].mxu0
      %v1631 = vadd.f32 %v1534, %v1630
      %v1632 = vpop.f32.mrb[0].mxu0
      %1633 = vmatprep.mubr.bf16.mxu0 %v805
      %1634 = vmatmul.mubr.bf16.gmra.mrb[0].mxu0 %v804
      %v1635 = vpop.f32.mrb[0].mxu0
      %v1636 = vadd.f32 %v1539, %v1635
      %v1637 = vpop.f32.mrb[0].mxu0
      %v1638 = vpop.f32.mrb[0].mxu0
      %v1639 = vadd.f32 %v1542, %v1638
      %v1640 = vpop.f32.mrb[0].mxu0
      %1641 = vmatprep.mubr.bf16.mxu0 %v813
      %1642 = vmatmul.mubr.bf16.gmra.mrb[0].mxu0 %v812
      %v1643 = vpop.f32.mrb[0].mxu0
      %v1644 = vadd.f32 %v1547, %v1643
      %v1645 = vpop.f32.mrb[0].mxu0
      %v1646 = vpop.f32.mrb[0].mxu0
      %v1647 = vadd.f32 %v1550, %v1646
      %v1648 = vpop.f32.mrb[0].mxu0
      %1649 = vmatprep.mubr.bf16.mxu0 %v821
      %1650 = vmatmul.mubr.bf16.gmra.mrb[0].mxu0 %v820
      %v1651 = vpop.f32.mrb[0].mxu0
      %v1652 = vadd.f32 %v1555, %v1651
      %v1653 = vpop.f32.mrb[0].mxu0
      %v1654 = vpop.f32.mrb[0].mxu0
      %v1655 = vadd.f32 %v1558, %v1654
      %v1656 = vpop.f32.mrb[0].mxu0
      %1657 = vdwg.mxu0
      %vm1658 = vcmask 130048
      %v1659 = vsel %vm1658, %v1596, 0.0
      %v1660 = vsel %vm1658, %v1599, 0.0
      %v1661 = vadd.f32 %v1659, %v1660
      %v1662 = vsel %vm1658, %v1604, 0.0
      %v1663 = vadd.f32 %v1661, %v1662
      %v1664 = vsel %vm1658, %v1607, 0.0
      %v1665 = vadd.f32 %v1663, %v1664
      %v1666 = vsel %vm1658, %v1612, 0.0
      %v1667 = vadd.f32 %v1665, %v1666
      %v1668 = vsel %vm1658, %v1615, 0.0
      %v1669 = vadd.f32 %v1667, %v1668
      %v1670 = vsel %vm1658, %v1620, 0.0
      %v1671 = vadd.f32 %v1669, %v1670
      %v1672 = vsel %vm1658, %v1623, 0.0
      %v1673 = vadd.f32 %v1671, %v1672
      %v1674 = vsel %vm1658, %v1628, 0.0
      %v1675 = vadd.f32 %v1673, %v1674
      %v1676 = vsel %vm1658, %v1631, 0.0
      %v1677 = vadd.f32 %v1675, %v1676
      %v1678 = vsel %vm1658, %v1636, 0.0
      %v1679 = vadd.f32 %v1677, %v1678
      %v1680 = vsel %vm1658, %v1639, 0.0
      %v1681 = vadd.f32 %v1679, %v1680
      %v1682 = vsel %vm1658, %v1644, 0.0
      %v1683 = vadd.f32 %v1681, %v1682
      %v1684 = vsel %vm1658, %v1647, 0.0
      %v1685 = vadd.f32 %v1683, %v1684
      %v1686 = vsel %vm1658, %v1652, 0.0
      %v1687 = vadd.f32 %v1685, %v1686
      %v1688 = vsel %vm1658, %v1655, 0.0
      %v1689 = vadd.f32 %v1687, %v1688
      %1690 = vadd.xlane.f32.xlu0 %v1689
      %v1691 = vpop.xlane.xlu0 %1690
      %v1692 = vrot.slane %v1691, 4
      %v1693 = vadd.f32 %v1691, %v1692
      %v1694 = vrot.slane %v1693, 2
      %v1695 = vadd.f32 %v1693, %v1694
      %v1696 = vrot.slane %v1695, 1
      %v1697 = vadd.f32 %v1695, %v1696
      %s1698 = vtos %v1697
      %s1699 = smul.f32 %s1698, 0.00048828125
      %v1700 = vmul.f32 %v1596, %v1596
      %v1701 = vmul.f32 %v1599, %v1599
      %v1702 = vmul.f32 %v1604, %v1604
      %v1703 = vmul.f32 %v1607, %v1607
      %v1704 = vmul.f32 %v1612, %v1612
      %v1705 = vmul.f32 %v1615, %v1615
      %v1706 = vmul.f32 %v1620, %v1620
      %v1707 = vmul.f32 %v1623, %v1623
      %v1708 = vmul.f32 %v1628, %v1628
      %v1709 = vmul.f32 %v1631, %v1631
      %v1710 = vmul.f32 %v1636, %v1636
      %v1711 = vmul.f32 %v1639, %v1639
      %v1712 = vmul.f32 %v1644, %v1644
      %v1713 = vmul.f32 %v1647, %v1647
      %v1714 = vmul.f32 %v1652, %v1652
      %v1715 = vmul.f32 %v1655, %v1655
      %v1716 = vsel %vm1658, %v1700, 0.0
      %v1717 = vsel %vm1658, %v1701, 0.0
      %v1718 = vadd.f32 %v1716, %v1717
      %v1719 = vsel %vm1658, %v1702, 0.0
      %v1720 = vadd.f32 %v1718, %v1719
      %v1721 = vsel %vm1658, %v1703, 0.0
      %v1722 = vadd.f32 %v1720, %v1721
      %v1723 = vsel %vm1658, %v1704, 0.0
      %v1724 = vadd.f32 %v1722, %v1723
      %v1725 = vsel %vm1658, %v1705, 0.0
      %v1726 = vadd.f32 %v1724, %v1725
      %v1727 = vsel %vm1658, %v1706, 0.0
      %v1728 = vadd.f32 %v1726, %v1727
      %v1729 = vsel %vm1658, %v1707, 0.0
      %v1730 = vadd.f32 %v1728, %v1729
      %v1731 = vsel %vm1658, %v1708, 0.0
      %v1732 = vadd.f32 %v1730, %v1731
      %v1733 = vsel %vm1658, %v1709, 0.0
      %v1734 = vadd.f32 %v1732, %v1733
      %v1735 = vsel %vm1658, %v1710, 0.0
      %v1736 = vadd.f32 %v1734, %v1735
      %v1737 = vsel %vm1658, %v1711, 0.0
      %v1738 = vadd.f32 %v1736, %v1737
      %v1739 = vsel %vm1658, %v1712, 0.0
      %v1740 = vadd.f32 %v1738, %v1739
      %v1741 = vsel %vm1658, %v1713, 0.0
      %v1742 = vadd.f32 %v1740, %v1741
      %v1743 = vsel %vm1658, %v1714, 0.0
      %v1744 = vadd.f32 %v1742, %v1743
      %v1745 = vsel %vm1658, %v1715, 0.0
      %v1746 = vadd.f32 %v1744, %v1745
      %1747 = vadd.xlane.f32.xlu0 %v1746
      %v1748 = vpop.xlane.xlu0 %1747
      %v1749 = vrot.slane %v1748, 4
      %v1750 = vadd.f32 %v1748, %v1749
      %v1751 = vrot.slane %v1750, 2
      %v1752 = vadd.f32 %v1750, %v1751
      %v1753 = vrot.slane %v1752, 1
      %v1754 = vadd.f32 %v1752, %v1753
      %s1755 = vtos %v1754
      %s1756 = smul.f32 %s1755, 0.00048828125
      %s1757 = smul.f32 %s1699, %s1699
      %s1758 = ssub.f32 %s1756, %s1757
      %v1759 = vstv %s1699
      %v1760 = vsub.f32 %v1596, %v1759
      %v1761 = vsub.f32 %v1599, %v1759
      %v1762 = vsub.f32 %v1604, %v1759
      %v1763 = vsub.f32 %v1607, %v1759
      %v1764 = vsub.f32 %v1612, %v1759
      %v1765 = vsub.f32 %v1615, %v1759
      %v1766 = vsub.f32 %v1620, %v1759
      %v1767 = vsub.f32 %v1623, %v1759
      %v1768 = vsub.f32 %v1628, %v1759
      %v1769 = vsub.f32 %v1631, %v1759
      %v1770 = vsub.f32 %v1636, %v1759
      %v1771 = vsub.f32 %v1639, %v1759
      %v1772 = vsub.f32 %v1644, %v1759
      %v1773 = vsub.f32 %v1647, %v1759
      %v1774 = vsub.f32 %v1652, %v1759
      %v1775 = vsub.f32 %v1655, %v1759
      %s1776 = sadd.f32 %s1758, 1e-05
      %v1777 = vstv %s1776
      %v1778 = vrsqrt.pop %v1777
      %s1779 = vtos %v1778
      %v1780 = vstv %s1779
      %v1781 = vmul.f32 %v1760, %v1780
      %v1782 = vmul.f32 %v1761, %v1780
      %v1783 = vmul.f32 %v1762, %v1780
      %v1784 = vmul.f32 %v1763, %v1780
      %v1785 = vmul.f32 %v1764, %v1780
      %v1786 = vmul.f32 %v1765, %v1780
      %v1787 = vmul.f32 %v1766, %v1780
      %v1788 = vmul.f32 %v1767, %v1780
      %v1789 = vmul.f32 %v1768, %v1780
      %v1790 = vmul.f32 %v1769, %v1780
      %v1791 = vmul.f32 %v1770, %v1780
      %v1792 = vmul.f32 %v1771, %v1780
      %v1793 = vmul.f32 %v1772, %v1780
      %v1794 = vmul.f32 %v1773, %v1780
      %v1795 = vmul.f32 %v1774, %v1780
      %v1796 = vmul.f32 %v1775, %v1780
      %v1797 = vld [vmem:[%s3] sm:$0xff]
      %v1798 = vld [vmem:[%s3 + $0x8] sm:$0xff]
      %v1799 = vld [vmem:[%s3 + $0x10] sm:$0xff]
      %v1800 = vld [vmem:[%s3 + $0x18] sm:$0xff]
      %v1801 = vld [vmem:[%s3 + $0x20] sm:$0xff]
      %v1802 = vld [vmem:[%s3 + $0x28] sm:$0xff]
      %v1803 = vld [vmem:[%s3 + $0x30] sm:$0xff]
      %v1804 = vld [vmem:[%s3 + $0x38] sm:$0xff]
      %v1805 = vld [vmem:[%s3 + $0x40] sm:$0xff]
      %v1806 = vld [vmem:[%s3 + $0x48] sm:$0xff]
      %v1807 = vld [vmem:[%s3 + $0x50] sm:$0xff]
      %v1808 = vld [vmem:[%s3 + $0x58] sm:$0xff]
      %v1809 = vld [vmem:[%s3 + $0x60] sm:$0xff]
      %v1810 = vld [vmem:[%s3 + $0x68] sm:$0xff]
      %v1811 = vld [vmem:[%s3 + $0x70] sm:$0xff]
      %v1812 = vld [vmem:[%s3 + $0x78] sm:$0xff]
      %v1813 = vmul.f32 %v1781, %v1797
      %v1814 = vmul.f32 %v1782, %v1798
      %v1815 = vmul.f32 %v1783, %v1799
      %v1816 = vmul.f32 %v1784, %v1800
      %v1817 = vmul.f32 %v1785, %v1801
      %v1818 = vmul.f32 %v1786, %v1802
      %v1819 = vmul.f32 %v1787, %v1803
      %v1820 = vmul.f32 %v1788, %v1804
      %v1821 = vmul.f32 %v1789, %v1805
      %v1822 = vmul.f32 %v1790, %v1806
      %v1823 = vmul.f32 %v1791, %v1807
      %v1824 = vmul.f32 %v1792, %v1808
      %v1825 = vmul.f32 %v1793, %v1809
      %v1826 = vmul.f32 %v1794, %v1810
      %v1827 = vmul.f32 %v1795, %v1811
      %v1828 = vmul.f32 %v1796, %v1812
      %v1829 = vld [vmem:[%s4] sm:$0xff]
      %v1830 = vld [vmem:[%s4 + $0x8] sm:$0xff]
      %v1831 = vld [vmem:[%s4 + $0x10] sm:$0xff]
      %v1832 = vld [vmem:[%s4 + $0x18] sm:$0xff]
      %v1833 = vld [vmem:[%s4 + $0x20] sm:$0xff]
      %v1834 = vld [vmem:[%s4 + $0x28] sm:$0xff]
      %v1835 = vld [vmem:[%s4 + $0x30] sm:$0xff]
      %v1836 = vld [vmem:[%s4 + $0x38] sm:$0xff]
      %v1837 = vld [vmem:[%s4 + $0x40] sm:$0xff]
      %v1838 = vld [vmem:[%s4 + $0x48] sm:$0xff]
      %v1839 = vld [vmem:[%s4 + $0x50] sm:$0xff]
      %v1840 = vld [vmem:[%s4 + $0x58] sm:$0xff]
      %v1841 = vld [vmem:[%s4 + $0x60] sm:$0xff]
      %v1842 = vld [vmem:[%s4 + $0x68] sm:$0xff]
      %v1843 = vld [vmem:[%s4 + $0x70] sm:$0xff]
      %v1844 = vld [vmem:[%s4 + $0x78] sm:$0xff]
      %v1845 = vadd.f32 %v1813, %v1829
      %v1846 = vadd.f32 %v1814, %v1830
      %v1847 = vadd.f32 %v1815, %v1831
      %v1848 = vadd.f32 %v1816, %v1832
      %v1849 = vadd.f32 %v1817, %v1833
      %v1850 = vadd.f32 %v1818, %v1834
      %v1851 = vadd.f32 %v1819, %v1835
      %v1852 = vadd.f32 %v1820, %v1836
      %v1853 = vadd.f32 %v1821, %v1837
      %v1854 = vadd.f32 %v1822, %v1838
      %v1855 = vadd.f32 %v1823, %v1839
      %v1856 = vadd.f32 %v1824, %v1840
      %v1857 = vadd.f32 %v1825, %v1841
      %v1858 = vadd.f32 %v1826, %v1842
      %v1859 = vadd.f32 %v1827, %v1843
      %v1860 = vadd.f32 %v1828, %v1844
      %vm1861 = vcmp.ge.f32.partialorder %v1845, 0.0
      %vm1862 = vcmp.ge.f32.partialorder %v1846, 0.0
      %vm1863 = vcmp.ge.f32.partialorder %v1847, 0.0
      %vm1864 = vcmp.ge.f32.partialorder %v1848, 0.0
      %vm1865 = vcmp.ge.f32.partialorder %v1849, 0.0
      %vm1866 = vcmp.ge.f32.partialorder %v1850, 0.0
      %vm1867 = vcmp.ge.f32.partialorder %v1851, 0.0
      %vm1868 = vcmp.ge.f32.partialorder %v1852, 0.0
      %vm1869 = vcmp.ge.f32.partialorder %v1853, 0.0
      %vm1870 = vcmp.ge.f32.partialorder %v1854, 0.0
      %vm1871 = vcmp.ge.f32.partialorder %v1855, 0.0
      %vm1872 = vcmp.ge.f32.partialorder %v1856, 0.0
      %vm1873 = vcmp.ge.f32.partialorder %v1857, 0.0
      %vm1874 = vcmp.ge.f32.partialorder %v1858, 0.0
      %vm1875 = vcmp.ge.f32.partialorder %v1859, 0.0
      %vm1876 = vcmp.ge.f32.partialorder %v1860, 0.0
      %v1877 = vmul.f32 %v1845, 0.2
      %v1878 = vmul.f32 %v1846, 0.2
      %v1879 = vmul.f32 %v1847, 0.2
      %v1880 = vmul.f32 %v1848, 0.2
      %v1881 = vmul.f32 %v1849, 0.2
      %v1882 = vmul.f32 %v1850, 0.2
      %v1883 = vmul.f32 %v1851, 0.2
      %v1884 = vmul.f32 %v1852, 0.2
      %v1885 = vmul.f32 %v1853, 0.2
      %v1886 = vmul.f32 %v1854, 0.2
      %v1887 = vmul.f32 %v1855, 0.2
      %v1888 = vmul.f32 %v1856, 0.2
      %v1889 = vmul.f32 %v1857, 0.2
      %v1890 = vmul.f32 %v1858, 0.2
      %v1891 = vmul.f32 %v1859, 0.2
      %v1892 = vmul.f32 %v1860, 0.2
      %v1893 = vsel %vm1861, %v1845, %v1877
      %v1894 = vsel %vm1862, %v1846, %v1878
      %v1895 = vsel %vm1863, %v1847, %v1879
      %v1896 = vsel %vm1864, %v1848, %v1880
      %v1897 = vsel %vm1865, %v1849, %v1881
      %v1898 = vsel %vm1866, %v1850, %v1882
      %v1899 = vsel %vm1867, %v1851, %v1883
      %v1900 = vsel %vm1868, %v1852, %v1884
      %v1901 = vsel %vm1869, %v1853, %v1885
      %v1902 = vsel %vm1870, %v1854, %v1886
      %v1903 = vsel %vm1871, %v1855, %v1887
      %v1904 = vsel %vm1872, %v1856, %v1888
      %v1905 = vsel %vm1873, %v1857, %v1889
      %v1906 = vsel %vm1874, %v1858, %v1890
      %v1907 = vsel %vm1875, %v1859, %v1891
      %v1908 = vsel %vm1876, %v1860, %v1892
      %v1909 = vld [vmem:[%s5] sm:$0xff]
      %v1910 = vld [vmem:[%s5 + $0x8] sm:$0xff]
      %v1911 = vld [vmem:[%s5 + $0x10] sm:$0xff]
      %v1912 = vld [vmem:[%s5 + $0x18] sm:$0xff]
      %v1913 = vld [vmem:[%s5 + $0x20] sm:$0xff]
      %v1914 = vld [vmem:[%s5 + $0x28] sm:$0xff]
      %v1915 = vld [vmem:[%s5 + $0x30] sm:$0xff]
      %v1916 = vld [vmem:[%s5 + $0x38] sm:$0xff]
      %v1917 = vld [vmem:[%s5 + $0x40] sm:$0xff]
      %v1918 = vld [vmem:[%s5 + $0x48] sm:$0xff]
      %v1919 = vld [vmem:[%s5 + $0x50] sm:$0xff]
      %v1920 = vld [vmem:[%s5 + $0x58] sm:$0xff]
      %v1921 = vld [vmem:[%s5 + $0x60] sm:$0xff]
      %v1922 = vld [vmem:[%s5 + $0x68] sm:$0xff]
      %v1923 = vld [vmem:[%s5 + $0x70] sm:$0xff]
      %v1924 = vld [vmem:[%s5 + $0x78] sm:$0xff]
      %v1925 = vmul.f32 %v1893, %v1909
      %v1926 = vmul.f32 %v1894, %v1910
      %v1927 = vmul.f32 %v1895, %v1911
      %v1928 = vmul.f32 %v1896, %v1912
      %v1929 = vmul.f32 %v1897, %v1913
      %v1930 = vmul.f32 %v1898, %v1914
      %v1931 = vmul.f32 %v1899, %v1915
      %v1932 = vmul.f32 %v1900, %v1916
      %v1933 = vmul.f32 %v1901, %v1917
      %v1934 = vmul.f32 %v1902, %v1918
      %v1935 = vmul.f32 %v1903, %v1919
      %v1936 = vmul.f32 %v1904, %v1920
      %v1937 = vmul.f32 %v1905, %v1921
      %v1938 = vmul.f32 %v1906, %v1922
      %v1939 = vmul.f32 %v1907, %v1923
      %v1940 = vmul.f32 %v1908, %v1924
      %v1941 = vsel %vm1658, %v1925, 0.0
      %v1942 = vsel %vm1658, %v1926, 0.0
      %v1943 = vadd.f32 %v1941, %v1942
      %v1944 = vsel %vm1658, %v1927, 0.0
      %v1945 = vadd.f32 %v1943, %v1944
      %v1946 = vsel %vm1658, %v1928, 0.0
      %v1947 = vadd.f32 %v1945, %v1946
      %v1948 = vsel %vm1658, %v1929, 0.0
      %v1949 = vadd.f32 %v1947, %v1948
      %v1950 = vsel %vm1658, %v1930, 0.0
      %v1951 = vadd.f32 %v1949, %v1950
      %v1952 = vsel %vm1658, %v1931, 0.0
      %v1953 = vadd.f32 %v1951, %v1952
      %v1954 = vsel %vm1658, %v1932, 0.0
      %v1955 = vadd.f32 %v1953, %v1954
      %v1956 = vsel %vm1658, %v1933, 0.0
      %v1957 = vadd.f32 %v1955, %v1956
      %v1958 = vsel %vm1658, %v1934, 0.0
      %v1959 = vadd.f32 %v1957, %v1958
      %v1960 = vsel %vm1658, %v1935, 0.0
      %v1961 = vadd.f32 %v1959, %v1960
      %v1962 = vsel %vm1658, %v1936, 0.0
      %v1963 = vadd.f32 %v1961, %v1962
      %v1964 = vsel %vm1658, %v1937, 0.0
      %v1965 = vadd.f32 %v1963, %v1964
      %v1966 = vsel %vm1658, %v1938, 0.0
      %v1967 = vadd.f32 %v1965, %v1966
      %v1968 = vsel %vm1658, %v1939, 0.0
      %v1969 = vadd.f32 %v1967, %v1968
      %v1970 = vsel %vm1658, %v1940, 0.0
      %v1971 = vadd.f32 %v1969, %v1970
      %1972 = vadd.xlane.f32.xlu0 %v1971
      %v1973 = vpop.xlane.xlu0 %1972
      %v1974 = vrot.slane %v1973, 4
      %v1975 = vadd.f32 %v1973, %v1974
      %v1976 = vrot.slane %v1975, 2
      %v1977 = vadd.f32 %v1975, %v1976
      %v1978 = vrot.slane %v1977, 1
      %v1979 = vadd.f32 %v1977, %v1978
      %s1980 = vtos %v1979
      %v1981 = vld [vmem:[#allocation2] sm:$0x1]
      %v1982 = vstv %s1980
      %v1983 = vadd.f32 %v1982, %v1981
      %v1984 = vxor.u32 %v1983, 2147483648
      %v1985 = vmul.f32 %v1984, 1.442695
      %v1986 = vpow.pop %v1985
      %v1987 = vadd.f32 %v1986, 1.0
      %v1988 = vrcp.pop %v1987
      %v1989 = vmul.f32 1.0, %v1988
      %vm1990 = vcmask 0
      %1991 = vst.msk [vmem:[%s276] sm:$0x1] %vm1990, %v1989
      %p1992 = scmp.lt.s32.totalorder %s20, 1
      %s1993 = scalar_select %p1992, %s20, 1
      %s1994 = scalar_lea.vmem %s7, %s1993
      // Predicated region
      $region49: #{discriminator_forward.7} parent=47 // pred_check
        %p1995 = pneg %p190
      $region50: #{discriminator_forward.7} parent=47 // pred_check_branch
        %1997 = sbr.rel (%p1995) target = $region52
      $region51: #{discriminator_forward.7} parent=47 // pred_region
        _
      $region52: #{discriminator_forward.7} parent=47 // pred_fallthru
        _
    $region48: #{discriminator_forward.7} parent=5 // pred_fallthru
      _
    %p1998 = scmp.le.s32.totalorder 2, %s15
    // Predicated region
    $region53: #{discriminator_forward.7} parent=5 // pred_check
      %p1999 = pneg %p1998
    $region54: #{discriminator_forward.7} parent=5 // pred_check_branch
      %2001 = sbr.rel (%p1999) target = $region56
    $region55: #{discriminator_forward.7} parent=5 // pred_region
      %s2002 = ssub.s32 %s15, 2
      // Predicated region
      $region57: #{discriminator_forward.7} parent=55 // pred_check
        %p2003 = pneg %p196
      $region58: #{discriminator_forward.7} parent=55 // pred_check_branch
        %2005 = sbr.rel (%p2003) target = $region60
      $region59: #{discriminator_forward.7} parent=55 // pred_region
        %p2006 = scmp.lt.s32.totalorder %s21, 1
        %s2007 = scalar_select %p2006, %s21, 1
        %s2008 = scalar_lea.vmem %s7, %s2007
      $region60: #{discriminator_forward.7} parent=55 // pred_fallthru
        _
    $region56: #{discriminator_forward.7} parent=5 // pred_fallthru
      _
  $region6: #{discriminator_forward.7} parent=0 // loop_footer
    %s19 = sadd.s32 1, %s15
  $region7: #{discriminator_forward.7} parent=0 // loop_footer_branch
    %14 = sbr.rel target = $region3
  $region8: #{discriminator_forward.7} parent=0 // loop_exit
    _

</llo_original>
